<compile_context>
chip_gen: v6e
topology: v6e:2x2x1
jax: 0.10.0
libtpu: 0.0.40
codegen_flags: <defaults>
</compile_context>

<pallas_src>
import functools

import jax
import jax.numpy as jnp
from jax.experimental import pallas as pl
from jax.experimental.pallas import tpu as pltpu

NOISE_SIZE = 100
HIDDEN1 = 256
HIDDEN2 = 512
IMG_SIZE = 28 * 28          # 784

# Lane-aligned (multiple-of-128) padded feature sizes.
NOISE_PAD = 128             # 100 -> 128
IMG_PAD = 896               # 784 -> 7 * 128


def _generator_kernel(x_ref, w1_ref, b1_ref, w2_ref, b2_ref, w3_ref, b3_ref,
                      o_ref):
    # x_ref: (TB, NOISE_PAD) bf16,  o_ref: (TB, IMG_PAD) f32.
    x = x_ref[...]  # bf16 MXU operand (no redundant f32 cast)

    # Layer 1: Linear(128 -> 256) + ReLU   (f32 accumulation on the MXU)
    h1 = jnp.dot(x, w1_ref[...], preferred_element_type=jnp.float32)
    h1 = jnp.maximum(h1 + b1_ref[...], 0.0)

    # Layer 2: Linear(256 -> 512) + ReLU
    h2 = jnp.dot(h1.astype(jnp.bfloat16), w2_ref[...],
                 preferred_element_type=jnp.float32)
    h2 = jnp.maximum(h2 + b2_ref[...], 0.0)

    # Layer 3: Linear(512 -> 896) + Tanh  (padded cols are zero weights/bias)
    h3 = jnp.dot(h2.astype(jnp.bfloat16), w3_ref[...],
                 preferred_element_type=jnp.float32)
    h3 = h3 + b3_ref[...]
    o_ref[...] = jnp.tanh(h3).astype(o_ref.dtype)


@functools.partial(jax.jit, static_argnames=("tile_b",))
def generator_forward(x, w1, b1, w2, b2, w3, b3, *, tile_b=256):
    """x: (B, NOISE_SIZE) f32; weights/biases as in init_params -> (B, IMG_SIZE) f32."""
    B = x.shape[0]
    B_pad = pl.cdiv(B, tile_b) * tile_b

    # --- wrapper-side layout plumbing (static zero pads + bf16 casts) -------
    x_p = jnp.pad(x, ((0, B_pad - B), (0, NOISE_PAD - NOISE_SIZE)))
    x_p = x_p.astype(jnp.bfloat16)
    w1_p = jnp.pad(w1, ((0, NOISE_PAD - NOISE_SIZE), (0, 0))).astype(jnp.bfloat16)
    w2_p = w2.astype(jnp.bfloat16)
    w3_p = jnp.pad(w3, ((0, 0), (0, IMG_PAD - IMG_SIZE))).astype(jnp.bfloat16)
    b3_p = jnp.pad(b3, ((0, 0), (0, IMG_PAD - IMG_SIZE)))

    grid = (B_pad // tile_b,)

    # Small, constant-index weight/bias blocks: full array every grid step.
    full = lambda shape: pl.BlockSpec(shape, lambda i: (0,) * len(shape))

    weight_bytes = 2 * (NOISE_PAD * HIDDEN1 + HIDDEN1 * HIDDEN2 + HIDDEN2 * IMG_PAD)
    bias_bytes = 4 * (HIDDEN1 + HIDDEN2 + IMG_PAD)
    cost = pl.CostEstimate(
        flops=2 * B_pad * (NOISE_PAD * HIDDEN1 + HIDDEN1 * HIDDEN2
                           + HIDDEN2 * IMG_PAD),
        transcendentals=B_pad * IMG_PAD,
        bytes_accessed=(weight_bytes + bias_bytes
                        + 2 * B_pad * NOISE_PAD      # bf16 input tiles
                        + 4 * B_pad * IMG_PAD),      # f32 output tiles
    )

    out = pl.pallas_call(
        _generator_kernel,
        out_shape=jax.ShapeDtypeStruct((B_pad, IMG_PAD), jnp.float32),
        grid_spec=pltpu.PrefetchScalarGridSpec(
            num_scalar_prefetch=0,
            grid=grid,
            in_specs=[
                pl.BlockSpec((tile_b, NOISE_PAD), lambda i: (i, 0)),  # x tile
                full((NOISE_PAD, HIDDEN1)),   # w1
                full((1, HIDDEN1)),           # b1 (f32)
                full((HIDDEN1, HIDDEN2)),     # w2
                full((1, HIDDEN2)),           # b2 (f32)
                full((HIDDEN2, IMG_PAD)),     # w3 (col-padded to 896)
                full((1, IMG_PAD)),           # b3 (col-padded to 896)
            ],
            out_specs=pl.BlockSpec((tile_b, IMG_PAD), lambda i: (i, 0)),
        ),
        compiler_params=pltpu.CompilerParams(
            dimension_semantics=("parallel",),
            vmem_limit_bytes=48 * 1024 * 1024),
        cost_estimate=cost,
    )(x_p, w1_p, b1, w2_p, b2, w3_p, b3_p)

    # Drop batch padding and the lane-dense output padding.
    return out[:B, :IMG_SIZE]


def init_params(key):
    """Deterministic init matching nn.Linear's default U(-1/sqrt(fan_in), +)."""
    def linear(key, fan_in, fan_out):
        kw, kb = jax.random.split(key)
        bound = 1.0 / jnp.sqrt(fan_in)
        w = jax.random.uniform(kw, (fan_in, fan_out), jnp.float32,
                               minval=-bound, maxval=bound)
        b = jax.random.uniform(kb, (1, fan_out), jnp.float32,
                               minval=-bound, maxval=bound)
        return w, b

    k1, k2, k3 = jax.random.split(key, 3)
    w1, b1 = linear(k1, NOISE_SIZE, HIDDEN1)
    w2, b2 = linear(k2, HIDDEN1, HIDDEN2)
    w3, b3 = linear(k3, HIDDEN2, IMG_SIZE)
    return w1, b1, w2, b2, w3, b3


if __name__ == "__main__":
    key = jax.random.PRNGKey(0)
    k_params, k_x = jax.random.split(key)

    params = init_params(k_params)

    batch = 8  # small demo batch; wrapper pads it up to tile_b internally
    x = jax.random.normal(k_x, (batch, NOISE_SIZE), jnp.float32)

    out = generator_forward(x, *params)          # default tile_b=256
    out = jax.block_until_ready(out)

    # Reference in plain f32 JAX (kernel uses bf16 matmul operands, so use a
    # bf16-appropriate tolerance).
    w1, b1, w2, b2, w3, b3 = params
    ref = jnp.maximum(x @ w1 + b1, 0.0)
    ref = jnp.maximum(ref @ w2 + b2, 0.0)
    ref = jnp.tanh(ref @ w3 + b3)

    assert out.shape == (batch, IMG_SIZE)
    assert jnp.allclose(out, ref, atol=2e-2, rtol=2e-2), (
        float(jnp.max(jnp.abs(out - ref))))

    print("KERNEL_OK")
</pallas_src>

<mosaic_0001>
module attributes {stable_mosaic.version = 11 : i64} {
  func.func @_generator_kernel(%arg0: i32, %arg1: memref<256x128xbf16, #tpu.memory_space<vmem>>, %arg2: memref<128x256xbf16, #tpu.memory_space<vmem>>, %arg3: memref<1x256xf32, #tpu.memory_space<vmem>>, %arg4: memref<256x512xbf16, #tpu.memory_space<vmem>>, %arg5: memref<1x512xf32, #tpu.memory_space<vmem>>, %arg6: memref<512x896xbf16, #tpu.memory_space<vmem>>, %arg7: memref<1x896xf32, #tpu.memory_space<vmem>>, %arg8: memref<256x896xf32, #tpu.memory_space<vmem>>) attributes {dimension_semantics = [#tpu.dimension_semantics<parallel>], iteration_bounds = array<i64: 1>, scalar_prefetch = 0 : i64, scratch_operands = 0 : i64, tpu.core_type = #tpu.core_type<tc>, window_params = [{transform_indices = @transform_0, window_bounds = array<i64: 256, 128>}, {pipeline_mode = #tpu.pipeline_mode<synchronous>, transform_indices = @transform_1, window_bounds = array<i64: 128, 256>}, {pipeline_mode = #tpu.pipeline_mode<synchronous>, transform_indices = @transform_2, window_bounds = array<i64: 1, 256>}, {pipeline_mode = #tpu.pipeline_mode<synchronous>, transform_indices = @transform_3, window_bounds = array<i64: 256, 512>}, {pipeline_mode = #tpu.pipeline_mode<synchronous>, transform_indices = @transform_4, window_bounds = array<i64: 1, 512>}, {pipeline_mode = #tpu.pipeline_mode<synchronous>, transform_indices = @transform_5, window_bounds = array<i64: 512, 896>}, {pipeline_mode = #tpu.pipeline_mode<synchronous>, transform_indices = @transform_6, window_bounds = array<i64: 1, 896>}, {transform_indices = @transform_7, window_bounds = array<i64: 256, 896>}]} {
    %c0 = arith.constant 0 : index
    %c0_0 = arith.constant 0 : index
    %0 = vector.load %arg1[%c0, %c0_0] : memref<256x128xbf16, #tpu.memory_space<vmem>>, vector<256x128xbf16>
    %c0_1 = arith.constant 0 : index
    %c0_2 = arith.constant 0 : index
    %1 = vector.load %arg2[%c0_1, %c0_2] : memref<128x256xbf16, #tpu.memory_space<vmem>>, vector<128x256xbf16>
    %cst = arith.constant dense<0.000000e+00> : vector<256x256xf32>
    %2 = tpu.matmul %0, %1, %cst {dimension_numbers = #tpu.dot_dimension_numbers<[1], [0], [0], [1], [0, 0, 1, 1], [], []>} : vector<256x128xbf16>, vector<128x256xbf16>, vector<256x256xf32> -> vector<256x256xf32>
    %c0_3 = arith.constant 0 : index
    %c0_4 = arith.constant 0 : index
    %3 = vector.load %arg3[%c0_3, %c0_4] : memref<1x256xf32, #tpu.memory_space<vmem>>, vector<1x256xf32>
    %4 = vector.broadcast %3 : vector<1x256xf32> to vector<256x256xf32>
    %5 = arith.addf %2, %4 : vector<256x256xf32>
    %cst_5 = arith.constant 0.000000e+00 : f32
    %6 = vector.broadcast %cst_5 : f32 to vector<256x256xf32>
    %7 = arith.maximumf %5, %6 : vector<256x256xf32>
    %8 = arith.truncf %7 : vector<256x256xf32> to vector<256x256xbf16>
    %c0_6 = arith.constant 0 : index
    %c0_7 = arith.constant 0 : index
    %9 = vector.load %arg4[%c0_6, %c0_7] : memref<256x512xbf16, #tpu.memory_space<vmem>>, vector<256x512xbf16>
    %cst_8 = arith.constant dense<0.000000e+00> : vector<256x512xf32>
    %10 = tpu.matmul %8, %9, %cst_8 {dimension_numbers = #tpu.dot_dimension_numbers<[1], [0], [0], [1], [0, 0, 1, 1], [], []>} : vector<256x256xbf16>, vector<256x512xbf16>, vector<256x512xf32> -> vector<256x512xf32>
    %c0_9 = arith.constant 0 : index
    %c0_10 = arith.constant 0 : index
    %11 = vector.load %arg5[%c0_9, %c0_10] : memref<1x512xf32, #tpu.memory_space<vmem>>, vector<1x512xf32>
    %12 = vector.broadcast %11 : vector<1x512xf32> to vector<256x512xf32>
    %13 = arith.addf %10, %12 : vector<256x512xf32>
    %cst_11 = arith.constant 0.000000e+00 : f32
    %14 = vector.broadcast %cst_11 : f32 to vector<256x512xf32>
    %15 = arith.maximumf %13, %14 : vector<256x512xf32>
    %16 = arith.truncf %15 : vector<256x512xf32> to vector<256x512xbf16>
    %c0_12 = arith.constant 0 : index
    %c0_13 = arith.constant 0 : index
    %17 = vector.load %arg6[%c0_12, %c0_13] : memref<512x896xbf16, #tpu.memory_space<vmem>>, vector<512x896xbf16>
    %cst_14 = arith.constant dense<0.000000e+00> : vector<256x896xf32>
    %18 = tpu.matmul %16, %17, %cst_14 {dimension_numbers = #tpu.dot_dimension_numbers<[1], [0], [0], [1], [0, 0, 1, 1], [], []>} : vector<256x512xbf16>, vector<512x896xbf16>, vector<256x896xf32> -> vector<256x896xf32>
    %c0_15 = arith.constant 0 : index
    %c0_16 = arith.constant 0 : index
    %19 = vector.load %arg7[%c0_15, %c0_16] : memref<1x896xf32, #tpu.memory_space<vmem>>, vector<1x896xf32>
    %20 = vector.broadcast %19 : vector<1x896xf32> to vector<256x896xf32>
    %21 = arith.addf %18, %20 : vector<256x896xf32>
    %22 = math.tanh %21 : vector<256x896xf32>
    %c0_17 = arith.constant 0 : index
    %c0_18 = arith.constant 0 : index
    %23 = vector.load %arg8[%c0_17, %c0_18] : memref<256x896xf32, #tpu.memory_space<vmem>>, vector<256x896xf32>
    tpu.vector_store %arg8[%c0_17, %c0_18], %22 {strides = array<i32>} : memref<256x896xf32, #tpu.memory_space<vmem>>, vector<256x896xf32>,
    return
  }
  func.func @transform_0(%arg0: i32) -> (i32, i32) {
    %c0_i32 = arith.constant 0 : i32
    %c0_i32_0 = arith.constant 0 : i32
    return %arg0, %c0_i32 : i32, i32
  }
  func.func @transform_1(%arg0: i32) -> (i32, i32) {
    %c0_i32 = arith.constant 0 : i32
    %c0_i32_0 = arith.constant 0 : i32
    %c0_i32_1 = arith.constant 0 : i32
    return %c0_i32, %c0_i32_0 : i32, i32
  }
  func.func @transform_2(%arg0: i32) -> (i32, i32) {
    %c0_i32 = arith.constant 0 : i32
    %c0_i32_0 = arith.constant 0 : i32
    %c0_i32_1 = arith.constant 0 : i32
    return %c0_i32, %c0_i32_0 : i32, i32
  }
  func.func @transform_3(%arg0: i32) -> (i32, i32) {
    %c0_i32 = arith.constant 0 : i32
    %c0_i32_0 = arith.constant 0 : i32
    %c0_i32_1 = arith.constant 0 : i32
    return %c0_i32, %c0_i32_0 : i32, i32
  }
  func.func @transform_4(%arg0: i32) -> (i32, i32) {
    %c0_i32 = arith.constant 0 : i32
    %c0_i32_0 = arith.constant 0 : i32
    %c0_i32_1 = arith.constant 0 : i32
    return %c0_i32, %c0_i32_0 : i32, i32
  }
  func.func @transform_5(%arg0: i32) -> (i32, i32) {
    %c0_i32 = arith.constant 0 : i32
    %c0_i32_0 = arith.constant 0 : i32
    %c0_i32_1 = arith.constant 0 : i32
    return %c0_i32, %c0_i32_0 : i32, i32
  }
  func.func @transform_6(%arg0: i32) -> (i32, i32) {
    %c0_i32 = arith.constant 0 : i32
    %c0_i32_0 = arith.constant 0 : i32
    %c0_i32_1 = arith.constant 0 : i32
    return %c0_i32, %c0_i32_0 : i32, i32
  }
  func.func @transform_7(%arg0: i32) -> (i32, i32) {
    %c0_i32 = arith.constant 0 : i32
    %c0_i32_0 = arith.constant 0 : i32
    return %arg0, %c0_i32 : i32, i32
  }
}

</mosaic_0001>

<llo_original>
// kernel: generator_forward.1
$region0: #{generator_forward.1}
  #allocation0 [shape = 'u32[]', space=smem, size = 0x4, offset = 0x4, fixed_abs, tag = 'smem constant byte address 0x4 - core index']
  #allocation1 [shape = 'u32[144,128]{1,0:T(1,128)}', space=vmem, size = 0x12000, scoped, tag = 'internal scratch']
  %s0 = inlined_call_operand.vmem [shape: bf16[256,128], index: 0, kind: input, shape index: {}]
  %s1 = inlined_call_operand.vmem [shape: bf16[128,256], index: 1, kind: input, shape index: {}]
  %s2 = inlined_call_operand.vmem [shape: f32[1,256], index: 2, kind: input, shape index: {}]
  %s3 = inlined_call_operand.vmem [shape: bf16[256,512], index: 3, kind: input, shape index: {}]
  %s4 = inlined_call_operand.vmem [shape: f32[1,512], index: 4, kind: input, shape index: {}]
  %s5 = inlined_call_operand.vmem [shape: bf16[512,896], index: 5, kind: input, shape index: {}]
  %s6 = inlined_call_operand.vmem [shape: f32[1,896], index: 6, kind: input, shape index: {}]
  %s7 = inlined_call_operand.vmem [shape: f32[256,896], index: 7, kind: output, shape index: {}]
  %s8 = sld [smem:[#allocation0]]
  $region38: #{generator_forward.1} parent=0
    _
  %s10 = ssub.s32 1, %s8
  %s11 = scalar_select 0, %s10, %s8
  // Predicated region
  $region2: #{generator_forward.1} parent=0 // pred_check
    _
  $region3: #{generator_forward.1} parent=0 // pred_check_branch
    %13 = sbr.rel (0) target = $region5
  $region4: #{generator_forward.1} parent=0 // pred_region
    _
  $region5: #{generator_forward.1} parent=0 // pred_fallthru
    _
  // Predicated region
  $region6: #{generator_forward.1} parent=0 // pred_check
    _
  $region7: #{generator_forward.1} parent=0 // pred_check_branch
    %15 = sbr.rel (0) target = $region9
  $region8: #{generator_forward.1} parent=0 // pred_region
    _
  $region9: #{generator_forward.1} parent=0 // pred_fallthru
    _
  // Predicated region
  $region10: #{generator_forward.1} parent=0 // pred_check
    _
  $region11: #{generator_forward.1} parent=0 // pred_check_branch
    %17 = sbr.rel (0) target = $region13
  $region12: #{generator_forward.1} parent=0 // pred_region
    _
  $region13: #{generator_forward.1} parent=0 // pred_fallthru
    _
  // Predicated region
  $region14: #{generator_forward.1} parent=0 // pred_check
    _
  $region15: #{generator_forward.1} parent=0 // pred_check_branch
    %19 = sbr.rel (0) target = $region17
  $region16: #{generator_forward.1} parent=0 // pred_region
    _
  $region17: #{generator_forward.1} parent=0 // pred_fallthru
    _
  // Predicated region
  $region18: #{generator_forward.1} parent=0 // pred_check
    _
  $region19: #{generator_forward.1} parent=0 // pred_check_branch
    %21 = sbr.rel (0) target = $region21
  $region20: #{generator_forward.1} parent=0 // pred_region
    _
  $region21: #{generator_forward.1} parent=0 // pred_fallthru
    _
  // Predicated region
  $region22: #{generator_forward.1} parent=0 // pred_check
    _
  $region23: #{generator_forward.1} parent=0 // pred_check_branch
    %23 = sbr.rel (0) target = $region25
  $region24: #{generator_forward.1} parent=0 // pred_region
    _
  $region25: #{generator_forward.1} parent=0 // pred_fallthru
    _
  // Predicated region
  $region26: #{generator_forward.1} parent=0 // pred_check
    _
  $region27: #{generator_forward.1} parent=0 // pred_check_branch
    %25 = sbr.rel (0) target = $region29
  $region28: #{generator_forward.1} parent=0 // pred_region
    _
  $region29: #{generator_forward.1} parent=0 // pred_fallthru
    _
  %v27 = vld [vmem:[%s0] sm:$0xf]
  %v28 = vld [vmem:[%s0 + $0x4] sm:$0xf]
  %v29 = vld [vmem:[%s0 + $0x8] sm:$0xf]
  %v30 = vld [vmem:[%s0 + $0xc] sm:$0xf]
  %v31 = vld [vmem:[%s0 + $0x10] sm:$0xf]
  %v32 = vld [vmem:[%s0 + $0x14] sm:$0xf]
  %v33 = vld [vmem:[%s0 + $0x18] sm:$0xf]
  %v34 = vld [vmem:[%s0 + $0x1c] sm:$0xf]
  %v35 = vld [vmem:[%s0 + $0x20] sm:$0xf]
  %v36 = vld [vmem:[%s0 + $0x24] sm:$0xf]
  %v37 = vld [vmem:[%s0 + $0x28] sm:$0xf]
  %v38 = vld [vmem:[%s0 + $0x2c] sm:$0xf]
  %v39 = vld [vmem:[%s0 + $0x30] sm:$0xf]
  %v40 = vld [vmem:[%s0 + $0x34] sm:$0xf]
  %v41 = vld [vmem:[%s0 + $0x38] sm:$0xf]
  %v42 = vld [vmem:[%s0 + $0x3c] sm:$0xf]
  %v43 = vld [vmem:[%s0 + $0x40] sm:$0xf]
  %v44 = vld [vmem:[%s0 + $0x44] sm:$0xf]
  %v45 = vld [vmem:[%s0 + $0x48] sm:$0xf]
  %v46 = vld [vmem:[%s0 + $0x4c] sm:$0xf]
  %v47 = vld [vmem:[%s0 + $0x50] sm:$0xf]
  %v48 = vld [vmem:[%s0 + $0x54] sm:$0xf]
  %v49 = vld [vmem:[%s0 + $0x58] sm:$0xf]
  %v50 = vld [vmem:[%s0 + $0x5c] sm:$0xf]
  %v51 = vld [vmem:[%s0 + $0x60] sm:$0xf]
  %v52 = vld [vmem:[%s0 + $0x64] sm:$0xf]
  %v53 = vld [vmem:[%s0 + $0x68] sm:$0xf]
  %v54 = vld [vmem:[%s0 + $0x6c] sm:$0xf]
  %v55 = vld [vmem:[%s0 + $0x70] sm:$0xf]
  %v56 = vld [vmem:[%s0 + $0x74] sm:$0xf]
  %v57 = vld [vmem:[%s0 + $0x78] sm:$0xf]
  %v58 = vld [vmem:[%s0 + $0x7c] sm:$0xf]
  %v59 = vld [vmem:[%s1] sm:$0xff]
  %v60 = vld [vmem:[%s1 + $0x8] sm:$0xff]
  %v61 = vld [vmem:[%s1 + $0x10] sm:$0xff]
  %v62 = vld [vmem:[%s1 + $0x18] sm:$0xff]
  %v63 = vld [vmem:[%s1 + $0x20] sm:$0xff]
  %v64 = vld [vmem:[%s1 + $0x28] sm:$0xff]
  %v65 = vld [vmem:[%s1 + $0x30] sm:$0xff]
  %v66 = vld [vmem:[%s1 + $0x38] sm:$0xff]
  %v67 = vld [vmem:[%s1 + $0x40] sm:$0xff]
  %v68 = vld [vmem:[%s1 + $0x48] sm:$0xff]
  %v69 = vld [vmem:[%s1 + $0x50] sm:$0xff]
  %v70 = vld [vmem:[%s1 + $0x58] sm:$0xff]
  %v71 = vld [vmem:[%s1 + $0x60] sm:$0xff]
  %v72 = vld [vmem:[%s1 + $0x68] sm:$0xff]
  %v73 = vld [vmem:[%s1 + $0x70] sm:$0xff]
  %v74 = vld [vmem:[%s1 + $0x78] sm:$0xff]
  %v75 = vld [vmem:[%s2] sm:$0x3]
  %v77 = vlaneseq
  %v78 = vshrl.u32 %v77, 7
  %v79 = vsub.s32 0, %v78
  %v80 = vrot.slane %v75, %v79
  %v81 = vlaneseq
  %v82 = vshrl.u32 %v81, 7
  %v83 = vsub.s32 1, %v82
  %v84 = vrot.slane %v75, %v83
  %v119 = vunpack.c.l.b16 %v27
  %v120 = vunpack.c.l.b16 %v28
  %v121 = vunpack.c.l.b16 %v29
  %v122 = vunpack.c.l.b16 %v30
  %v123 = vunpack.c.l.b16 %v31
  %v124 = vunpack.c.l.b16 %v32
  %v125 = vunpack.c.l.b16 %v33
  %v126 = vunpack.c.l.b16 %v34
  %v127 = vunpack.c.l.b16 %v35
  %v128 = vunpack.c.l.b16 %v36
  %v129 = vunpack.c.l.b16 %v37
  %v130 = vunpack.c.l.b16 %v38
  %v131 = vunpack.c.l.b16 %v39
  %v132 = vunpack.c.l.b16 %v40
  %v133 = vunpack.c.l.b16 %v41
  %v134 = vunpack.c.l.b16 %v42
  %v135 = vunpack.c.l.b16 %v43
  %v136 = vunpack.c.l.b16 %v44
  %v137 = vunpack.c.l.b16 %v45
  %v138 = vunpack.c.l.b16 %v46
  %v139 = vunpack.c.l.b16 %v47
  %v140 = vunpack.c.l.b16 %v48
  %v141 = vunpack.c.l.b16 %v49
  %v142 = vunpack.c.l.b16 %v50
  %v143 = vunpack.c.l.b16 %v51
  %v144 = vunpack.c.l.b16 %v52
  %v145 = vunpack.c.l.b16 %v53
  %v146 = vunpack.c.l.b16 %v54
  %v147 = vunpack.c.l.b16 %v55
  %v148 = vunpack.c.l.b16 %v56
  %v149 = vunpack.c.l.b16 %v57
  %v150 = vunpack.c.l.b16 %v58
  %v151 = vpack.c.b16 %v120, %v119
  %v152 = vpack.c.b16 %v122, %v121
  %v153 = vpack.c.b16 %v124, %v123
  %v154 = vpack.c.b16 %v126, %v125
  %v155 = vpack.c.b16 %v128, %v127
  %v156 = vpack.c.b16 %v130, %v129
  %v157 = vpack.c.b16 %v132, %v131
  %v158 = vpack.c.b16 %v134, %v133
  %v159 = vpack.c.b16 %v136, %v135
  %v160 = vpack.c.b16 %v138, %v137
  %v161 = vpack.c.b16 %v140, %v139
  %v162 = vpack.c.b16 %v142, %v141
  %v163 = vpack.c.b16 %v144, %v143
  %v164 = vpack.c.b16 %v146, %v145
  %v165 = vpack.c.b16 %v148, %v147
  %v166 = vpack.c.b16 %v150, %v149
  %v199 = vunpack.c.l.b16 %v59
  %v200 = vunpack.c.h.b16 %v59
  %v201 = vunpack.c.l.b16 %v60
  %v202 = vunpack.c.h.b16 %v60
  %v203 = vunpack.c.l.b16 %v61
  %v204 = vunpack.c.h.b16 %v61
  %v205 = vunpack.c.l.b16 %v62
  %v206 = vunpack.c.h.b16 %v62
  %v207 = vunpack.c.l.b16 %v63
  %v208 = vunpack.c.h.b16 %v63
  %v209 = vunpack.c.l.b16 %v64
  %v210 = vunpack.c.h.b16 %v64
  %v211 = vunpack.c.l.b16 %v65
  %v212 = vunpack.c.h.b16 %v65
  %v213 = vunpack.c.l.b16 %v66
  %v214 = vunpack.c.h.b16 %v66
  %v215 = vunpack.c.l.b16 %v67
  %v216 = vunpack.c.h.b16 %v67
  %v217 = vunpack.c.l.b16 %v68
  %v218 = vunpack.c.h.b16 %v68
  %v219 = vunpack.c.l.b16 %v69
  %v220 = vunpack.c.h.b16 %v69
  %v221 = vunpack.c.l.b16 %v70
  %v222 = vunpack.c.h.b16 %v70
  %v223 = vunpack.c.l.b16 %v71
  %v224 = vunpack.c.h.b16 %v71
  %v225 = vunpack.c.l.b16 %v72
  %v226 = vunpack.c.h.b16 %v72
  %v227 = vunpack.c.l.b16 %v73
  %v228 = vunpack.c.h.b16 %v73
  %v229 = vunpack.c.l.b16 %v74
  %v230 = vunpack.c.h.b16 %v74
  %v231 = vpack.c.b16 %v201, %v199
  %v232 = vpack.c.b16 %v202, %v200
  %v233 = vpack.c.b16 %v205, %v203
  %v234 = vpack.c.b16 %v206, %v204
  %v235 = vpack.c.b16 %v209, %v207
  %v236 = vpack.c.b16 %v210, %v208
  %v237 = vpack.c.b16 %v213, %v211
  %v238 = vpack.c.b16 %v214, %v212
  %v239 = vpack.c.b16 %v217, %v215
  %v240 = vpack.c.b16 %v218, %v216
  %v241 = vpack.c.b16 %v221, %v219
  %v242 = vpack.c.b16 %v222, %v220
  %v243 = vpack.c.b16 %v225, %v223
  %v244 = vpack.c.b16 %v226, %v224
  %v245 = vpack.c.b16 %v229, %v227
  %v246 = vpack.c.b16 %v230, %v228
  %263 = vmatprep.subr.bf16.mxu0 %v246
  %264 = vmatpush1.bf16.msra.mxu0 %v245
  %265 = vmatprep.subr.bf16.mxu0 %v244
  %266 = vmatpush1.bf16.msra.mxu0 %v243
  %267 = vmatprep.subr.bf16.mxu0 %v242
  %268 = vmatpush1.bf16.msra.mxu0 %v241
  %269 = vmatprep.subr.bf16.mxu0 %v240
  %270 = vmatpush1.bf16.msra.mxu0 %v239
  %271 = vmatprep.subr.bf16.mxu0 %v238
  %272 = vmatpush1.bf16.msra.mxu0 %v237
  %273 = vmatprep.subr.bf16.mxu0 %v236
  %274 = vmatpush1.bf16.msra.mxu0 %v235
  %275 = vmatprep.subr.bf16.mxu0 %v234
  %276 = vmatpush1.bf16.msra.mxu0 %v233
  %277 = vmatprep.subr.bf16.mxu0 %v232
  %278 = vmatpush1.bf16.msra.mxu0 %v231
  %279 = vmatprep.subr.bf16.mxu0 0
  %280 = vmatpush2.bf16.msra.mxu0 0
  %281 = vmatprep.subr.bf16.mxu0 0
  %282 = vmatpush2.bf16.msra.mxu0 0
  %283 = vmatprep.subr.bf16.mxu0 0
  %284 = vmatpush2.bf16.msra.mxu0 0
  %285 = vmatprep.subr.bf16.mxu0 0
  %286 = vmatpush2.bf16.msra.mxu0 0
  %287 = vmatprep.subr.bf16.mxu0 0
  %288 = vmatpush2.bf16.msra.mxu0 0
  %289 = vmatprep.subr.bf16.mxu0 0
  %290 = vmatpush2.bf16.msra.mxu0 0
  %291 = vmatprep.subr.bf16.mxu0 0
  %292 = vmatpush2.bf16.msra.mxu0 0
  %293 = vmatprep.subr.bf16.mxu0 0
  %294 = vmatpush2.bf16.msra.mxu0 0
  %295 = vmatprep.mubr.bf16.mxu0 0
  %296 = vmatmul.mubr.bf16.gmra.mxu0 %v151
  %v297 = vpop.f32.mrf.mxu0
  %v298 = vadd.f32 %v80, %v297
  %v299 = vpop.f32.mrf.mxu0
  %v300 = vadd.f32 %v84, %v299
  %v301 = vpop.f32.mrf.mxu0
  %v302 = vadd.f32 %v80, %v301
  %v303 = vpop.f32.mrf.mxu0
  %v304 = vadd.f32 %v84, %v303
  %305 = vmatprep.mubr.bf16.mxu0 0
  %306 = vmatmul.mubr.bf16.gmra.mxu0 %v152
  %v307 = vpop.f32.mrf.mxu0
  %v308 = vadd.f32 %v80, %v307
  %v309 = vpop.f32.mrf.mxu0
  %v310 = vadd.f32 %v84, %v309
  %v311 = vpop.f32.mrf.mxu0
  %v312 = vadd.f32 %v80, %v311
  %v313 = vpop.f32.mrf.mxu0
  %v314 = vadd.f32 %v84, %v313
  %315 = vmatprep.mubr.bf16.mxu0 0
  %316 = vmatmul.mubr.bf16.gmra.mxu0 %v153
  %v317 = vpop.f32.mrf.mxu0
  %v318 = vadd.f32 %v80, %v317
  %v319 = vpop.f32.mrf.mxu0
  %v320 = vadd.f32 %v84, %v319
  %v321 = vpop.f32.mrf.mxu0
  %v322 = vadd.f32 %v80, %v321
  %v323 = vpop.f32.mrf.mxu0
  %v324 = vadd.f32 %v84, %v323
  %325 = vmatprep.mubr.bf16.mxu0 0
  %326 = vmatmul.mubr.bf16.gmra.mxu0 %v154
  %v327 = vpop.f32.mrf.mxu0
  %v328 = vadd.f32 %v80, %v327
  %v329 = vpop.f32.mrf.mxu0
  %v330 = vadd.f32 %v84, %v329
  %v331 = vpop.f32.mrf.mxu0
  %v332 = vadd.f32 %v80, %v331
  %v333 = vpop.f32.mrf.mxu0
  %v334 = vadd.f32 %v84, %v333
  %335 = vmatprep.mubr.bf16.mxu0 0
  %336 = vmatmul.mubr.bf16.gmra.mxu0 %v155
  %v337 = vpop.f32.mrf.mxu0
  %v338 = vadd.f32 %v80, %v337
  %v339 = vpop.f32.mrf.mxu0
  %v340 = vadd.f32 %v84, %v339
  %v341 = vpop.f32.mrf.mxu0
  %v342 = vadd.f32 %v80, %v341
  %v343 = vpop.f32.mrf.mxu0
  %v344 = vadd.f32 %v84, %v343
  %345 = vmatprep.mubr.bf16.mxu0 0
  %346 = vmatmul.mubr.bf16.gmra.mxu0 %v156
  %v347 = vpop.f32.mrf.mxu0
  %v348 = vadd.f32 %v80, %v347
  %v349 = vpop.f32.mrf.mxu0
  %v350 = vadd.f32 %v84, %v349
  %v351 = vpop.f32.mrf.mxu0
  %v352 = vadd.f32 %v80, %v351
  %v353 = vpop.f32.mrf.mxu0
  %v354 = vadd.f32 %v84, %v353
  %355 = vmatprep.mubr.bf16.mxu0 0
  %356 = vmatmul.mubr.bf16.gmra.mxu0 %v157
  %v357 = vpop.f32.mrf.mxu0
  %v358 = vadd.f32 %v80, %v357
  %v359 = vpop.f32.mrf.mxu0
  %v360 = vadd.f32 %v84, %v359
  %v361 = vpop.f32.mrf.mxu0
  %v362 = vadd.f32 %v80, %v361
  %v363 = vpop.f32.mrf.mxu0
  %v364 = vadd.f32 %v84, %v363
  %365 = vmatprep.mubr.bf16.mxu0 0
  %366 = vmatmul.mubr.bf16.gmra.mxu0 %v158
  %v367 = vpop.f32.mrf.mxu0
  %v368 = vadd.f32 %v80, %v367
  %v369 = vpop.f32.mrf.mxu0
  %v370 = vadd.f32 %v84, %v369
  %v371 = vpop.f32.mrf.mxu0
  %v372 = vadd.f32 %v80, %v371
  %v373 = vpop.f32.mrf.mxu0
  %v374 = vadd.f32 %v84, %v373
  %375 = vmatprep.mubr.bf16.mxu0 0
  %376 = vmatmul.mubr.bf16.gmra.mxu0 %v159
  %v377 = vpop.f32.mrf.mxu0
  %v378 = vadd.f32 %v80, %v377
  %v379 = vpop.f32.mrf.mxu0
  %v380 = vadd.f32 %v84, %v379
  %v381 = vpop.f32.mrf.mxu0
  %v382 = vadd.f32 %v80, %v381
  %v383 = vpop.f32.mrf.mxu0
  %v384 = vadd.f32 %v84, %v383
  %385 = vmatprep.mubr.bf16.mxu0 0
  %386 = vmatmul.mubr.bf16.gmra.mxu0 %v160
  %v387 = vpop.f32.mrf.mxu0
  %v388 = vadd.f32 %v80, %v387
  %v389 = vpop.f32.mrf.mxu0
  %v390 = vadd.f32 %v84, %v389
  %v391 = vpop.f32.mrf.mxu0
  %v392 = vadd.f32 %v80, %v391
  %v393 = vpop.f32.mrf.mxu0
  %v394 = vadd.f32 %v84, %v393
  %395 = vmatprep.mubr.bf16.mxu0 0
  %396 = vmatmul.mubr.bf16.gmra.mxu0 %v161
  %v397 = vpop.f32.mrf.mxu0
  %v398 = vadd.f32 %v80, %v397
  %v399 = vpop.f32.mrf.mxu0
  %v400 = vadd.f32 %v84, %v399
  %v401 = vpop.f32.mrf.mxu0
  %v402 = vadd.f32 %v80, %v401
  %v403 = vpop.f32.mrf.mxu0
  %v404 = vadd.f32 %v84, %v403
  %405 = vmatprep.mubr.bf16.mxu0 0
  %406 = vmatmul.mubr.bf16.gmra.mxu0 %v162
  %v407 = vpop.f32.mrf.mxu0
  %v408 = vadd.f32 %v80, %v407
  %v409 = vpop.f32.mrf.mxu0
  %v410 = vadd.f32 %v84, %v409
  %v411 = vpop.f32.mrf.mxu0
  %v412 = vadd.f32 %v80, %v411
  %v413 = vpop.f32.mrf.mxu0
  %v414 = vadd.f32 %v84, %v413
  %415 = vmatprep.mubr.bf16.mxu0 0
  %416 = vmatmul.mubr.bf16.gmra.mxu0 %v163
  %v417 = vpop.f32.mrf.mxu0
  %v418 = vadd.f32 %v80, %v417
  %v419 = vpop.f32.mrf.mxu0
  %v420 = vadd.f32 %v84, %v419
  %v421 = vpop.f32.mrf.mxu0
  %v422 = vadd.f32 %v80, %v421
  %v423 = vpop.f32.mrf.mxu0
  %v424 = vadd.f32 %v84, %v423
  %425 = vmatprep.mubr.bf16.mxu0 0
  %426 = vmatmul.mubr.bf16.gmra.mxu0 %v164
  %v427 = vpop.f32.mrf.mxu0
  %v428 = vadd.f32 %v80, %v427
  %v429 = vpop.f32.mrf.mxu0
  %v430 = vadd.f32 %v84, %v429
  %v431 = vpop.f32.mrf.mxu0
  %v432 = vadd.f32 %v80, %v431
  %v433 = vpop.f32.mrf.mxu0
  %v434 = vadd.f32 %v84, %v433
  %435 = vmatprep.mubr.bf16.mxu0 0
  %436 = vmatmul.mubr.bf16.gmra.mxu0 %v165
  %v437 = vpop.f32.mrf.mxu0
  %v438 = vadd.f32 %v80, %v437
  %v439 = vpop.f32.mrf.mxu0
  %v440 = vadd.f32 %v84, %v439
  %v441 = vpop.f32.mrf.mxu0
  %v442 = vadd.f32 %v80, %v441
  %v443 = vpop.f32.mrf.mxu0
  %v444 = vadd.f32 %v84, %v443
  %445 = vmatprep.mubr.bf16.mxu0 0
  %446 = vmatmul.mubr.bf16.gmra.mxu0 %v166
  %v447 = vpop.f32.mrf.mxu0
  %v448 = vadd.f32 %v80, %v447
  %v449 = vpop.f32.mrf.mxu0
  %v450 = vadd.f32 %v84, %v449
  %v451 = vpop.f32.mrf.mxu0
  %v452 = vadd.f32 %v80, %v451
  %v453 = vpop.f32.mrf.mxu0
  %v454 = vadd.f32 %v84, %v453
  %455 = vdwg.mxu0
  %v456 = vmax.f32 %v298, 0.0
  %v457 = vmax.f32 %v300, 0.0
  %v458 = vmax.f32 %v302, 0.0
  %v459 = vmax.f32 %v304, 0.0
  %v460 = vmax.f32 %v308, 0.0
  %v461 = vmax.f32 %v310, 0.0
  %v462 = vmax.f32 %v312, 0.0
  %v463 = vmax.f32 %v314, 0.0
  %v464 = vmax.f32 %v318, 0.0
  %v465 = vmax.f32 %v320, 0.0
  %v466 = vmax.f32 %v322, 0.0
  %v467 = vmax.f32 %v324, 0.0
  %v468 = vmax.f32 %v328, 0.0
  %v469 = vmax.f32 %v330, 0.0
  %v470 = vmax.f32 %v332, 0.0
  %v471 = vmax.f32 %v334, 0.0
  %v472 = vmax.f32 %v338, 0.0
  %v473 = vmax.f32 %v340, 0.0
  %v474 = vmax.f32 %v342, 0.0
  %v475 = vmax.f32 %v344, 0.0
  %v476 = vmax.f32 %v348, 0.0
  %v477 = vmax.f32 %v350, 0.0
  %v478 = vmax.f32 %v352, 0.0
  %v479 = vmax.f32 %v354, 0.0
  %v480 = vmax.f32 %v358, 0.0
  %v481 = vmax.f32 %v360, 0.0
  %v482 = vmax.f32 %v362, 0.0
  %v483 = vmax.f32 %v364, 0.0
  %v484 = vmax.f32 %v368, 0.0
  %v485 = vmax.f32 %v370, 0.0
  %v486 = vmax.f32 %v372, 0.0
  %v487 = vmax.f32 %v374, 0.0
  %v488 = vmax.f32 %v378, 0.0
  %v489 = vmax.f32 %v380, 0.0
  %v490 = vmax.f32 %v382, 0.0
  %v491 = vmax.f32 %v384, 0.0
  %v492 = vmax.f32 %v388, 0.0
  %v493 = vmax.f32 %v390, 0.0
  %v494 = vmax.f32 %v392, 0.0
  %v495 = vmax.f32 %v394, 0.0
  %v496 = vmax.f32 %v398, 0.0
  %v497 = vmax.f32 %v400, 0.0
  %v498 = vmax.f32 %v402, 0.0
  %v499 = vmax.f32 %v404, 0.0
  %v500 = vmax.f32 %v408, 0.0
  %v501 = vmax.f32 %v410, 0.0
  %v502 = vmax.f32 %v412, 0.0
  %v503 = vmax.f32 %v414, 0.0
  %v504 = vmax.f32 %v418, 0.0
  %v505 = vmax.f32 %v420, 0.0
  %v506 = vmax.f32 %v422, 0.0
  %v507 = vmax.f32 %v424, 0.0
  %v508 = vmax.f32 %v428, 0.0
  %v509 = vmax.f32 %v430, 0.0
  %v510 = vmax.f32 %v432, 0.0
  %v511 = vmax.f32 %v434, 0.0
  %v512 = vmax.f32 %v438, 0.0
  %v513 = vmax.f32 %v440, 0.0
  %v514 = vmax.f32 %v442, 0.0
  %v515 = vmax.f32 %v444, 0.0
  %v516 = vmax.f32 %v448, 0.0
  %v517 = vmax.f32 %v450, 0.0
  %v518 = vmax.f32 %v452, 0.0
  %v519 = vmax.f32 %v454, 0.0
  %v520 = vpack.c.bf16 %v458, %v456
  %v521 = vpack.c.bf16 %v459, %v457
  %v522 = vpack.c.bf16 %v462, %v460
  %v523 = vpack.c.bf16 %v463, %v461
  %v524 = vpack.c.bf16 %v466, %v464
  %v525 = vpack.c.bf16 %v467, %v465
  %v526 = vpack.c.bf16 %v470, %v468
  %v527 = vpack.c.bf16 %v471, %v469
  %v528 = vpack.c.bf16 %v474, %v472
  %v529 = vpack.c.bf16 %v475, %v473
  %v530 = vpack.c.bf16 %v478, %v476
  %v531 = vpack.c.bf16 %v479, %v477
  %v532 = vpack.c.bf16 %v482, %v480
  %v533 = vpack.c.bf16 %v483, %v481
  %v534 = vpack.c.bf16 %v486, %v484
  %v535 = vpack.c.bf16 %v487, %v485
  %v536 = vpack.c.bf16 %v490, %v488
  %v537 = vpack.c.bf16 %v491, %v489
  %v538 = vpack.c.bf16 %v494, %v492
  %v539 = vpack.c.bf16 %v495, %v493
  %v540 = vpack.c.bf16 %v498, %v496
  %v541 = vpack.c.bf16 %v499, %v497
  %v542 = vpack.c.bf16 %v502, %v500
  %v543 = vpack.c.bf16 %v503, %v501
  %v544 = vpack.c.bf16 %v506, %v504
  %v545 = vpack.c.bf16 %v507, %v505
  %v546 = vpack.c.bf16 %v510, %v508
  %v547 = vpack.c.bf16 %v511, %v509
  %v548 = vpack.c.bf16 %v514, %v512
  %v549 = vpack.c.bf16 %v515, %v513
  %v550 = vpack.c.bf16 %v518, %v516
  %v551 = vpack.c.bf16 %v519, %v517
  %v552 = vld [vmem:[%s3] sm:$0xff]
  %v553 = vld [vmem:[%s3 + $0x8] sm:$0xff]
  %v554 = vld [vmem:[%s3 + $0x10] sm:$0xff]
  %v555 = vld [vmem:[%s3 + $0x18] sm:$0xff]
  %v556 = vld [vmem:[%s3 + $0x20] sm:$0xff]
  %v557 = vld [vmem:[%s3 + $0x28] sm:$0xff]
  %v558 = vld [vmem:[%s3 + $0x30] sm:$0xff]
  %v559 = vld [vmem:[%s3 + $0x38] sm:$0xff]
  %v560 = vld [vmem:[%s3 + $0x40] sm:$0xff]
  %v561 = vld [vmem:[%s3 + $0x48] sm:$0xff]
  %v562 = vld [vmem:[%s3 + $0x50] sm:$0xff]
  %v563 = vld [vmem:[%s3 + $0x58] sm:$0xff]
  %v564 = vld [vmem:[%s3 + $0x60] sm:$0xff]
  %v565 = vld [vmem:[%s3 + $0x68] sm:$0xff]
  %v566 = vld [vmem:[%s3 + $0x70] sm:$0xff]
  %v567 = vld [vmem:[%s3 + $0x78] sm:$0xff]
  %v568 = vld [vmem:[%s3 + $0x80] sm:$0xff]
  %v569 = vld [vmem:[%s3 + $0x88] sm:$0xff]
  %v570 = vld [vmem:[%s3 + $0x90] sm:$0xff]
  %v571 = vld [vmem:[%s3 + $0x98] sm:$0xff]
  %v572 = vld [vmem:[%s3 + $0xa0] sm:$0xff]
  %v573 = vld [vmem:[%s3 + $0xa8] sm:$0xff]
  %v574 = vld [vmem:[%s3 + $0xb0] sm:$0xff]
  %v575 = vld [vmem:[%s3 + $0xb8] sm:$0xff]
  %v576 = vld [vmem:[%s3 + $0xc0] sm:$0xff]
  %v577 = vld [vmem:[%s3 + $0xc8] sm:$0xff]
  %v578 = vld [vmem:[%s3 + $0xd0] sm:$0xff]
  %v579 = vld [vmem:[%s3 + $0xd8] sm:$0xff]
  %v580 = vld [vmem:[%s3 + $0xe0] sm:$0xff]
  %v581 = vld [vmem:[%s3 + $0xe8] sm:$0xff]
  %v582 = vld [vmem:[%s3 + $0xf0] sm:$0xff]
  %v583 = vld [vmem:[%s3 + $0xf8] sm:$0xff]
  %v584 = vld [vmem:[%s3 + $0x100] sm:$0xff]
  %v585 = vld [vmem:[%s3 + $0x108] sm:$0xff]
  %v586 = vld [vmem:[%s3 + $0x110] sm:$0xff]
  %v587 = vld [vmem:[%s3 + $0x118] sm:$0xff]
  %v588 = vld [vmem:[%s3 + $0x120] sm:$0xff]
  %v589 = vld [vmem:[%s3 + $0x128] sm:$0xff]
  %v590 = vld [vmem:[%s3 + $0x130] sm:$0xff]
  %v591 = vld [vmem:[%s3 + $0x138] sm:$0xff]
  %v592 = vld [vmem:[%s3 + $0x140] sm:$0xff]
  %v593 = vld [vmem:[%s3 + $0x148] sm:$0xff]
  %v594 = vld [vmem:[%s3 + $0x150] sm:$0xff]
  %v595 = vld [vmem:[%s3 + $0x158] sm:$0xff]
  %v596 = vld [vmem:[%s3 + $0x160] sm:$0xff]
  %v597 = vld [vmem:[%s3 + $0x168] sm:$0xff]
  %v598 = vld [vmem:[%s3 + $0x170] sm:$0xff]
  %v599 = vld [vmem:[%s3 + $0x178] sm:$0xff]
  %v600 = vld [vmem:[%s3 + $0x180] sm:$0xff]
  %v601 = vld [vmem:[%s3 + $0x188] sm:$0xff]
  %v602 = vld [vmem:[%s3 + $0x190] sm:$0xff]
  %v603 = vld [vmem:[%s3 + $0x198] sm:$0xff]
  %v604 = vld [vmem:[%s3 + $0x1a0] sm:$0xff]
  %v605 = vld [vmem:[%s3 + $0x1a8] sm:$0xff]
  %v606 = vld [vmem:[%s3 + $0x1b0] sm:$0xff]
  %v607 = vld [vmem:[%s3 + $0x1b8] sm:$0xff]
  %v608 = vld [vmem:[%s3 + $0x1c0] sm:$0xff]
  %v609 = vld [vmem:[%s3 + $0x1c8] sm:$0xff]
  %v610 = vld [vmem:[%s3 + $0x1d0] sm:$0xff]
  %v611 = vld [vmem:[%s3 + $0x1d8] sm:$0xff]
  %v612 = vld [vmem:[%s3 + $0x1e0] sm:$0xff]
  %v613 = vld [vmem:[%s3 + $0x1e8] sm:$0xff]
  %v614 = vld [vmem:[%s3 + $0x1f0] sm:$0xff]
  %v615 = vld [vmem:[%s3 + $0x1f8] sm:$0xff]
  %v616 = vld [vmem:[%s4] sm:$0xf]
  %v618 = vlaneseq
  %v619 = vshrl.u32 %v618, 7
  %v620 = vsub.s32 0, %v619
  %v621 = vrot.slane %v616, %v620
  %v622 = vlaneseq
  %v623 = vshrl.u32 %v622, 7
  %v624 = vsub.s32 1, %v623
  %v625 = vrot.slane %v616, %v624
  %v626 = vlaneseq
  %v627 = vshrl.u32 %v626, 7
  %v628 = vsub.s32 2, %v627
  %v629 = vrot.slane %v616, %v628
  %v630 = vlaneseq
  %v631 = vshrl.u32 %v630, 7
  %v632 = vsub.s32 3, %v631
  %v633 = vrot.slane %v616, %v632
  %v702 = vunpack.c.l.b16 %v552
  %v703 = vunpack.c.h.b16 %v552
  %v704 = vunpack.c.l.b16 %v553
  %v705 = vunpack.c.h.b16 %v553
  %v706 = vunpack.c.l.b16 %v554
  %v707 = vunpack.c.h.b16 %v554
  %v708 = vunpack.c.l.b16 %v555
  %v709 = vunpack.c.h.b16 %v555
  %v710 = vunpack.c.l.b16 %v556
  %v711 = vunpack.c.h.b16 %v556
  %v712 = vunpack.c.l.b16 %v557
  %v713 = vunpack.c.h.b16 %v557
  %v714 = vunpack.c.l.b16 %v558
  %v715 = vunpack.c.h.b16 %v558
  %v716 = vunpack.c.l.b16 %v559
  %v717 = vunpack.c.h.b16 %v559
  %v718 = vunpack.c.l.b16 %v560
  %v719 = vunpack.c.h.b16 %v560
  %v720 = vunpack.c.l.b16 %v561
  %v721 = vunpack.c.h.b16 %v561
  %v722 = vunpack.c.l.b16 %v562
  %v723 = vunpack.c.h.b16 %v562
  %v724 = vunpack.c.l.b16 %v563
  %v725 = vunpack.c.h.b16 %v563
  %v726 = vunpack.c.l.b16 %v564
  %v727 = vunpack.c.h.b16 %v564
  %v728 = vunpack.c.l.b16 %v565
  %v729 = vunpack.c.h.b16 %v565
  %v730 = vunpack.c.l.b16 %v566
  %v731 = vunpack.c.h.b16 %v566
  %v732 = vunpack.c.l.b16 %v567
  %v733 = vunpack.c.h.b16 %v567
  %v734 = vunpack.c.l.b16 %v568
  %v735 = vunpack.c.h.b16 %v568
  %v736 = vunpack.c.l.b16 %v569
  %v737 = vunpack.c.h.b16 %v569
  %v738 = vunpack.c.l.b16 %v570
  %v739 = vunpack.c.h.b16 %v570
  %v740 = vunpack.c.l.b16 %v571
  %v741 = vunpack.c.h.b16 %v571
  %v742 = vunpack.c.l.b16 %v572
  %v743 = vunpack.c.h.b16 %v572
  %v744 = vunpack.c.l.b16 %v573
  %v745 = vunpack.c.h.b16 %v573
  %v746 = vunpack.c.l.b16 %v574
  %v747 = vunpack.c.h.b16 %v574
  %v748 = vunpack.c.l.b16 %v575
  %v749 = vunpack.c.h.b16 %v575
  %v750 = vunpack.c.l.b16 %v576
  %v751 = vunpack.c.h.b16 %v576
  %v752 = vunpack.c.l.b16 %v577
  %v753 = vunpack.c.h.b16 %v577
  %v754 = vunpack.c.l.b16 %v578
  %v755 = vunpack.c.h.b16 %v578
  %v756 = vunpack.c.l.b16 %v579
  %v757 = vunpack.c.h.b16 %v579
  %v758 = vunpack.c.l.b16 %v580
  %v759 = vunpack.c.h.b16 %v580
  %v760 = vunpack.c.l.b16 %v581
  %v761 = vunpack.c.h.b16 %v581
  %v762 = vunpack.c.l.b16 %v582
  %v763 = vunpack.c.h.b16 %v582
  %v764 = vunpack.c.l.b16 %v583
  %v765 = vunpack.c.h.b16 %v583
  %v766 = vunpack.c.l.b16 %v584
  %v767 = vunpack.c.h.b16 %v584
  %v768 = vunpack.c.l.b16 %v585
  %v769 = vunpack.c.h.b16 %v585
  %v770 = vunpack.c.l.b16 %v586
  %v771 = vunpack.c.h.b16 %v586
  %v772 = vunpack.c.l.b16 %v587
  %v773 = vunpack.c.h.b16 %v587
  %v774 = vunpack.c.l.b16 %v588
  %v775 = vunpack.c.h.b16 %v588
  %v776 = vunpack.c.l.b16 %v589
  %v777 = vunpack.c.h.b16 %v589
  %v778 = vunpack.c.l.b16 %v590
  %v779 = vunpack.c.h.b16 %v590
  %v780 = vunpack.c.l.b16 %v591
  %v781 = vunpack.c.h.b16 %v591
  %v782 = vunpack.c.l.b16 %v592
  %v783 = vunpack.c.h.b16 %v592
  %v784 = vunpack.c.l.b16 %v593
  %v785 = vunpack.c.h.b16 %v593
  %v786 = vunpack.c.l.b16 %v594
  %v787 = vunpack.c.h.b16 %v594
  %v788 = vunpack.c.l.b16 %v595
  %v789 = vunpack.c.h.b16 %v595
  %v790 = vunpack.c.l.b16 %v596
  %v791 = vunpack.c.h.b16 %v596
  %v792 = vunpack.c.l.b16 %v597
  %v793 = vunpack.c.h.b16 %v597
  %v794 = vunpack.c.l.b16 %v598
  %v795 = vunpack.c.h.b16 %v598
  %v796 = vunpack.c.l.b16 %v599
  %v797 = vunpack.c.h.b16 %v599
  %v798 = vunpack.c.l.b16 %v600
  %v799 = vunpack.c.h.b16 %v600
  %v800 = vunpack.c.l.b16 %v601
  %v801 = vunpack.c.h.b16 %v601
  %v802 = vunpack.c.l.b16 %v602
  %v803 = vunpack.c.h.b16 %v602
  %v804 = vunpack.c.l.b16 %v603
  %v805 = vunpack.c.h.b16 %v603
  %v806 = vunpack.c.l.b16 %v604
  %v807 = vunpack.c.h.b16 %v604
  %v808 = vunpack.c.l.b16 %v605
  %v809 = vunpack.c.h.b16 %v605
  %v810 = vunpack.c.l.b16 %v606
  %v811 = vunpack.c.h.b16 %v606
  %v812 = vunpack.c.l.b16 %v607
  %v813 = vunpack.c.h.b16 %v607
  %v814 = vunpack.c.l.b16 %v608
  %v815 = vunpack.c.h.b16 %v608
  %v816 = vunpack.c.l.b16 %v609
  %v817 = vunpack.c.h.b16 %v609
  %v818 = vunpack.c.l.b16 %v610
  %v819 = vunpack.c.h.b16 %v610
  %v820 = vunpack.c.l.b16 %v611
  %v821 = vunpack.c.h.b16 %v611
  %v822 = vunpack.c.l.b16 %v612
  %v823 = vunpack.c.h.b16 %v612
  %v824 = vunpack.c.l.b16 %v613
  %v825 = vunpack.c.h.b16 %v613
  %v826 = vunpack.c.l.b16 %v614
  %v827 = vunpack.c.h.b16 %v614
  %v828 = vunpack.c.l.b16 %v615
  %v829 = vunpack.c.h.b16 %v615
  %v830 = vpack.c.b16 %v706, %v702
  %v831 = vpack.c.b16 %v707, %v703
  %v832 = vpack.c.b16 %v708, %v704
  %v833 = vpack.c.b16 %v709, %v705
  %v834 = vpack.c.b16 %v714, %v710
  %v835 = vpack.c.b16 %v715, %v711
  %v836 = vpack.c.b16 %v716, %v712
  %v837 = vpack.c.b16 %v717, %v713
  %v838 = vpack.c.b16 %v722, %v718
  %v839 = vpack.c.b16 %v723, %v719
  %v840 = vpack.c.b16 %v724, %v720
  %v841 = vpack.c.b16 %v725, %v721
  %v842 = vpack.c.b16 %v730, %v726
  %v843 = vpack.c.b16 %v731, %v727
  %v844 = vpack.c.b16 %v732, %v728
  %v845 = vpack.c.b16 %v733, %v729
  %v846 = vpack.c.b16 %v738, %v734
  %v847 = vpack.c.b16 %v739, %v735
  %v848 = vpack.c.b16 %v740, %v736
  %v849 = vpack.c.b16 %v741, %v737
  %v850 = vpack.c.b16 %v746, %v742
  %v851 = vpack.c.b16 %v747, %v743
  %v852 = vpack.c.b16 %v748, %v744
  %v853 = vpack.c.b16 %v749, %v745
  %v854 = vpack.c.b16 %v754, %v750
  %v855 = vpack.c.b16 %v755, %v751
  %v856 = vpack.c.b16 %v756, %v752
  %v857 = vpack.c.b16 %v757, %v753
  %v858 = vpack.c.b16 %v762, %v758
  %v859 = vpack.c.b16 %v763, %v759
  %v860 = vpack.c.b16 %v764, %v760
  %v861 = vpack.c.b16 %v765, %v761
  %v862 = vpack.c.b16 %v770, %v766
  %v863 = vpack.c.b16 %v771, %v767
  %v864 = vpack.c.b16 %v772, %v768
  %v865 = vpack.c.b16 %v773, %v769
  %v866 = vpack.c.b16 %v778, %v774
  %v867 = vpack.c.b16 %v779, %v775
  %v868 = vpack.c.b16 %v780, %v776
  %v869 = vpack.c.b16 %v781, %v777
  %v870 = vpack.c.b16 %v786, %v782
  %v871 = vpack.c.b16 %v787, %v783
  %v872 = vpack.c.b16 %v788, %v784
  %v873 = vpack.c.b16 %v789, %v785
  %v874 = vpack.c.b16 %v794, %v790
  %v875 = vpack.c.b16 %v795, %v791
  %v876 = vpack.c.b16 %v796, %v792
  %v877 = vpack.c.b16 %v797, %v793
  %v878 = vpack.c.b16 %v802, %v798
  %v879 = vpack.c.b16 %v803, %v799
  %v880 = vpack.c.b16 %v804, %v800
  %v881 = vpack.c.b16 %v805, %v801
  %v882 = vpack.c.b16 %v810, %v806
  %v883 = vpack.c.b16 %v811, %v807
  %v884 = vpack.c.b16 %v812, %v808
  %v885 = vpack.c.b16 %v813, %v809
  %v886 = vpack.c.b16 %v818, %v814
  %v887 = vpack.c.b16 %v819, %v815
  %v888 = vpack.c.b16 %v820, %v816
  %v889 = vpack.c.b16 %v821, %v817
  %v890 = vpack.c.b16 %v826, %v822
  %v891 = vpack.c.b16 %v827, %v823
  %v892 = vpack.c.b16 %v828, %v824
  %v893 = vpack.c.b16 %v829, %v825
  %958 = vmatprep.subr.bf16.mxu0 %v859
  %959 = vmatpush1.bf16.msra.mxu0 %v858
  %960 = vmatprep.subr.bf16.mxu0 %v855
  %961 = vmatpush1.bf16.msra.mxu0 %v854
  %962 = vmatprep.subr.bf16.mxu0 %v851
  %963 = vmatpush1.bf16.msra.mxu0 %v850
  %964 = vmatprep.subr.bf16.mxu0 %v847
  %965 = vmatpush1.bf16.msra.mxu0 %v846
  %966 = vmatprep.subr.bf16.mxu0 %v843
  %967 = vmatpush1.bf16.msra.mxu0 %v842
  %968 = vmatprep.subr.bf16.mxu0 %v839
  %969 = vmatpush1.bf16.msra.mxu0 %v838
  %970 = vmatprep.subr.bf16.mxu0 %v835
  %971 = vmatpush1.bf16.msra.mxu0 %v834
  %972 = vmatprep.subr.bf16.mxu0 %v831
  %973 = vmatpush1.bf16.msra.mxu0 %v830
  %974 = vmatprep.subr.bf16.mxu0 %v891
  %975 = vmatpush2.bf16.msra.mxu0 %v890
  %976 = vmatprep.subr.bf16.mxu0 %v887
  %977 = vmatpush2.bf16.msra.mxu0 %v886
  %978 = vmatprep.subr.bf16.mxu0 %v883
  %979 = vmatpush2.bf16.msra.mxu0 %v882
  %980 = vmatprep.subr.bf16.mxu0 %v879
  %981 = vmatpush2.bf16.msra.mxu0 %v878
  %982 = vmatprep.subr.bf16.mxu0 %v875
  %983 = vmatpush2.bf16.msra.mxu0 %v874
  %984 = vmatprep.subr.bf16.mxu0 %v871
  %985 = vmatpush2.bf16.msra.mxu0 %v870
  %986 = vmatprep.subr.bf16.mxu0 %v867
  %987 = vmatpush2.bf16.msra.mxu0 %v866
  %988 = vmatprep.subr.bf16.mxu0 %v863
  %989 = vmatpush2.bf16.msra.mxu0 %v862
  %990 = vmatprep.mubr.bf16.mxu0 %v521
  %991 = vmatmul.mubr.bf16.gmra.mxu0 %v520
  %v992 = vpop.f32.mrf.mxu0
  %v993 = vadd.f32 %v621, %v992
  %v994 = vpop.f32.mrf.mxu0
  %v995 = vadd.f32 %v625, %v994
  %v996 = vpop.f32.mrf.mxu0
  %v997 = vadd.f32 %v621, %v996
  %v998 = vpop.f32.mrf.mxu0
  %v999 = vadd.f32 %v625, %v998
  %1000 = vmatprep.mubr.bf16.mxu0 %v523
  %1001 = vmatmul.mubr.bf16.gmra.mxu0 %v522
  %v1002 = vpop.f32.mrf.mxu0
  %v1003 = vadd.f32 %v621, %v1002
  %v1004 = vpop.f32.mrf.mxu0
  %v1005 = vadd.f32 %v625, %v1004
  %v1006 = vpop.f32.mrf.mxu0
  %v1007 = vadd.f32 %v621, %v1006
  %v1008 = vpop.f32.mrf.mxu0
  %v1009 = vadd.f32 %v625, %v1008
  %1010 = vmatprep.mubr.bf16.mxu0 %v525
  %1011 = vmatmul.mubr.bf16.gmra.mxu0 %v524
  %v1012 = vpop.f32.mrf.mxu0
  %v1013 = vadd.f32 %v621, %v1012
  %v1014 = vpop.f32.mrf.mxu0
  %v1015 = vadd.f32 %v625, %v1014
  %v1016 = vpop.f32.mrf.mxu0
  %v1017 = vadd.f32 %v621, %v1016
  %v1018 = vpop.f32.mrf.mxu0
  %v1019 = vadd.f32 %v625, %v1018
  %1020 = vmatprep.mubr.bf16.mxu0 %v527
  %1021 = vmatmul.mubr.bf16.gmra.mxu0 %v526
  %v1022 = vpop.f32.mrf.mxu0
  %v1023 = vadd.f32 %v621, %v1022
  %v1024 = vpop.f32.mrf.mxu0
  %v1025 = vadd.f32 %v625, %v1024
  %v1026 = vpop.f32.mrf.mxu0
  %v1027 = vadd.f32 %v621, %v1026
  %v1028 = vpop.f32.mrf.mxu0
  %v1029 = vadd.f32 %v625, %v1028
  %1030 = vmatprep.mubr.bf16.mxu0 %v529
  %1031 = vmatmul.mubr.bf16.gmra.mxu0 %v528
  %v1032 = vpop.f32.mrf.mxu0
  %v1033 = vadd.f32 %v621, %v1032
  %v1034 = vpop.f32.mrf.mxu0
  %v1035 = vadd.f32 %v625, %v1034
  %v1036 = vpop.f32.mrf.mxu0
  %v1037 = vadd.f32 %v621, %v1036
  %v1038 = vpop.f32.mrf.mxu0
  %v1039 = vadd.f32 %v625, %v1038
  %1040 = vmatprep.mubr.bf16.mxu0 %v531
  %1041 = vmatmul.mubr.bf16.gmra.mxu0 %v530
  %v1042 = vpop.f32.mrf.mxu0
  %v1043 = vadd.f32 %v621, %v1042
  %v1044 = vpop.f32.mrf.mxu0
  %v1045 = vadd.f32 %v625, %v1044
  %v1046 = vpop.f32.mrf.mxu0
  %v1047 = vadd.f32 %v621, %v1046
  %v1048 = vpop.f32.mrf.mxu0
  %v1049 = vadd.f32 %v625, %v1048
  %1050 = vmatprep.mubr.bf16.mxu0 %v533
  %1051 = vmatmul.mubr.bf16.gmra.mxu0 %v532
  %v1052 = vpop.f32.mrf.mxu0
  %v1053 = vadd.f32 %v621, %v1052
  %v1054 = vpop.f32.mrf.mxu0
  %v1055 = vadd.f32 %v625, %v1054
  %v1056 = vpop.f32.mrf.mxu0
  %v1057 = vadd.f32 %v621, %v1056
  %v1058 = vpop.f32.mrf.mxu0
  %v1059 = vadd.f32 %v625, %v1058
  %1060 = vmatprep.mubr.bf16.mxu0 %v535
  %1061 = vmatmul.mubr.bf16.gmra.mxu0 %v534
  %v1062 = vpop.f32.mrf.mxu0
  %v1063 = vadd.f32 %v621, %v1062
  %v1064 = vpop.f32.mrf.mxu0
  %v1065 = vadd.f32 %v625, %v1064
  %v1066 = vpop.f32.mrf.mxu0
  %v1067 = vadd.f32 %v621, %v1066
  %v1068 = vpop.f32.mrf.mxu0
  %v1069 = vadd.f32 %v625, %v1068
  %1070 = vmatprep.mubr.bf16.mxu0 %v537
  %1071 = vmatmul.mubr.bf16.gmra.mxu0 %v536
  %v1072 = vpop.f32.mrf.mxu0
  %v1073 = vadd.f32 %v621, %v1072
  %v1074 = vpop.f32.mrf.mxu0
  %v1075 = vadd.f32 %v625, %v1074
  %v1076 = vpop.f32.mrf.mxu0
  %v1077 = vadd.f32 %v621, %v1076
  %v1078 = vpop.f32.mrf.mxu0
  %v1079 = vadd.f32 %v625, %v1078
  %1080 = vmatprep.mubr.bf16.mxu0 %v539
  %1081 = vmatmul.mubr.bf16.gmra.mxu0 %v538
  %v1082 = vpop.f32.mrf.mxu0
  %v1083 = vadd.f32 %v621, %v1082
  %v1084 = vpop.f32.mrf.mxu0
  %v1085 = vadd.f32 %v625, %v1084
  %v1086 = vpop.f32.mrf.mxu0
  %v1087 = vadd.f32 %v621, %v1086
  %v1088 = vpop.f32.mrf.mxu0
  %v1089 = vadd.f32 %v625, %v1088
  %1090 = vmatprep.mubr.bf16.mxu0 %v541
  %1091 = vmatmul.mubr.bf16.gmra.mxu0 %v540
  %v1092 = vpop.f32.mrf.mxu0
  %v1093 = vadd.f32 %v621, %v1092
  %v1094 = vpop.f32.mrf.mxu0
  %v1095 = vadd.f32 %v625, %v1094
  %v1096 = vpop.f32.mrf.mxu0
  %v1097 = vadd.f32 %v621, %v1096
  %v1098 = vpop.f32.mrf.mxu0
  %v1099 = vadd.f32 %v625, %v1098
  %1100 = vmatprep.mubr.bf16.mxu0 %v543
  %1101 = vmatmul.mubr.bf16.gmra.mxu0 %v542
  %v1102 = vpop.f32.mrf.mxu0
  %v1103 = vadd.f32 %v621, %v1102
  %v1104 = vpop.f32.mrf.mxu0
  %v1105 = vadd.f32 %v625, %v1104
  %v1106 = vpop.f32.mrf.mxu0
  %v1107 = vadd.f32 %v621, %v1106
  %v1108 = vpop.f32.mrf.mxu0
  %v1109 = vadd.f32 %v625, %v1108
  %1110 = vmatprep.mubr.bf16.mxu0 %v545
  %1111 = vmatmul.mubr.bf16.gmra.mxu0 %v544
  %v1112 = vpop.f32.mrf.mxu0
  %v1113 = vadd.f32 %v621, %v1112
  %v1114 = vpop.f32.mrf.mxu0
  %v1115 = vadd.f32 %v625, %v1114
  %v1116 = vpop.f32.mrf.mxu0
  %v1117 = vadd.f32 %v621, %v1116
  %v1118 = vpop.f32.mrf.mxu0
  %v1119 = vadd.f32 %v625, %v1118
  %1120 = vmatprep.mubr.bf16.mxu0 %v547
  %1121 = vmatmul.mubr.bf16.gmra.mxu0 %v546
  %v1122 = vpop.f32.mrf.mxu0
  %v1123 = vadd.f32 %v621, %v1122
  %v1124 = vpop.f32.mrf.mxu0
  %v1125 = vadd.f32 %v625, %v1124
  %v1126 = vpop.f32.mrf.mxu0
  %v1127 = vadd.f32 %v621, %v1126
  %v1128 = vpop.f32.mrf.mxu0
  %v1129 = vadd.f32 %v625, %v1128
  %1130 = vmatprep.mubr.bf16.mxu0 %v549
  %1131 = vmatmul.mubr.bf16.gmra.mxu0 %v548
  %v1132 = vpop.f32.mrf.mxu0
  %v1133 = vadd.f32 %v621, %v1132
  %v1134 = vpop.f32.mrf.mxu0
  %v1135 = vadd.f32 %v625, %v1134
  %v1136 = vpop.f32.mrf.mxu0
  %v1137 = vadd.f32 %v621, %v1136
  %v1138 = vpop.f32.mrf.mxu0
  %v1139 = vadd.f32 %v625, %v1138
  %1140 = vmatprep.mubr.bf16.mxu0 %v551
  %1141 = vmatmul.mubr.bf16.gmra.mxu0 %v550
  %v1142 = vpop.f32.mrf.mxu0
  %v1143 = vadd.f32 %v621, %v1142
  %v1144 = vpop.f32.mrf.mxu0
  %v1145 = vadd.f32 %v625, %v1144
  %v1146 = vpop.f32.mrf.mxu0
  %v1147 = vadd.f32 %v621, %v1146
  %v1148 = vpop.f32.mrf.mxu0
  %v1149 = vadd.f32 %v625, %v1148
  %1150 = vdwg.mxu0
  %1151 = vmatprep.subr.bf16.mxu0 %v861
  %1152 = vmatpush1.bf16.msra.mxu0 %v860
  %1153 = vmatprep.subr.bf16.mxu0 %v857
  %1154 = vmatpush1.bf16.msra.mxu0 %v856
  %1155 = vmatprep.subr.bf16.mxu0 %v853
  %1156 = vmatpush1.bf16.msra.mxu0 %v852
  %1157 = vmatprep.subr.bf16.mxu0 %v849
  %1158 = vmatpush1.bf16.msra.mxu0 %v848
  %1159 = vmatprep.subr.bf16.mxu0 %v845
  %1160 = vmatpush1.bf16.msra.mxu0 %v844
  %1161 = vmatprep.subr.bf16.mxu0 %v841
  %1162 = vmatpush1.bf16.msra.mxu0 %v840
  %1163 = vmatprep.subr.bf16.mxu0 %v837
  %1164 = vmatpush1.bf16.msra.mxu0 %v836
  %1165 = vmatprep.subr.bf16.mxu0 %v833
  %1166 = vmatpush1.bf16.msra.mxu0 %v832
  %1167 = vmatprep.subr.bf16.mxu0 %v893
  %1168 = vmatpush2.bf16.msra.mxu0 %v892
  %1169 = vmatprep.subr.bf16.mxu0 %v889
  %1170 = vmatpush2.bf16.msra.mxu0 %v888
  %1171 = vmatprep.subr.bf16.mxu0 %v885
  %1172 = vmatpush2.bf16.msra.mxu0 %v884
  %1173 = vmatprep.subr.bf16.mxu0 %v881
  %1174 = vmatpush2.bf16.msra.mxu0 %v880
  %1175 = vmatprep.subr.bf16.mxu0 %v877
  %1176 = vmatpush2.bf16.msra.mxu0 %v876
  %1177 = vmatprep.subr.bf16.mxu0 %v873
  %1178 = vmatpush2.bf16.msra.mxu0 %v872
  %1179 = vmatprep.subr.bf16.mxu0 %v869
  %1180 = vmatpush2.bf16.msra.mxu0 %v868
  %1181 = vmatprep.subr.bf16.mxu0 %v865
  %1182 = vmatpush2.bf16.msra.mxu0 %v864
  %1183 = vmatprep.mubr.bf16.mxu0 %v521
  %1184 = vmatmul.mubr.bf16.gmra.mxu0 %v520
  %v1185 = vpop.f32.mrf.mxu0
  %v1186 = vadd.f32 %v629, %v1185
  %v1187 = vpop.f32.mrf.mxu0
  %v1188 = vadd.f32 %v633, %v1187
  %v1189 = vpop.f32.mrf.mxu0
  %v1190 = vadd.f32 %v629, %v1189
  %v1191 = vpop.f32.mrf.mxu0
  %v1192 = vadd.f32 %v633, %v1191
  %1193 = vmatprep.mubr.bf16.mxu0 %v523
  %1194 = vmatmul.mubr.bf16.gmra.mxu0 %v522
  %v1195 = vpop.f32.mrf.mxu0
  %v1196 = vadd.f32 %v629, %v1195
  %v1197 = vpop.f32.mrf.mxu0
  %v1198 = vadd.f32 %v633, %v1197
  %v1199 = vpop.f32.mrf.mxu0
  %v1200 = vadd.f32 %v629, %v1199
  %v1201 = vpop.f32.mrf.mxu0
  %v1202 = vadd.f32 %v633, %v1201
  %1203 = vmatprep.mubr.bf16.mxu0 %v525
  %1204 = vmatmul.mubr.bf16.gmra.mxu0 %v524
  %v1205 = vpop.f32.mrf.mxu0
  %v1206 = vadd.f32 %v629, %v1205
  %v1207 = vpop.f32.mrf.mxu0
  %v1208 = vadd.f32 %v633, %v1207
  %v1209 = vpop.f32.mrf.mxu0
  %v1210 = vadd.f32 %v629, %v1209
  %v1211 = vpop.f32.mrf.mxu0
  %v1212 = vadd.f32 %v633, %v1211
  %1213 = vmatprep.mubr.bf16.mxu0 %v527
  %1214 = vmatmul.mubr.bf16.gmra.mxu0 %v526
  %v1215 = vpop.f32.mrf.mxu0
  %v1216 = vadd.f32 %v629, %v1215
  %v1217 = vpop.f32.mrf.mxu0
  %v1218 = vadd.f32 %v633, %v1217
  %v1219 = vpop.f32.mrf.mxu0
  %v1220 = vadd.f32 %v629, %v1219
  %v1221 = vpop.f32.mrf.mxu0
  %v1222 = vadd.f32 %v633, %v1221
  %1223 = vmatprep.mubr.bf16.mxu0 %v529
  %1224 = vmatmul.mubr.bf16.gmra.mxu0 %v528
  %v1225 = vpop.f32.mrf.mxu0
  %v1226 = vadd.f32 %v629, %v1225
  %v1227 = vpop.f32.mrf.mxu0
  %v1228 = vadd.f32 %v633, %v1227
  %v1229 = vpop.f32.mrf.mxu0
  %v1230 = vadd.f32 %v629, %v1229
  %v1231 = vpop.f32.mrf.mxu0
  %v1232 = vadd.f32 %v633, %v1231
  %1233 = vmatprep.mubr.bf16.mxu0 %v531
  %1234 = vmatmul.mubr.bf16.gmra.mxu0 %v530
  %v1235 = vpop.f32.mrf.mxu0
  %v1236 = vadd.f32 %v629, %v1235
  %v1237 = vpop.f32.mrf.mxu0
  %v1238 = vadd.f32 %v633, %v1237
  %v1239 = vpop.f32.mrf.mxu0
  %v1240 = vadd.f32 %v629, %v1239
  %v1241 = vpop.f32.mrf.mxu0
  %v1242 = vadd.f32 %v633, %v1241
  %1243 = vmatprep.mubr.bf16.mxu0 %v533
  %1244 = vmatmul.mubr.bf16.gmra.mxu0 %v532
  %v1245 = vpop.f32.mrf.mxu0
  %v1246 = vadd.f32 %v629, %v1245
  %v1247 = vpop.f32.mrf.mxu0
  %v1248 = vadd.f32 %v633, %v1247
  %v1249 = vpop.f32.mrf.mxu0
  %v1250 = vadd.f32 %v629, %v1249
  %v1251 = vpop.f32.mrf.mxu0
  %v1252 = vadd.f32 %v633, %v1251
  %1253 = vmatprep.mubr.bf16.mxu0 %v535
  %1254 = vmatmul.mubr.bf16.gmra.mxu0 %v534
  %v1255 = vpop.f32.mrf.mxu0
  %v1256 = vadd.f32 %v629, %v1255
  %v1257 = vpop.f32.mrf.mxu0
  %v1258 = vadd.f32 %v633, %v1257
  %v1259 = vpop.f32.mrf.mxu0
  %v1260 = vadd.f32 %v629, %v1259
  %v1261 = vpop.f32.mrf.mxu0
  %v1262 = vadd.f32 %v633, %v1261
  %1263 = vmatprep.mubr.bf16.mxu0 %v537
  %1264 = vmatmul.mubr.bf16.gmra.mxu0 %v536
  %v1265 = vpop.f32.mrf.mxu0
  %v1266 = vadd.f32 %v629, %v1265
  %v1267 = vpop.f32.mrf.mxu0
  %v1268 = vadd.f32 %v633, %v1267
  %v1269 = vpop.f32.mrf.mxu0
  %v1270 = vadd.f32 %v629, %v1269
  %v1271 = vpop.f32.mrf.mxu0
  %v1272 = vadd.f32 %v633, %v1271
  %1273 = vmatprep.mubr.bf16.mxu0 %v539
  %1274 = vmatmul.mubr.bf16.gmra.mxu0 %v538
  %v1275 = vpop.f32.mrf.mxu0
  %v1276 = vadd.f32 %v629, %v1275
  %v1277 = vpop.f32.mrf.mxu0
  %v1278 = vadd.f32 %v633, %v1277
  %v1279 = vpop.f32.mrf.mxu0
  %v1280 = vadd.f32 %v629, %v1279
  %v1281 = vpop.f32.mrf.mxu0
  %v1282 = vadd.f32 %v633, %v1281
  %1283 = vmatprep.mubr.bf16.mxu0 %v541
  %1284 = vmatmul.mubr.bf16.gmra.mxu0 %v540
  %v1285 = vpop.f32.mrf.mxu0
  %v1286 = vadd.f32 %v629, %v1285
  %v1287 = vpop.f32.mrf.mxu0
  %v1288 = vadd.f32 %v633, %v1287
  %v1289 = vpop.f32.mrf.mxu0
  %v1290 = vadd.f32 %v629, %v1289
  %v1291 = vpop.f32.mrf.mxu0
  %v1292 = vadd.f32 %v633, %v1291
  %1293 = vmatprep.mubr.bf16.mxu0 %v543
  %1294 = vmatmul.mubr.bf16.gmra.mxu0 %v542
  %v1295 = vpop.f32.mrf.mxu0
  %v1296 = vadd.f32 %v629, %v1295
  %v1297 = vpop.f32.mrf.mxu0
  %v1298 = vadd.f32 %v633, %v1297
  %v1299 = vpop.f32.mrf.mxu0
  %v1300 = vadd.f32 %v629, %v1299
  %v1301 = vpop.f32.mrf.mxu0
  %v1302 = vadd.f32 %v633, %v1301
  %1303 = vmatprep.mubr.bf16.mxu0 %v545
  %1304 = vmatmul.mubr.bf16.gmra.mxu0 %v544
  %v1305 = vpop.f32.mrf.mxu0
  %v1306 = vadd.f32 %v629, %v1305
  %v1307 = vpop.f32.mrf.mxu0
  %v1308 = vadd.f32 %v633, %v1307
  %v1309 = vpop.f32.mrf.mxu0
  %v1310 = vadd.f32 %v629, %v1309
  %v1311 = vpop.f32.mrf.mxu0
  %v1312 = vadd.f32 %v633, %v1311
  %1313 = vmatprep.mubr.bf16.mxu0 %v547
  %1314 = vmatmul.mubr.bf16.gmra.mxu0 %v546
  %v1315 = vpop.f32.mrf.mxu0
  %v1316 = vadd.f32 %v629, %v1315
  %v1317 = vpop.f32.mrf.mxu0
  %v1318 = vadd.f32 %v633, %v1317
  %v1319 = vpop.f32.mrf.mxu0
  %v1320 = vadd.f32 %v629, %v1319
  %v1321 = vpop.f32.mrf.mxu0
  %v1322 = vadd.f32 %v633, %v1321
  %1323 = vmatprep.mubr.bf16.mxu0 %v549
  %1324 = vmatmul.mubr.bf16.gmra.mxu0 %v548
  %v1325 = vpop.f32.mrf.mxu0
  %v1326 = vadd.f32 %v629, %v1325
  %v1327 = vpop.f32.mrf.mxu0
  %v1328 = vadd.f32 %v633, %v1327
  %v1329 = vpop.f32.mrf.mxu0
  %v1330 = vadd.f32 %v629, %v1329
  %v1331 = vpop.f32.mrf.mxu0
  %v1332 = vadd.f32 %v633, %v1331
  %1333 = vmatprep.mubr.bf16.mxu0 %v551
  %1334 = vmatmul.mubr.bf16.gmra.mxu0 %v550
  %v1335 = vpop.f32.mrf.mxu0
  %v1336 = vadd.f32 %v629, %v1335
  %v1337 = vpop.f32.mrf.mxu0
  %v1338 = vadd.f32 %v633, %v1337
  %v1339 = vpop.f32.mrf.mxu0
  %v1340 = vadd.f32 %v629, %v1339
  %v1341 = vpop.f32.mrf.mxu0
  %v1342 = vadd.f32 %v633, %v1341
  %1343 = vdwg.mxu0
  %v1344 = vmax.f32 %v993, 0.0
  %v1345 = vmax.f32 %v995, 0.0
  %v1346 = vmax.f32 %v1186, 0.0
  %v1347 = vmax.f32 %v1188, 0.0
  %v1348 = vmax.f32 %v997, 0.0
  %v1349 = vmax.f32 %v999, 0.0
  %v1350 = vmax.f32 %v1190, 0.0
  %v1351 = vmax.f32 %v1192, 0.0
  %v1352 = vmax.f32 %v1003, 0.0
  %v1353 = vmax.f32 %v1005, 0.0
  %v1354 = vmax.f32 %v1196, 0.0
  %v1355 = vmax.f32 %v1198, 0.0
  %v1356 = vmax.f32 %v1007, 0.0
  %v1357 = vmax.f32 %v1009, 0.0
  %v1358 = vmax.f32 %v1200, 0.0
  %v1359 = vmax.f32 %v1202, 0.0
  %v1360 = vmax.f32 %v1013, 0.0
  %v1361 = vmax.f32 %v1015, 0.0
  %v1362 = vmax.f32 %v1206, 0.0
  %v1363 = vmax.f32 %v1208, 0.0
  %v1364 = vmax.f32 %v1017, 0.0
  %v1365 = vmax.f32 %v1019, 0.0
  %v1366 = vmax.f32 %v1210, 0.0
  %v1367 = vmax.f32 %v1212, 0.0
  %v1368 = vmax.f32 %v1023, 0.0
  %v1369 = vmax.f32 %v1025, 0.0
  %v1370 = vmax.f32 %v1216, 0.0
  %v1371 = vmax.f32 %v1218, 0.0
  %v1372 = vmax.f32 %v1027, 0.0
  %v1373 = vmax.f32 %v1029, 0.0
  %v1374 = vmax.f32 %v1220, 0.0
  %v1375 = vmax.f32 %v1222, 0.0
  %v1376 = vmax.f32 %v1033, 0.0
  %v1377 = vmax.f32 %v1035, 0.0
  %v1378 = vmax.f32 %v1226, 0.0
  %v1379 = vmax.f32 %v1228, 0.0
  %v1380 = vmax.f32 %v1037, 0.0
  %v1381 = vmax.f32 %v1039, 0.0
  %v1382 = vmax.f32 %v1230, 0.0
  %v1383 = vmax.f32 %v1232, 0.0
  %v1384 = vmax.f32 %v1043, 0.0
  %v1385 = vmax.f32 %v1045, 0.0
  %v1386 = vmax.f32 %v1236, 0.0
  %v1387 = vmax.f32 %v1238, 0.0
  %v1388 = vmax.f32 %v1047, 0.0
  %v1389 = vmax.f32 %v1049, 0.0
  %v1390 = vmax.f32 %v1240, 0.0
  %v1391 = vmax.f32 %v1242, 0.0
  %v1392 = vmax.f32 %v1053, 0.0
  %v1393 = vmax.f32 %v1055, 0.0
  %v1394 = vmax.f32 %v1246, 0.0
  %v1395 = vmax.f32 %v1248, 0.0
  %v1396 = vmax.f32 %v1057, 0.0
  %v1397 = vmax.f32 %v1059, 0.0
  %v1398 = vmax.f32 %v1250, 0.0
  %v1399 = vmax.f32 %v1252, 0.0
  %v1400 = vmax.f32 %v1063, 0.0
  %v1401 = vmax.f32 %v1065, 0.0
  %v1402 = vmax.f32 %v1256, 0.0
  %v1403 = vmax.f32 %v1258, 0.0
  %v1404 = vmax.f32 %v1067, 0.0
  %v1405 = vmax.f32 %v1069, 0.0
  %v1406 = vmax.f32 %v1260, 0.0
  %v1407 = vmax.f32 %v1262, 0.0
  %v1408 = vmax.f32 %v1073, 0.0
  %v1409 = vmax.f32 %v1075, 0.0
  %v1410 = vmax.f32 %v1266, 0.0
  %v1411 = vmax.f32 %v1268, 0.0
  %v1412 = vmax.f32 %v1077, 0.0
  %v1413 = vmax.f32 %v1079, 0.0
  %v1414 = vmax.f32 %v1270, 0.0
  %v1415 = vmax.f32 %v1272, 0.0
  %v1416 = vmax.f32 %v1083, 0.0
  %v1417 = vmax.f32 %v1085, 0.0
  %v1418 = vmax.f32 %v1276, 0.0
  %v1419 = vmax.f32 %v1278, 0.0
  %v1420 = vmax.f32 %v1087, 0.0
  %v1421 = vmax.f32 %v1089, 0.0
  %v1422 = vmax.f32 %v1280, 0.0
  %v1423 = vmax.f32 %v1282, 0.0
  %v1424 = vmax.f32 %v1093, 0.0
  %v1425 = vmax.f32 %v1095, 0.0
  %v1426 = vmax.f32 %v1286, 0.0
  %v1427 = vmax.f32 %v1288, 0.0
  %v1428 = vmax.f32 %v1097, 0.0
  %v1429 = vmax.f32 %v1099, 0.0
  %v1430 = vmax.f32 %v1290, 0.0
  %v1431 = vmax.f32 %v1292, 0.0
  %v1432 = vmax.f32 %v1103, 0.0
  %v1433 = vmax.f32 %v1105, 0.0
  %v1434 = vmax.f32 %v1296, 0.0
  %v1435 = vmax.f32 %v1298, 0.0
  %v1436 = vmax.f32 %v1107, 0.0
  %v1437 = vmax.f32 %v1109, 0.0
  %v1438 = vmax.f32 %v1300, 0.0
  %v1439 = vmax.f32 %v1302, 0.0
  %v1440 = vmax.f32 %v1113, 0.0
  %v1441 = vmax.f32 %v1115, 0.0
  %v1442 = vmax.f32 %v1306, 0.0
  %v1443 = vmax.f32 %v1308, 0.0
  %v1444 = vmax.f32 %v1117, 0.0
  %v1445 = vmax.f32 %v1119, 0.0
  %v1446 = vmax.f32 %v1310, 0.0
  %v1447 = vmax.f32 %v1312, 0.0
  %v1448 = vmax.f32 %v1123, 0.0
  %v1449 = vmax.f32 %v1125, 0.0
  %v1450 = vmax.f32 %v1316, 0.0
  %v1451 = vmax.f32 %v1318, 0.0
  %v1452 = vmax.f32 %v1127, 0.0
  %v1453 = vmax.f32 %v1129, 0.0
  %v1454 = vmax.f32 %v1320, 0.0
  %v1455 = vmax.f32 %v1322, 0.0
  %v1456 = vmax.f32 %v1133, 0.0
  %v1457 = vmax.f32 %v1135, 0.0
  %v1458 = vmax.f32 %v1326, 0.0
  %v1459 = vmax.f32 %v1328, 0.0
  %v1460 = vmax.f32 %v1137, 0.0
  %v1461 = vmax.f32 %v1139, 0.0
  %v1462 = vmax.f32 %v1330, 0.0
  %v1463 = vmax.f32 %v1332, 0.0
  %v1464 = vmax.f32 %v1143, 0.0
  %v1465 = vmax.f32 %v1145, 0.0
  %v1466 = vmax.f32 %v1336, 0.0
  %v1467 = vmax.f32 %v1338, 0.0
  %v1468 = vmax.f32 %v1147, 0.0
  %v1469 = vmax.f32 %v1149, 0.0
  %v1470 = vmax.f32 %v1340, 0.0
  %v1471 = vmax.f32 %v1342, 0.0
  %v1472 = vpack.c.bf16 %v1348, %v1344
  %v1473 = vpack.c.bf16 %v1349, %v1345
  %v1474 = vpack.c.bf16 %v1350, %v1346
  %v1475 = vpack.c.bf16 %v1351, %v1347
  %v1476 = vpack.c.bf16 %v1356, %v1352
  %v1477 = vpack.c.bf16 %v1357, %v1353
  %v1478 = vpack.c.bf16 %v1358, %v1354
  %v1479 = vpack.c.bf16 %v1359, %v1355
  %v1480 = vpack.c.bf16 %v1364, %v1360
  %v1481 = vpack.c.bf16 %v1365, %v1361
  %v1482 = vpack.c.bf16 %v1366, %v1362
  %v1483 = vpack.c.bf16 %v1367, %v1363
  %v1484 = vpack.c.bf16 %v1372, %v1368
  %v1485 = vpack.c.bf16 %v1373, %v1369
  %v1486 = vpack.c.bf16 %v1374, %v1370
  %v1487 = vpack.c.bf16 %v1375, %v1371
  %v1488 = vpack.c.bf16 %v1380, %v1376
  %v1489 = vpack.c.bf16 %v1381, %v1377
  %v1490 = vpack.c.bf16 %v1382, %v1378
  %v1491 = vpack.c.bf16 %v1383, %v1379
  %v1492 = vpack.c.bf16 %v1388, %v1384
  %v1493 = vpack.c.bf16 %v1389, %v1385
  %v1494 = vpack.c.bf16 %v1390, %v1386
  %v1495 = vpack.c.bf16 %v1391, %v1387
  %v1496 = vpack.c.bf16 %v1396, %v1392
  %v1497 = vpack.c.bf16 %v1397, %v1393
  %v1498 = vpack.c.bf16 %v1398, %v1394
  %v1499 = vpack.c.bf16 %v1399, %v1395
  %v1500 = vpack.c.bf16 %v1404, %v1400
  %v1501 = vpack.c.bf16 %v1405, %v1401
  %v1502 = vpack.c.bf16 %v1406, %v1402
  %v1503 = vpack.c.bf16 %v1407, %v1403
  %v1504 = vpack.c.bf16 %v1412, %v1408
  %v1505 = vpack.c.bf16 %v1413, %v1409
  %v1506 = vpack.c.bf16 %v1414, %v1410
  %v1507 = vpack.c.bf16 %v1415, %v1411
  %v1508 = vpack.c.bf16 %v1420, %v1416
  %v1509 = vpack.c.bf16 %v1421, %v1417
  %v1510 = vpack.c.bf16 %v1422, %v1418
  %v1511 = vpack.c.bf16 %v1423, %v1419
  %v1512 = vpack.c.bf16 %v1428, %v1424
  %v1513 = vpack.c.bf16 %v1429, %v1425
  %v1514 = vpack.c.bf16 %v1430, %v1426
  %v1515 = vpack.c.bf16 %v1431, %v1427
  %v1516 = vpack.c.bf16 %v1436, %v1432
  %v1517 = vpack.c.bf16 %v1437, %v1433
  %v1518 = vpack.c.bf16 %v1438, %v1434
  %v1519 = vpack.c.bf16 %v1439, %v1435
  %v1520 = vpack.c.bf16 %v1444, %v1440
  %v1521 = vpack.c.bf16 %v1445, %v1441
  %v1522 = vpack.c.bf16 %v1446, %v1442
  %v1523 = vpack.c.bf16 %v1447, %v1443
  %v1524 = vpack.c.bf16 %v1452, %v1448
  %v1525 = vpack.c.bf16 %v1453, %v1449
  %v1526 = vpack.c.bf16 %v1454, %v1450
  %v1527 = vpack.c.bf16 %v1455, %v1451
  %v1528 = vpack.c.bf16 %v1460, %v1456
  %v1529 = vpack.c.bf16 %v1461, %v1457
  %v1530 = vpack.c.bf16 %v1462, %v1458
  %v1531 = vpack.c.bf16 %v1463, %v1459
  %v1532 = vpack.c.bf16 %v1468, %v1464
  %v1533 = vpack.c.bf16 %v1469, %v1465
  %v1534 = vpack.c.bf16 %v1470, %v1466
  %v1535 = vpack.c.bf16 %v1471, %v1467
  %v1536 = vld [vmem:[%s5] sm:$0xff]
  %v1537 = vld [vmem:[%s5 + $0x8] sm:$0xff]
  %v1538 = vld [vmem:[%s5 + $0x10] sm:$0xff]
  %v1539 = vld [vmem:[%s5 + $0x18] sm:$0xf]
  %v1540 = vld [vmem:[%s5 + $0x1c] sm:$0xff]
  %v1541 = vld [vmem:[%s5 + $0x24] sm:$0xff]
  %v1542 = vld [vmem:[%s5 + $0x2c] sm:$0xff]
  %v1543 = vld [vmem:[%s5 + $0x34] sm:$0xf]
  %v1544 = vld [vmem:[%s5 + $0x38] sm:$0xff]
  %v1545 = vld [vmem:[%s5 + $0x40] sm:$0xff]
  %v1546 = vld [vmem:[%s5 + $0x48] sm:$0xff]
  %v1547 = vld [vmem:[%s5 + $0x50] sm:$0xf]
  %v1548 = vld [vmem:[%s5 + $0x54] sm:$0xff]
  %v1549 = vld [vmem:[%s5 + $0x5c] sm:$0xff]
  %v1550 = vld [vmem:[%s5 + $0x64] sm:$0xff]
  %v1551 = vld [vmem:[%s5 + $0x6c] sm:$0xf]
  %v1552 = vld [vmem:[%s5 + $0x70] sm:$0xff]
  %v1553 = vld [vmem:[%s5 + $0x78] sm:$0xff]
  %v1554 = vld [vmem:[%s5 + $0x80] sm:$0xff]
  %v1555 = vld [vmem:[%s5 + $0x88] sm:$0xf]
  %v1556 = vld [vmem:[%s5 + $0x8c] sm:$0xff]
  %v1557 = vld [vmem:[%s5 + $0x94] sm:$0xff]
  %v1558 = vld [vmem:[%s5 + $0x9c] sm:$0xff]
  %v1559 = vld [vmem:[%s5 + $0xa4] sm:$0xf]
  %v1560 = vld [vmem:[%s5 + $0xa8] sm:$0xff]
  %v1561 = vld [vmem:[%s5 + $0xb0] sm:$0xff]
  %v1562 = vld [vmem:[%s5 + $0xb8] sm:$0xff]
  %v1563 = vld [vmem:[%s5 + $0xc0] sm:$0xf]
  %v1564 = vld [vmem:[%s5 + $0xc4] sm:$0xff]
  %v1565 = vld [vmem:[%s5 + $0xcc] sm:$0xff]
  %v1566 = vld [vmem:[%s5 + $0xd4] sm:$0xff]
  %v1567 = vld [vmem:[%s5 + $0xdc] sm:$0xf]
  %v1568 = vld [vmem:[%s5 + $0xe0] sm:$0xff]
  %v1569 = vld [vmem:[%s5 + $0xe8] sm:$0xff]
  %v1570 = vld [vmem:[%s5 + $0xf0] sm:$0xff]
  %v1571 = vld [vmem:[%s5 + $0xf8] sm:$0xf]
  %v1572 = vld [vmem:[%s5 + $0xfc] sm:$0xff]
  %v1573 = vld [vmem:[%s5 + $0x104] sm:$0xff]
  %v1574 = vld [vmem:[%s5 + $0x10c] sm:$0xff]
  %v1575 = vld [vmem:[%s5 + $0x114] sm:$0xf]
  %v1576 = vld [vmem:[%s5 + $0x118] sm:$0xff]
  %v1577 = vld [vmem:[%s5 + $0x120] sm:$0xff]
  %v1578 = vld [vmem:[%s5 + $0x128] sm:$0xff]
  %v1579 = vld [vmem:[%s5 + $0x130] sm:$0xf]
  %v1580 = vld [vmem:[%s5 + $0x134] sm:$0xff]
  %v1581 = vld [vmem:[%s5 + $0x13c] sm:$0xff]
  %v1582 = vld [vmem:[%s5 + $0x144] sm:$0xff]
  %v1583 = vld [vmem:[%s5 + $0x14c] sm:$0xf]
  %v1584 = vld [vmem:[%s5 + $0x150] sm:$0xff]
  %v1585 = vld [vmem:[%s5 + $0x158] sm:$0xff]
  %v1586 = vld [vmem:[%s5 + $0x160] sm:$0xff]
  %v1587 = vld [vmem:[%s5 + $0x168] sm:$0xf]
  %v1588 = vld [vmem:[%s5 + $0x16c] sm:$0xff]
  %v1589 = vld [vmem:[%s5 + $0x174] sm:$0xff]
  %v1590 = vld [vmem:[%s5 + $0x17c] sm:$0xff]
  %v1591 = vld [vmem:[%s5 + $0x184] sm:$0xf]
  %v1592 = vld [vmem:[%s5 + $0x188] sm:$0xff]
  %v1593 = vld [vmem:[%s5 + $0x190] sm:$0xff]
  %v1594 = vld [vmem:[%s5 + $0x198] sm:$0xff]
  %v1595 = vld [vmem:[%s5 + $0x1a0] sm:$0xf]
  %v1596 = vld [vmem:[%s5 + $0x1a4] sm:$0xff]
  %v1597 = vld [vmem:[%s5 + $0x1ac] sm:$0xff]
  %v1598 = vld [vmem:[%s5 + $0x1b4] sm:$0xff]
  %v1599 = vld [vmem:[%s5 + $0x1bc] sm:$0xf]
  %v1600 = vld [vmem:[%s5 + $0x1c0] sm:$0xff]
  %v1601 = vld [vmem:[%s5 + $0x1c8] sm:$0xff]
  %v1602 = vld [vmem:[%s5 + $0x1d0] sm:$0xff]
  %v1603 = vld [vmem:[%s5 + $0x1d8] sm:$0xf]
  %v1604 = vld [vmem:[%s5 + $0x1dc] sm:$0xff]
  %v1605 = vld [vmem:[%s5 + $0x1e4] sm:$0xff]
  %v1606 = vld [vmem:[%s5 + $0x1ec] sm:$0xff]
  %v1607 = vld [vmem:[%s5 + $0x1f4] sm:$0xf]
  %v1608 = vld [vmem:[%s5 + $0x1f8] sm:$0xff]
  %v1609 = vld [vmem:[%s5 + $0x200] sm:$0xff]
  %v1610 = vld [vmem:[%s5 + $0x208] sm:$0xff]
  %v1611 = vld [vmem:[%s5 + $0x210] sm:$0xf]
  %v1612 = vld [vmem:[%s5 + $0x214] sm:$0xff]
  %v1613 = vld [vmem:[%s5 + $0x21c] sm:$0xff]
  %v1614 = vld [vmem:[%s5 + $0x224] sm:$0xff]
  %v1615 = vld [vmem:[%s5 + $0x22c] sm:$0xf]
  %v1616 = vld [vmem:[%s5 + $0x230] sm:$0xff]
  %v1617 = vld [vmem:[%s5 + $0x238] sm:$0xff]
  %v1618 = vld [vmem:[%s5 + $0x240] sm:$0xff]
  %v1619 = vld [vmem:[%s5 + $0x248] sm:$0xf]
  %v1620 = vld [vmem:[%s5 + $0x24c] sm:$0xff]
  %v1621 = vld [vmem:[%s5 + $0x254] sm:$0xff]
  %v1622 = vld [vmem:[%s5 + $0x25c] sm:$0xff]
  %v1623 = vld [vmem:[%s5 + $0x264] sm:$0xf]
  %v1624 = vld [vmem:[%s5 + $0x268] sm:$0xff]
  %v1625 = vld [vmem:[%s5 + $0x270] sm:$0xff]
  %v1626 = vld [vmem:[%s5 + $0x278] sm:$0xff]
  %v1627 = vld [vmem:[%s5 + $0x280] sm:$0xf]
  %v1628 = vld [vmem:[%s5 + $0x284] sm:$0xff]
  %v1629 = vld [vmem:[%s5 + $0x28c] sm:$0xff]
  %v1630 = vld [vmem:[%s5 + $0x294] sm:$0xff]
  %v1631 = vld [vmem:[%s5 + $0x29c] sm:$0xf]
  %v1632 = vld [vmem:[%s5 + $0x2a0] sm:$0xff]
  %v1633 = vld [vmem:[%s5 + $0x2a8] sm:$0xff]
  %v1634 = vld [vmem:[%s5 + $0x2b0] sm:$0xff]
  %v1635 = vld [vmem:[%s5 + $0x2b8] sm:$0xf]
  %v1636 = vld [vmem:[%s5 + $0x2bc] sm:$0xff]
  %v1637 = vld [vmem:[%s5 + $0x2c4] sm:$0xff]
  %v1638 = vld [vmem:[%s5 + $0x2cc] sm:$0xff]
  %v1639 = vld [vmem:[%s5 + $0x2d4] sm:$0xf]
  %v1640 = vld [vmem:[%s5 + $0x2d8] sm:$0xff]
  %v1641 = vld [vmem:[%s5 + $0x2e0] sm:$0xff]
  %v1642 = vld [vmem:[%s5 + $0x2e8] sm:$0xff]
  %v1643 = vld [vmem:[%s5 + $0x2f0] sm:$0xf]
  %v1644 = vld [vmem:[%s5 + $0x2f4] sm:$0xff]
  %v1645 = vld [vmem:[%s5 + $0x2fc] sm:$0xff]
  %v1646 = vld [vmem:[%s5 + $0x304] sm:$0xff]
  %v1647 = vld [vmem:[%s5 + $0x30c] sm:$0xf]
  %v1648 = vld [vmem:[%s5 + $0x310] sm:$0xff]
  %v1649 = vld [vmem:[%s5 + $0x318] sm:$0xff]
  %v1650 = vld [vmem:[%s5 + $0x320] sm:$0xff]
  %v1651 = vld [vmem:[%s5 + $0x328] sm:$0xf]
  %v1652 = vld [vmem:[%s5 + $0x32c] sm:$0xff]
  %v1653 = vld [vmem:[%s5 + $0x334] sm:$0xff]
  %v1654 = vld [vmem:[%s5 + $0x33c] sm:$0xff]
  %v1655 = vld [vmem:[%s5 + $0x344] sm:$0xf]
  %v1656 = vld [vmem:[%s5 + $0x348] sm:$0xff]
  %v1657 = vld [vmem:[%s5 + $0x350] sm:$0xff]
  %v1658 = vld [vmem:[%s5 + $0x358] sm:$0xff]
  %v1659 = vld [vmem:[%s5 + $0x360] sm:$0xf]
  %v1660 = vld [vmem:[%s5 + $0x364] sm:$0xff]
  %v1661 = vld [vmem:[%s5 + $0x36c] sm:$0xff]
  %v1662 = vld [vmem:[%s5 + $0x374] sm:$0xff]
  %v1663 = vld [vmem:[%s5 + $0x37c] sm:$0xf]
  %v1664 = vld [vmem:[%s5 + $0x380] sm:$0xff]
  %v1665 = vld [vmem:[%s5 + $0x388] sm:$0xff]
  %v1666 = vld [vmem:[%s5 + $0x390] sm:$0xff]
  %v1667 = vld [vmem:[%s5 + $0x398] sm:$0xf]
  %v1668 = vld [vmem:[%s5 + $0x39c] sm:$0xff]
  %v1669 = vld [vmem:[%s5 + $0x3a4] sm:$0xff]
  %v1670 = vld [vmem:[%s5 + $0x3ac] sm:$0xff]
  %v1671 = vld [vmem:[%s5 + $0x3b4] sm:$0xf]
  %v1672 = vld [vmem:[%s5 + $0x3b8] sm:$0xff]
  %v1673 = vld [vmem:[%s5 + $0x3c0] sm:$0xff]
  %v1674 = vld [vmem:[%s5 + $0x3c8] sm:$0xff]
  %v1675 = vld [vmem:[%s5 + $0x3d0] sm:$0xf]
  %v1676 = vld [vmem:[%s5 + $0x3d4] sm:$0xff]
  %v1677 = vld [vmem:[%s5 + $0x3dc] sm:$0xff]
  %v1678 = vld [vmem:[%s5 + $0x3e4] sm:$0xff]
  %v1679 = vld [vmem:[%s5 + $0x3ec] sm:$0xf]
  %v1680 = vld [vmem:[%s5 + $0x3f0] sm:$0xff]
  %v1681 = vld [vmem:[%s5 + $0x3f8] sm:$0xff]
  %v1682 = vld [vmem:[%s5 + $0x400] sm:$0xff]
  %v1683 = vld [vmem:[%s5 + $0x408] sm:$0xf]
  %v1684 = vld [vmem:[%s5 + $0x40c] sm:$0xff]
  %v1685 = vld [vmem:[%s5 + $0x414] sm:$0xff]
  %v1686 = vld [vmem:[%s5 + $0x41c] sm:$0xff]
  %v1687 = vld [vmem:[%s5 + $0x424] sm:$0xf]
  %v1688 = vld [vmem:[%s5 + $0x428] sm:$0xff]
  %v1689 = vld [vmem:[%s5 + $0x430] sm:$0xff]
  %v1690 = vld [vmem:[%s5 + $0x438] sm:$0xff]
  %v1691 = vld [vmem:[%s5 + $0x440] sm:$0xf]
  %v1692 = vld [vmem:[%s5 + $0x444] sm:$0xff]
  %v1693 = vld [vmem:[%s5 + $0x44c] sm:$0xff]
  %v1694 = vld [vmem:[%s5 + $0x454] sm:$0xff]
  %v1695 = vld [vmem:[%s5 + $0x45c] sm:$0xf]
  %v1696 = vld [vmem:[%s5 + $0x460] sm:$0xff]
  %v1697 = vld [vmem:[%s5 + $0x468] sm:$0xff]
  %v1698 = vld [vmem:[%s5 + $0x470] sm:$0xff]
  %v1699 = vld [vmem:[%s5 + $0x478] sm:$0xf]
  %v1700 = vld [vmem:[%s5 + $0x47c] sm:$0xff]
  %v1701 = vld [vmem:[%s5 + $0x484] sm:$0xff]
  %v1702 = vld [vmem:[%s5 + $0x48c] sm:$0xff]
  %v1703 = vld [vmem:[%s5 + $0x494] sm:$0xf]
  %v1704 = vld [vmem:[%s5 + $0x498] sm:$0xff]
  %v1705 = vld [vmem:[%s5 + $0x4a0] sm:$0xff]
  %v1706 = vld [vmem:[%s5 + $0x4a8] sm:$0xff]
  %v1707 = vld [vmem:[%s5 + $0x4b0] sm:$0xf]
  %v1708 = vld [vmem:[%s5 + $0x4b4] sm:$0xff]
  %v1709 = vld [vmem:[%s5 + $0x4bc] sm:$0xff]
  %v1710 = vld [vmem:[%s5 + $0x4c4] sm:$0xff]
  %v1711 = vld [vmem:[%s5 + $0x4cc] sm:$0xf]
  %v1712 = vld [vmem:[%s5 + $0x4d0] sm:$0xff]
  %v1713 = vld [vmem:[%s5 + $0x4d8] sm:$0xff]
  %v1714 = vld [vmem:[%s5 + $0x4e0] sm:$0xff]
  %v1715 = vld [vmem:[%s5 + $0x4e8] sm:$0xf]
  %v1716 = vld [vmem:[%s5 + $0x4ec] sm:$0xff]
  %v1717 = vld [vmem:[%s5 + $0x4f4] sm:$0xff]
  %v1718 = vld [vmem:[%s5 + $0x4fc] sm:$0xff]
  %v1719 = vld [vmem:[%s5 + $0x504] sm:$0xf]
  %v1720 = vld [vmem:[%s5 + $0x508] sm:$0xff]
  %v1721 = vld [vmem:[%s5 + $0x510] sm:$0xff]
  %v1722 = vld [vmem:[%s5 + $0x518] sm:$0xff]
  %v1723 = vld [vmem:[%s5 + $0x520] sm:$0xf]
  %v1724 = vld [vmem:[%s5 + $0x524] sm:$0xff]
  %v1725 = vld [vmem:[%s5 + $0x52c] sm:$0xff]
  %v1726 = vld [vmem:[%s5 + $0x534] sm:$0xff]
  %v1727 = vld [vmem:[%s5 + $0x53c] sm:$0xf]
  %v1728 = vld [vmem:[%s5 + $0x540] sm:$0xff]
  %v1729 = vld [vmem:[%s5 + $0x548] sm:$0xff]
  %v1730 = vld [vmem:[%s5 + $0x550] sm:$0xff]
  %v1731 = vld [vmem:[%s5 + $0x558] sm:$0xf]
  %v1732 = vld [vmem:[%s5 + $0x55c] sm:$0xff]
  %v1733 = vld [vmem:[%s5 + $0x564] sm:$0xff]
  %v1734 = vld [vmem:[%s5 + $0x56c] sm:$0xff]
  %v1735 = vld [vmem:[%s5 + $0x574] sm:$0xf]
  %v1736 = vld [vmem:[%s5 + $0x578] sm:$0xff]
  %v1737 = vld [vmem:[%s5 + $0x580] sm:$0xff]
  %v1738 = vld [vmem:[%s5 + $0x588] sm:$0xff]
  %v1739 = vld [vmem:[%s5 + $0x590] sm:$0xf]
  %v1740 = vld [vmem:[%s5 + $0x594] sm:$0xff]
  %v1741 = vld [vmem:[%s5 + $0x59c] sm:$0xff]
  %v1742 = vld [vmem:[%s5 + $0x5a4] sm:$0xff]
  %v1743 = vld [vmem:[%s5 + $0x5ac] sm:$0xf]
  %v1744 = vld [vmem:[%s5 + $0x5b0] sm:$0xff]
  %v1745 = vld [vmem:[%s5 + $0x5b8] sm:$0xff]
  %v1746 = vld [vmem:[%s5 + $0x5c0] sm:$0xff]
  %v1747 = vld [vmem:[%s5 + $0x5c8] sm:$0xf]
  %v1748 = vld [vmem:[%s5 + $0x5cc] sm:$0xff]
  %v1749 = vld [vmem:[%s5 + $0x5d4] sm:$0xff]
  %v1750 = vld [vmem:[%s5 + $0x5dc] sm:$0xff]
  %v1751 = vld [vmem:[%s5 + $0x5e4] sm:$0xf]
  %v1752 = vld [vmem:[%s5 + $0x5e8] sm:$0xff]
  %v1753 = vld [vmem:[%s5 + $0x5f0] sm:$0xff]
  %v1754 = vld [vmem:[%s5 + $0x5f8] sm:$0xff]
  %v1755 = vld [vmem:[%s5 + $0x600] sm:$0xf]
  %v1756 = vld [vmem:[%s5 + $0x604] sm:$0xff]
  %v1757 = vld [vmem:[%s5 + $0x60c] sm:$0xff]
  %v1758 = vld [vmem:[%s5 + $0x614] sm:$0xff]
  %v1759 = vld [vmem:[%s5 + $0x61c] sm:$0xf]
  %v1760 = vld [vmem:[%s5 + $0x620] sm:$0xff]
  %v1761 = vld [vmem:[%s5 + $0x628] sm:$0xff]
  %v1762 = vld [vmem:[%s5 + $0x630] sm:$0xff]
  %v1763 = vld [vmem:[%s5 + $0x638] sm:$0xf]
  %v1764 = vld [vmem:[%s5 + $0x63c] sm:$0xff]
  %v1765 = vld [vmem:[%s5 + $0x644] sm:$0xff]
  %v1766 = vld [vmem:[%s5 + $0x64c] sm:$0xff]
  %v1767 = vld [vmem:[%s5 + $0x654] sm:$0xf]
  %v1768 = vld [vmem:[%s5 + $0x658] sm:$0xff]
  %v1769 = vld [vmem:[%s5 + $0x660] sm:$0xff]
  %v1770 = vld [vmem:[%s5 + $0x668] sm:$0xff]
  %v1771 = vld [vmem:[%s5 + $0x670] sm:$0xf]
  %v1772 = vld [vmem:[%s5 + $0x674] sm:$0xff]
  %v1773 = vld [vmem:[%s5 + $0x67c] sm:$0xff]
  %v1774 = vld [vmem:[%s5 + $0x684] sm:$0xff]
  %v1775 = vld [vmem:[%s5 + $0x68c] sm:$0xf]
  %v1776 = vld [vmem:[%s5 + $0x690] sm:$0xff]
  %v1777 = vld [vmem:[%s5 + $0x698] sm:$0xff]
  %v1778 = vld [vmem:[%s5 + $0x6a0] sm:$0xff]
  %v1779 = vld [vmem:[%s5 + $0x6a8] sm:$0xf]
  %v1780 = vld [vmem:[%s5 + $0x6ac] sm:$0xff]
  %v1781 = vld [vmem:[%s5 + $0x6b4] sm:$0xff]
  %v1782 = vld [vmem:[%s5 + $0x6bc] sm:$0xff]
  %v1783 = vld [vmem:[%s5 + $0x6c4] sm:$0xf]
  %v1784 = vld [vmem:[%s5 + $0x6c8] sm:$0xff]
  %v1785 = vld [vmem:[%s5 + $0x6d0] sm:$0xff]
  %v1786 = vld [vmem:[%s5 + $0x6d8] sm:$0xff]
  %v1787 = vld [vmem:[%s5 + $0x6e0] sm:$0xf]
  %v1788 = vld [vmem:[%s5 + $0x6e4] sm:$0xff]
  %v1789 = vld [vmem:[%s5 + $0x6ec] sm:$0xff]
  %v1790 = vld [vmem:[%s5 + $0x6f4] sm:$0xff]
  %v1791 = vld [vmem:[%s5 + $0x6fc] sm:$0xf]
  %v1792 = vld [vmem:[%s6] sm:$0xff]
  %v1794 = vlaneseq
  %v1795 = vshrl.u32 %v1794, 7
  %v1796 = vsub.s32 0, %v1795
  %v1797 = vrot.slane %v1792, %v1796
  %v1798 = vlaneseq
  %v1799 = vshrl.u32 %v1798, 7
  %v1800 = vsub.s32 1, %v1799
  %v1801 = vrot.slane %v1792, %v1800
  %v1802 = vlaneseq
  %v1803 = vshrl.u32 %v1802, 7
  %v1804 = vsub.s32 2, %v1803
  %v1805 = vrot.slane %v1792, %v1804
  %v1806 = vlaneseq
  %v1807 = vshrl.u32 %v1806, 7
  %v1808 = vsub.s32 3, %v1807
  %v1809 = vrot.slane %v1792, %v1808
  %v1810 = vlaneseq
  %v1811 = vshrl.u32 %v1810, 7
  %v1812 = vsub.s32 4, %v1811
  %v1813 = vrot.slane %v1792, %v1812
  %v1814 = vlaneseq
  %v1815 = vshrl.u32 %v1814, 7
  %v1816 = vsub.s32 5, %v1815
  %v1817 = vrot.slane %v1792, %v1816
  %v1818 = vlaneseq
  %v1819 = vshrl.u32 %v1818, 7
  %v1820 = vsub.s32 6, %v1819
  %v1821 = vrot.slane %v1792, %v1820
  %v2085 = vunpack.c.l.b16 %v1536
  %v2086 = vunpack.c.h.b16 %v1536
  %v2087 = vunpack.c.l.b16 %v1537
  %v2088 = vunpack.c.h.b16 %v1537
  %v2089 = vunpack.c.l.b16 %v1538
  %v2090 = vunpack.c.h.b16 %v1538
  %v2091 = vunpack.c.l.b16 %v1539
  %v2092 = vunpack.c.l.b16 %v1540
  %v2093 = vunpack.c.h.b16 %v1540
  %v2094 = vunpack.c.l.b16 %v1541
  %v2095 = vunpack.c.h.b16 %v1541
  %v2096 = vunpack.c.l.b16 %v1542
  %v2097 = vunpack.c.h.b16 %v1542
  %v2098 = vunpack.c.l.b16 %v1543
  %v2099 = vunpack.c.l.b16 %v1544
  %v2100 = vunpack.c.h.b16 %v1544
  %v2101 = vunpack.c.l.b16 %v1545
  %v2102 = vunpack.c.h.b16 %v1545
  %v2103 = vunpack.c.l.b16 %v1546
  %v2104 = vunpack.c.h.b16 %v1546
  %v2105 = vunpack.c.l.b16 %v1547
  %v2106 = vunpack.c.l.b16 %v1548
  %v2107 = vunpack.c.h.b16 %v1548
  %v2108 = vunpack.c.l.b16 %v1549
  %v2109 = vunpack.c.h.b16 %v1549
  %v2110 = vunpack.c.l.b16 %v1550
  %v2111 = vunpack.c.h.b16 %v1550
  %v2112 = vunpack.c.l.b16 %v1551
  %v2113 = vunpack.c.l.b16 %v1552
  %v2114 = vunpack.c.h.b16 %v1552
  %v2115 = vunpack.c.l.b16 %v1553
  %v2116 = vunpack.c.h.b16 %v1553
  %v2117 = vunpack.c.l.b16 %v1554
  %v2118 = vunpack.c.h.b16 %v1554
  %v2119 = vunpack.c.l.b16 %v1555
  %v2120 = vunpack.c.l.b16 %v1556
  %v2121 = vunpack.c.h.b16 %v1556
  %v2122 = vunpack.c.l.b16 %v1557
  %v2123 = vunpack.c.h.b16 %v1557
  %v2124 = vunpack.c.l.b16 %v1558
  %v2125 = vunpack.c.h.b16 %v1558
  %v2126 = vunpack.c.l.b16 %v1559
  %v2127 = vunpack.c.l.b16 %v1560
  %v2128 = vunpack.c.h.b16 %v1560
  %v2129 = vunpack.c.l.b16 %v1561
  %v2130 = vunpack.c.h.b16 %v1561
  %v2131 = vunpack.c.l.b16 %v1562
  %v2132 = vunpack.c.h.b16 %v1562
  %v2133 = vunpack.c.l.b16 %v1563
  %v2134 = vunpack.c.l.b16 %v1564
  %v2135 = vunpack.c.h.b16 %v1564
  %v2136 = vunpack.c.l.b16 %v1565
  %v2137 = vunpack.c.h.b16 %v1565
  %v2138 = vunpack.c.l.b16 %v1566
  %v2139 = vunpack.c.h.b16 %v1566
  %v2140 = vunpack.c.l.b16 %v1567
  %v2141 = vunpack.c.l.b16 %v1568
  %v2142 = vunpack.c.h.b16 %v1568
  %v2143 = vunpack.c.l.b16 %v1569
  %v2144 = vunpack.c.h.b16 %v1569
  %v2145 = vunpack.c.l.b16 %v1570
  %v2146 = vunpack.c.h.b16 %v1570
  %v2147 = vunpack.c.l.b16 %v1571
  %v2148 = vunpack.c.l.b16 %v1572
  %v2149 = vunpack.c.h.b16 %v1572
  %v2150 = vunpack.c.l.b16 %v1573
  %v2151 = vunpack.c.h.b16 %v1573
  %v2152 = vunpack.c.l.b16 %v1574
  %v2153 = vunpack.c.h.b16 %v1574
  %v2154 = vunpack.c.l.b16 %v1575
  %v2155 = vunpack.c.l.b16 %v1576
  %v2156 = vunpack.c.h.b16 %v1576
  %v2157 = vunpack.c.l.b16 %v1577
  %v2158 = vunpack.c.h.b16 %v1577
  %v2159 = vunpack.c.l.b16 %v1578
  %v2160 = vunpack.c.h.b16 %v1578
  %v2161 = vunpack.c.l.b16 %v1579
  %v2162 = vunpack.c.l.b16 %v1580
  %v2163 = vunpack.c.h.b16 %v1580
  %v2164 = vunpack.c.l.b16 %v1581
  %v2165 = vunpack.c.h.b16 %v1581
  %v2166 = vunpack.c.l.b16 %v1582
  %v2167 = vunpack.c.h.b16 %v1582
  %v2168 = vunpack.c.l.b16 %v1583
  %v2169 = vunpack.c.l.b16 %v1584
  %v2170 = vunpack.c.h.b16 %v1584
  %v2171 = vunpack.c.l.b16 %v1585
  %v2172 = vunpack.c.h.b16 %v1585
  %v2173 = vunpack.c.l.b16 %v1586
  %v2174 = vunpack.c.h.b16 %v1586
  %v2175 = vunpack.c.l.b16 %v1587
  %v2176 = vunpack.c.l.b16 %v1588
  %v2177 = vunpack.c.h.b16 %v1588
  %v2178 = vunpack.c.l.b16 %v1589
  %v2179 = vunpack.c.h.b16 %v1589
  %v2180 = vunpack.c.l.b16 %v1590
  %v2181 = vunpack.c.h.b16 %v1590
  %v2182 = vunpack.c.l.b16 %v1591
  %v2183 = vunpack.c.l.b16 %v1592
  %v2184 = vunpack.c.h.b16 %v1592
  %v2185 = vunpack.c.l.b16 %v1593
  %v2186 = vunpack.c.h.b16 %v1593
  %v2187 = vunpack.c.l.b16 %v1594
  %v2188 = vunpack.c.h.b16 %v1594
  %v2189 = vunpack.c.l.b16 %v1595
  %v2190 = vunpack.c.l.b16 %v1596
  %v2191 = vunpack.c.h.b16 %v1596
  %v2192 = vunpack.c.l.b16 %v1597
  %v2193 = vunpack.c.h.b16 %v1597
  %v2194 = vunpack.c.l.b16 %v1598
  %v2195 = vunpack.c.h.b16 %v1598
  %v2196 = vunpack.c.l.b16 %v1599
  %v2197 = vunpack.c.l.b16 %v1600
  %v2198 = vunpack.c.h.b16 %v1600
  %v2199 = vunpack.c.l.b16 %v1601
  %v2200 = vunpack.c.h.b16 %v1601
  %v2201 = vunpack.c.l.b16 %v1602
  %v2202 = vunpack.c.h.b16 %v1602
  %v2203 = vunpack.c.l.b16 %v1603
  %v2204 = vunpack.c.l.b16 %v1604
  %v2205 = vunpack.c.h.b16 %v1604
  %v2206 = vunpack.c.l.b16 %v1605
  %v2207 = vunpack.c.h.b16 %v1605
  %v2208 = vunpack.c.l.b16 %v1606
  %v2209 = vunpack.c.h.b16 %v1606
  %v2210 = vunpack.c.l.b16 %v1607
  %v2211 = vunpack.c.l.b16 %v1608
  %v2212 = vunpack.c.h.b16 %v1608
  %v2213 = vunpack.c.l.b16 %v1609
  %v2214 = vunpack.c.h.b16 %v1609
  %v2215 = vunpack.c.l.b16 %v1610
  %v2216 = vunpack.c.h.b16 %v1610
  %v2217 = vunpack.c.l.b16 %v1611
  %v2218 = vunpack.c.l.b16 %v1612
  %v2219 = vunpack.c.h.b16 %v1612
  %v2220 = vunpack.c.l.b16 %v1613
  %v2221 = vunpack.c.h.b16 %v1613
  %v2222 = vunpack.c.l.b16 %v1614
  %v2223 = vunpack.c.h.b16 %v1614
  %v2224 = vunpack.c.l.b16 %v1615
  %v2225 = vunpack.c.l.b16 %v1616
  %v2226 = vunpack.c.h.b16 %v1616
  %v2227 = vunpack.c.l.b16 %v1617
  %v2228 = vunpack.c.h.b16 %v1617
  %v2229 = vunpack.c.l.b16 %v1618
  %v2230 = vunpack.c.h.b16 %v1618
  %v2231 = vunpack.c.l.b16 %v1619
  %v2232 = vunpack.c.l.b16 %v1620
  %v2233 = vunpack.c.h.b16 %v1620
  %v2234 = vunpack.c.l.b16 %v1621
  %v2235 = vunpack.c.h.b16 %v1621
  %v2236 = vunpack.c.l.b16 %v1622
  %v2237 = vunpack.c.h.b16 %v1622
  %v2238 = vunpack.c.l.b16 %v1623
  %v2239 = vunpack.c.l.b16 %v1624
  %v2240 = vunpack.c.h.b16 %v1624
  %v2241 = vunpack.c.l.b16 %v1625
  %v2242 = vunpack.c.h.b16 %v1625
  %v2243 = vunpack.c.l.b16 %v1626
  %v2244 = vunpack.c.h.b16 %v1626
  %v2245 = vunpack.c.l.b16 %v1627
  %v2246 = vunpack.c.l.b16 %v1628
  %v2247 = vunpack.c.h.b16 %v1628
  %v2248 = vunpack.c.l.b16 %v1629
  %v2249 = vunpack.c.h.b16 %v1629
  %v2250 = vunpack.c.l.b16 %v1630
  %v2251 = vunpack.c.h.b16 %v1630
  %v2252 = vunpack.c.l.b16 %v1631
  %v2253 = vunpack.c.l.b16 %v1632
  %v2254 = vunpack.c.h.b16 %v1632
  %v2255 = vunpack.c.l.b16 %v1633
  %v2256 = vunpack.c.h.b16 %v1633
  %v2257 = vunpack.c.l.b16 %v1634
  %v2258 = vunpack.c.h.b16 %v1634
  %v2259 = vunpack.c.l.b16 %v1635
  %v2260 = vunpack.c.l.b16 %v1636
  %v2261 = vunpack.c.h.b16 %v1636
  %v2262 = vunpack.c.l.b16 %v1637
  %v2263 = vunpack.c.h.b16 %v1637
  %v2264 = vunpack.c.l.b16 %v1638
  %v2265 = vunpack.c.h.b16 %v1638
  %v2266 = vunpack.c.l.b16 %v1639
  %v2267 = vunpack.c.l.b16 %v1640
  %v2268 = vunpack.c.h.b16 %v1640
  %v2269 = vunpack.c.l.b16 %v1641
  %v2270 = vunpack.c.h.b16 %v1641
  %v2271 = vunpack.c.l.b16 %v1642
  %v2272 = vunpack.c.h.b16 %v1642
  %v2273 = vunpack.c.l.b16 %v1643
  %v2274 = vunpack.c.l.b16 %v1644
  %v2275 = vunpack.c.h.b16 %v1644
  %v2276 = vunpack.c.l.b16 %v1645
  %v2277 = vunpack.c.h.b16 %v1645
  %v2278 = vunpack.c.l.b16 %v1646
  %v2279 = vunpack.c.h.b16 %v1646
  %v2280 = vunpack.c.l.b16 %v1647
  %v2281 = vunpack.c.l.b16 %v1648
  %v2282 = vunpack.c.h.b16 %v1648
  %v2283 = vunpack.c.l.b16 %v1649
  %v2284 = vunpack.c.h.b16 %v1649
  %v2285 = vunpack.c.l.b16 %v1650
  %v2286 = vunpack.c.h.b16 %v1650
  %v2287 = vunpack.c.l.b16 %v1651
  %v2288 = vunpack.c.l.b16 %v1652
  %v2289 = vunpack.c.h.b16 %v1652
  %v2290 = vunpack.c.l.b16 %v1653
  %v2291 = vunpack.c.h.b16 %v1653
  %v2292 = vunpack.c.l.b16 %v1654
  %v2293 = vunpack.c.h.b16 %v1654
  %v2294 = vunpack.c.l.b16 %v1655
  %v2295 = vunpack.c.l.b16 %v1656
  %v2296 = vunpack.c.h.b16 %v1656
  %v2297 = vunpack.c.l.b16 %v1657
  %v2298 = vunpack.c.h.b16 %v1657
  %v2299 = vunpack.c.l.b16 %v1658
  %v2300 = vunpack.c.h.b16 %v1658
  %v2301 = vunpack.c.l.b16 %v1659
  %v2302 = vunpack.c.l.b16 %v1660
  %v2303 = vunpack.c.h.b16 %v1660
  %v2304 = vunpack.c.l.b16 %v1661
  %v2305 = vunpack.c.h.b16 %v1661
  %v2306 = vunpack.c.l.b16 %v1662
  %v2307 = vunpack.c.h.b16 %v1662
  %v2308 = vunpack.c.l.b16 %v1663
  %v2309 = vunpack.c.l.b16 %v1664
  %v2310 = vunpack.c.h.b16 %v1664
  %v2311 = vunpack.c.l.b16 %v1665
  %v2312 = vunpack.c.h.b16 %v1665
  %v2313 = vunpack.c.l.b16 %v1666
  %v2314 = vunpack.c.h.b16 %v1666
  %v2315 = vunpack.c.l.b16 %v1667
  %v2316 = vunpack.c.l.b16 %v1668
  %v2317 = vunpack.c.h.b16 %v1668
  %v2318 = vunpack.c.l.b16 %v1669
  %v2319 = vunpack.c.h.b16 %v1669
  %v2320 = vunpack.c.l.b16 %v1670
  %v2321 = vunpack.c.h.b16 %v1670
  %v2322 = vunpack.c.l.b16 %v1671
  %v2323 = vunpack.c.l.b16 %v1672
  %v2324 = vunpack.c.h.b16 %v1672
  %v2325 = vunpack.c.l.b16 %v1673
  %v2326 = vunpack.c.h.b16 %v1673
  %v2327 = vunpack.c.l.b16 %v1674
  %v2328 = vunpack.c.h.b16 %v1674
  %v2329 = vunpack.c.l.b16 %v1675
  %v2330 = vunpack.c.l.b16 %v1676
  %v2331 = vunpack.c.h.b16 %v1676
  %v2332 = vunpack.c.l.b16 %v1677
  %v2333 = vunpack.c.h.b16 %v1677
  %v2334 = vunpack.c.l.b16 %v1678
  %v2335 = vunpack.c.h.b16 %v1678
  %v2336 = vunpack.c.l.b16 %v1679
  %v2337 = vunpack.c.l.b16 %v1680
  %v2338 = vunpack.c.h.b16 %v1680
  %v2339 = vunpack.c.l.b16 %v1681
  %v2340 = vunpack.c.h.b16 %v1681
  %v2341 = vunpack.c.l.b16 %v1682
  %v2342 = vunpack.c.h.b16 %v1682
  %v2343 = vunpack.c.l.b16 %v1683
  %v2344 = vunpack.c.l.b16 %v1684
  %v2345 = vunpack.c.h.b16 %v1684
  %v2346 = vunpack.c.l.b16 %v1685
  %v2347 = vunpack.c.h.b16 %v1685
  %v2348 = vunpack.c.l.b16 %v1686
  %v2349 = vunpack.c.h.b16 %v1686
  %v2350 = vunpack.c.l.b16 %v1687
  %v2351 = vunpack.c.l.b16 %v1688
  %v2352 = vunpack.c.h.b16 %v1688
  %v2353 = vunpack.c.l.b16 %v1689
  %v2354 = vunpack.c.h.b16 %v1689
  %v2355 = vunpack.c.l.b16 %v1690
  %v2356 = vunpack.c.h.b16 %v1690
  %v2357 = vunpack.c.l.b16 %v1691
  %v2358 = vunpack.c.l.b16 %v1692
  %v2359 = vunpack.c.h.b16 %v1692
  %v2360 = vunpack.c.l.b16 %v1693
  %v2361 = vunpack.c.h.b16 %v1693
  %v2362 = vunpack.c.l.b16 %v1694
  %v2363 = vunpack.c.h.b16 %v1694
  %v2364 = vunpack.c.l.b16 %v1695
  %v2365 = vunpack.c.l.b16 %v1696
  %v2366 = vunpack.c.h.b16 %v1696
  %v2367 = vunpack.c.l.b16 %v1697
  %v2368 = vunpack.c.h.b16 %v1697
  %v2369 = vunpack.c.l.b16 %v1698
  %v2370 = vunpack.c.h.b16 %v1698
  %v2371 = vunpack.c.l.b16 %v1699
  %v2372 = vunpack.c.l.b16 %v1700
  %v2373 = vunpack.c.h.b16 %v1700
  %v2374 = vunpack.c.l.b16 %v1701
  %v2375 = vunpack.c.h.b16 %v1701
  %v2376 = vunpack.c.l.b16 %v1702
  %v2377 = vunpack.c.h.b16 %v1702
  %v2378 = vunpack.c.l.b16 %v1703
  %v2379 = vunpack.c.l.b16 %v1704
  %v2380 = vunpack.c.h.b16 %v1704
  %v2381 = vunpack.c.l.b16 %v1705
  %v2382 = vunpack.c.h.b16 %v1705
  %v2383 = vunpack.c.l.b16 %v1706
  %v2384 = vunpack.c.h.b16 %v1706
  %v2385 = vunpack.c.l.b16 %v1707
  %v2386 = vunpack.c.l.b16 %v1708
  %v2387 = vunpack.c.h.b16 %v1708
  %v2388 = vunpack.c.l.b16 %v1709
  %v2389 = vunpack.c.h.b16 %v1709
  %v2390 = vunpack.c.l.b16 %v1710
  %v2391 = vunpack.c.h.b16 %v1710
  %v2392 = vunpack.c.l.b16 %v1711
  %v2393 = vunpack.c.l.b16 %v1712
  %v2394 = vunpack.c.h.b16 %v1712
  %v2395 = vunpack.c.l.b16 %v1713
  %v2396 = vunpack.c.h.b16 %v1713
  %v2397 = vunpack.c.l.b16 %v1714
  %v2398 = vunpack.c.h.b16 %v1714
  %v2399 = vunpack.c.l.b16 %v1715
  %v2400 = vunpack.c.l.b16 %v1716
  %v2401 = vunpack.c.h.b16 %v1716
  %v2402 = vunpack.c.l.b16 %v1717
  %v2403 = vunpack.c.h.b16 %v1717
  %v2404 = vunpack.c.l.b16 %v1718
  %v2405 = vunpack.c.h.b16 %v1718
  %v2406 = vunpack.c.l.b16 %v1719
  %v2407 = vunpack.c.l.b16 %v1720
  %v2408 = vunpack.c.h.b16 %v1720
  %v2409 = vunpack.c.l.b16 %v1721
  %v2410 = vunpack.c.h.b16 %v1721
  %v2411 = vunpack.c.l.b16 %v1722
  %v2412 = vunpack.c.h.b16 %v1722
  %v2413 = vunpack.c.l.b16 %v1723
  %v2414 = vunpack.c.l.b16 %v1724
  %v2415 = vunpack.c.h.b16 %v1724
  %v2416 = vunpack.c.l.b16 %v1725
  %v2417 = vunpack.c.h.b16 %v1725
  %v2418 = vunpack.c.l.b16 %v1726
  %v2419 = vunpack.c.h.b16 %v1726
  %v2420 = vunpack.c.l.b16 %v1727
  %v2421 = vunpack.c.l.b16 %v1728
  %v2422 = vunpack.c.h.b16 %v1728
  %v2423 = vunpack.c.l.b16 %v1729
  %v2424 = vunpack.c.h.b16 %v1729
  %v2425 = vunpack.c.l.b16 %v1730
  %v2426 = vunpack.c.h.b16 %v1730
  %v2427 = vunpack.c.l.b16 %v1731
  %v2428 = vunpack.c.l.b16 %v1732
  %v2429 = vunpack.c.h.b16 %v1732
  %v2430 = vunpack.c.l.b16 %v1733
  %v2431 = vunpack.c.h.b16 %v1733
  %v2432 = vunpack.c.l.b16 %v1734
  %v2433 = vunpack.c.h.b16 %v1734
  %v2434 = vunpack.c.l.b16 %v1735
  %v2435 = vunpack.c.l.b16 %v1736
  %v2436 = vunpack.c.h.b16 %v1736
  %v2437 = vunpack.c.l.b16 %v1737
  %v2438 = vunpack.c.h.b16 %v1737
  %v2439 = vunpack.c.l.b16 %v1738
  %v2440 = vunpack.c.h.b16 %v1738
  %v2441 = vunpack.c.l.b16 %v1739
  %v2442 = vunpack.c.l.b16 %v1740
  %v2443 = vunpack.c.h.b16 %v1740
  %v2444 = vunpack.c.l.b16 %v1741
  %v2445 = vunpack.c.h.b16 %v1741
  %v2446 = vunpack.c.l.b16 %v1742
  %v2447 = vunpack.c.h.b16 %v1742
  %v2448 = vunpack.c.l.b16 %v1743
  %v2449 = vunpack.c.l.b16 %v1744
  %v2450 = vunpack.c.h.b16 %v1744
  %v2451 = vunpack.c.l.b16 %v1745
  %v2452 = vunpack.c.h.b16 %v1745
  %v2453 = vunpack.c.l.b16 %v1746
  %v2454 = vunpack.c.h.b16 %v1746
  %v2455 = vunpack.c.l.b16 %v1747
  %v2456 = vunpack.c.l.b16 %v1748
  %v2457 = vunpack.c.h.b16 %v1748
  %v2458 = vunpack.c.l.b16 %v1749
  %v2459 = vunpack.c.h.b16 %v1749
  %v2460 = vunpack.c.l.b16 %v1750
  %v2461 = vunpack.c.h.b16 %v1750
  %v2462 = vunpack.c.l.b16 %v1751
  %v2463 = vunpack.c.l.b16 %v1752
  %v2464 = vunpack.c.h.b16 %v1752
  %v2465 = vunpack.c.l.b16 %v1753
  %v2466 = vunpack.c.h.b16 %v1753
  %v2467 = vunpack.c.l.b16 %v1754
  %v2468 = vunpack.c.h.b16 %v1754
  %v2469 = vunpack.c.l.b16 %v1755
  %v2470 = vunpack.c.l.b16 %v1756
  %v2471 = vunpack.c.h.b16 %v1756
  %v2472 = vunpack.c.l.b16 %v1757
  %v2473 = vunpack.c.h.b16 %v1757
  %v2474 = vunpack.c.l.b16 %v1758
  %v2475 = vunpack.c.h.b16 %v1758
  %v2476 = vunpack.c.l.b16 %v1759
  %v2477 = vunpack.c.l.b16 %v1760
  %v2478 = vunpack.c.h.b16 %v1760
  %v2479 = vunpack.c.l.b16 %v1761
  %v2480 = vunpack.c.h.b16 %v1761
  %v2481 = vunpack.c.l.b16 %v1762
  %v2482 = vunpack.c.h.b16 %v1762
  %v2483 = vunpack.c.l.b16 %v1763
  %v2484 = vunpack.c.l.b16 %v1764
  %v2485 = vunpack.c.h.b16 %v1764
  %v2486 = vunpack.c.l.b16 %v1765
  %v2487 = vunpack.c.h.b16 %v1765
  %v2488 = vunpack.c.l.b16 %v1766
  %v2489 = vunpack.c.h.b16 %v1766
  %v2490 = vunpack.c.l.b16 %v1767
  %v2491 = vunpack.c.l.b16 %v1768
  %v2492 = vunpack.c.h.b16 %v1768
  %v2493 = vunpack.c.l.b16 %v1769
  %v2494 = vunpack.c.h.b16 %v1769
  %v2495 = vunpack.c.l.b16 %v1770
  %v2496 = vunpack.c.h.b16 %v1770
  %v2497 = vunpack.c.l.b16 %v1771
  %v2498 = vunpack.c.l.b16 %v1772
  %v2499 = vunpack.c.h.b16 %v1772
  %v2500 = vunpack.c.l.b16 %v1773
  %v2501 = vunpack.c.h.b16 %v1773
  %v2502 = vunpack.c.l.b16 %v1774
  %v2503 = vunpack.c.h.b16 %v1774
  %v2504 = vunpack.c.l.b16 %v1775
  %v2505 = vunpack.c.l.b16 %v1776
  %v2506 = vunpack.c.h.b16 %v1776
  %v2507 = vunpack.c.l.b16 %v1777
  %v2508 = vunpack.c.h.b16 %v1777
  %v2509 = vunpack.c.l.b16 %v1778
  %v2510 = vunpack.c.h.b16 %v1778
  %v2511 = vunpack.c.l.b16 %v1779
  %v2512 = vunpack.c.l.b16 %v1780
  %v2513 = vunpack.c.h.b16 %v1780
  %v2514 = vunpack.c.l.b16 %v1781
  %v2515 = vunpack.c.h.b16 %v1781
  %v2516 = vunpack.c.l.b16 %v1782
  %v2517 = vunpack.c.h.b16 %v1782
  %v2518 = vunpack.c.l.b16 %v1783
  %v2519 = vunpack.c.l.b16 %v1784
  %v2520 = vunpack.c.h.b16 %v1784
  %v2521 = vunpack.c.l.b16 %v1785
  %v2522 = vunpack.c.h.b16 %v1785
  %v2523 = vunpack.c.l.b16 %v1786
  %v2524 = vunpack.c.h.b16 %v1786
  %v2525 = vunpack.c.l.b16 %v1787
  %v2526 = vunpack.c.l.b16 %v1788
  %v2527 = vunpack.c.h.b16 %v1788
  %v2528 = vunpack.c.l.b16 %v1789
  %v2529 = vunpack.c.h.b16 %v1789
  %v2530 = vunpack.c.l.b16 %v1790
  %v2531 = vunpack.c.h.b16 %v1790
  %v2532 = vunpack.c.l.b16 %v1791
  %v2533 = vpack.c.b16 %v2092, %v2085
  %v2534 = vpack.c.b16 %v2093, %v2086
  %v2535 = vpack.c.b16 %v2094, %v2087
  %v2536 = vpack.c.b16 %v2095, %v2088
  %v2537 = vpack.c.b16 %v2096, %v2089
  %v2538 = vpack.c.b16 %v2097, %v2090
  %v2539 = vpack.c.b16 %v2098, %v2091
  %v2540 = vpack.c.b16 %v2106, %v2099
  %v2541 = vpack.c.b16 %v2107, %v2100
  %v2542 = vpack.c.b16 %v2108, %v2101
  %v2543 = vpack.c.b16 %v2109, %v2102
  %v2544 = vpack.c.b16 %v2110, %v2103
  %v2545 = vpack.c.b16 %v2111, %v2104
  %v2546 = vpack.c.b16 %v2112, %v2105
  %v2547 = vpack.c.b16 %v2120, %v2113
  %v2548 = vpack.c.b16 %v2121, %v2114
  %v2549 = vpack.c.b16 %v2122, %v2115
  %v2550 = vpack.c.b16 %v2123, %v2116
  %v2551 = vpack.c.b16 %v2124, %v2117
  %v2552 = vpack.c.b16 %v2125, %v2118
  %v2553 = vpack.c.b16 %v2126, %v2119
  %v2554 = vpack.c.b16 %v2134, %v2127
  %v2555 = vpack.c.b16 %v2135, %v2128
  %v2556 = vpack.c.b16 %v2136, %v2129
  %v2557 = vpack.c.b16 %v2137, %v2130
  %v2558 = vpack.c.b16 %v2138, %v2131
  %v2559 = vpack.c.b16 %v2139, %v2132
  %v2560 = vpack.c.b16 %v2140, %v2133
  %v2561 = vpack.c.b16 %v2148, %v2141
  %v2562 = vpack.c.b16 %v2149, %v2142
  %v2563 = vpack.c.b16 %v2150, %v2143
  %v2564 = vpack.c.b16 %v2151, %v2144
  %v2565 = vpack.c.b16 %v2152, %v2145
  %v2566 = vpack.c.b16 %v2153, %v2146
  %v2567 = vpack.c.b16 %v2154, %v2147
  %v2568 = vpack.c.b16 %v2162, %v2155
  %v2569 = vpack.c.b16 %v2163, %v2156
  %v2570 = vpack.c.b16 %v2164, %v2157
  %v2571 = vpack.c.b16 %v2165, %v2158
  %v2572 = vpack.c.b16 %v2166, %v2159
  %v2573 = vpack.c.b16 %v2167, %v2160
  %v2574 = vpack.c.b16 %v2168, %v2161
  %v2575 = vpack.c.b16 %v2176, %v2169
  %v2576 = vpack.c.b16 %v2177, %v2170
  %v2577 = vpack.c.b16 %v2178, %v2171
  %v2578 = vpack.c.b16 %v2179, %v2172
  %v2579 = vpack.c.b16 %v2180, %v2173
  %v2580 = vpack.c.b16 %v2181, %v2174
  %v2581 = vpack.c.b16 %v2182, %v2175
  %v2582 = vpack.c.b16 %v2190, %v2183
  %v2583 = vpack.c.b16 %v2191, %v2184
  %v2584 = vpack.c.b16 %v2192, %v2185
  %v2585 = vpack.c.b16 %v2193, %v2186
  %v2586 = vpack.c.b16 %v2194, %v2187
  %v2587 = vpack.c.b16 %v2195, %v2188
  %v2588 = vpack.c.b16 %v2196, %v2189
  %v2589 = vpack.c.b16 %v2204, %v2197
  %v2590 = vpack.c.b16 %v2205, %v2198
  %v2591 = vpack.c.b16 %v2206, %v2199
  %v2592 = vpack.c.b16 %v2207, %v2200
  %v2593 = vpack.c.b16 %v2208, %v2201
  %v2594 = vpack.c.b16 %v2209, %v2202
  %v2595 = vpack.c.b16 %v2210, %v2203
  %v2596 = vpack.c.b16 %v2218, %v2211
  %v2597 = vpack.c.b16 %v2219, %v2212
  %v2598 = vpack.c.b16 %v2220, %v2213
  %v2599 = vpack.c.b16 %v2221, %v2214
  %v2600 = vpack.c.b16 %v2222, %v2215
  %v2601 = vpack.c.b16 %v2223, %v2216
  %v2602 = vpack.c.b16 %v2224, %v2217
  %v2603 = vpack.c.b16 %v2232, %v2225
  %v2604 = vpack.c.b16 %v2233, %v2226
  %v2605 = vpack.c.b16 %v2234, %v2227
  %v2606 = vpack.c.b16 %v2235, %v2228
  %v2607 = vpack.c.b16 %v2236, %v2229
  %v2608 = vpack.c.b16 %v2237, %v2230
  %v2609 = vpack.c.b16 %v2238, %v2231
  %v2610 = vpack.c.b16 %v2246, %v2239
  %v2611 = vpack.c.b16 %v2247, %v2240
  %v2612 = vpack.c.b16 %v2248, %v2241
  %v2613 = vpack.c.b16 %v2249, %v2242
  %v2614 = vpack.c.b16 %v2250, %v2243
  %v2615 = vpack.c.b16 %v2251, %v2244
  %v2616 = vpack.c.b16 %v2252, %v2245
  %v2617 = vpack.c.b16 %v2260, %v2253
  %v2618 = vpack.c.b16 %v2261, %v2254
  %v2619 = vpack.c.b16 %v2262, %v2255
  %v2620 = vpack.c.b16 %v2263, %v2256
  %v2621 = vpack.c.b16 %v2264, %v2257
  %v2622 = vpack.c.b16 %v2265, %v2258
  %v2623 = vpack.c.b16 %v2266, %v2259
  %v2624 = vpack.c.b16 %v2274, %v2267
  %v2625 = vpack.c.b16 %v2275, %v2268
  %v2626 = vpack.c.b16 %v2276, %v2269
  %v2627 = vpack.c.b16 %v2277, %v2270
  %v2628 = vpack.c.b16 %v2278, %v2271
  %v2629 = vpack.c.b16 %v2279, %v2272
  %v2630 = vpack.c.b16 %v2280, %v2273
  %v2631 = vpack.c.b16 %v2288, %v2281
  %v2632 = vpack.c.b16 %v2289, %v2282
  %v2633 = vpack.c.b16 %v2290, %v2283
  %v2634 = vpack.c.b16 %v2291, %v2284
  %v2635 = vpack.c.b16 %v2292, %v2285
  %v2636 = vpack.c.b16 %v2293, %v2286
  %v2637 = vpack.c.b16 %v2294, %v2287
  %v2638 = vpack.c.b16 %v2302, %v2295
  %v2639 = vpack.c.b16 %v2303, %v2296
  %v2640 = vpack.c.b16 %v2304, %v2297
  %v2641 = vpack.c.b16 %v2305, %v2298
  %v2642 = vpack.c.b16 %v2306, %v2299
  %v2643 = vpack.c.b16 %v2307, %v2300
  %v2644 = vpack.c.b16 %v2308, %v2301
  %v2645 = vpack.c.b16 %v2316, %v2309
  %v2646 = vpack.c.b16 %v2317, %v2310
  %v2647 = vpack.c.b16 %v2318, %v2311
  %v2648 = vpack.c.b16 %v2319, %v2312
  %v2649 = vpack.c.b16 %v2320, %v2313
  %v2650 = vpack.c.b16 %v2321, %v2314
  %v2651 = vpack.c.b16 %v2322, %v2315
  %v2652 = vpack.c.b16 %v2330, %v2323
  %v2653 = vpack.c.b16 %v2331, %v2324
  %v2654 = vpack.c.b16 %v2332, %v2325
  %v2655 = vpack.c.b16 %v2333, %v2326
  %v2656 = vpack.c.b16 %v2334, %v2327
  %v2657 = vpack.c.b16 %v2335, %v2328
  %v2658 = vpack.c.b16 %v2336, %v2329
  %v2659 = vpack.c.b16 %v2344, %v2337
  %v2660 = vpack.c.b16 %v2345, %v2338
  %v2661 = vpack.c.b16 %v2346, %v2339
  %v2662 = vpack.c.b16 %v2347, %v2340
  %v2663 = vpack.c.b16 %v2348, %v2341
  %v2664 = vpack.c.b16 %v2349, %v2342
  %v2665 = vpack.c.b16 %v2350, %v2343
  %v2666 = vpack.c.b16 %v2358, %v2351
  %v2667 = vpack.c.b16 %v2359, %v2352
  %v2668 = vpack.c.b16 %v2360, %v2353
  %v2669 = vpack.c.b16 %v2361, %v2354
  %v2670 = vpack.c.b16 %v2362, %v2355
  %v2671 = vpack.c.b16 %v2363, %v2356
  %v2672 = vpack.c.b16 %v2364, %v2357
  %v2673 = vpack.c.b16 %v2372, %v2365
  %v2674 = vpack.c.b16 %v2373, %v2366
  %v2675 = vpack.c.b16 %v2374, %v2367
  %v2676 = vpack.c.b16 %v2375, %v2368
  %v2677 = vpack.c.b16 %v2376, %v2369
  %v2678 = vpack.c.b16 %v2377, %v2370
  %v2679 = vpack.c.b16 %v2378, %v2371
  %v2680 = vpack.c.b16 %v2386, %v2379
  %v2681 = vpack.c.b16 %v2387, %v2380
  %v2682 = vpack.c.b16 %v2388, %v2381
  %v2683 = vpack.c.b16 %v2389, %v2382
  %v2684 = vpack.c.b16 %v2390, %v2383
  %v2685 = vpack.c.b16 %v2391, %v2384
  %v2686 = vpack.c.b16 %v2392, %v2385
  %v2687 = vpack.c.b16 %v2400, %v2393
  %v2688 = vpack.c.b16 %v2401, %v2394
  %v2689 = vpack.c.b16 %v2402, %v2395
  %v2690 = vpack.c.b16 %v2403, %v2396
  %v2691 = vpack.c.b16 %v2404, %v2397
  %v2692 = vpack.c.b16 %v2405, %v2398
  %v2693 = vpack.c.b16 %v2406, %v2399
  %v2694 = vpack.c.b16 %v2414, %v2407
  %v2695 = vpack.c.b16 %v2415, %v2408
  %v2696 = vpack.c.b16 %v2416, %v2409
  %v2697 = vpack.c.b16 %v2417, %v2410
  %v2698 = vpack.c.b16 %v2418, %v2411
  %v2699 = vpack.c.b16 %v2419, %v2412
  %v2700 = vpack.c.b16 %v2420, %v2413
  %v2701 = vpack.c.b16 %v2428, %v2421
  %v2702 = vpack.c.b16 %v2429, %v2422
  %v2703 = vpack.c.b16 %v2430, %v2423
  %v2704 = vpack.c.b16 %v2431, %v2424
  %v2705 = vpack.c.b16 %v2432, %v2425
  %v2706 = vpack.c.b16 %v2433, %v2426
  %v2707 = vpack.c.b16 %v2434, %v2427
  %v2708 = vpack.c.b16 %v2442, %v2435
  %v2709 = vpack.c.b16 %v2443, %v2436
  %v2710 = vpack.c.b16 %v2444, %v2437
  %v2711 = vpack.c.b16 %v2445, %v2438
  %v2712 = vpack.c.b16 %v2446, %v2439
  %v2713 = vpack.c.b16 %v2447, %v2440
  %v2714 = vpack.c.b16 %v2448, %v2441
  %v2715 = vpack.c.b16 %v2456, %v2449
  %v2716 = vpack.c.b16 %v2457, %v2450
  %v2717 = vpack.c.b16 %v2458, %v2451
  %v2718 = vpack.c.b16 %v2459, %v2452
  %v2719 = vpack.c.b16 %v2460, %v2453
  %v2720 = vpack.c.b16 %v2461, %v2454
  %v2721 = vpack.c.b16 %v2462, %v2455
  %v2722 = vpack.c.b16 %v2470, %v2463
  %v2723 = vpack.c.b16 %v2471, %v2464
  %v2724 = vpack.c.b16 %v2472, %v2465
  %v2725 = vpack.c.b16 %v2473, %v2466
  %v2726 = vpack.c.b16 %v2474, %v2467
  %v2727 = vpack.c.b16 %v2475, %v2468
  %v2728 = vpack.c.b16 %v2476, %v2469
  %v2729 = vpack.c.b16 %v2484, %v2477
  %v2730 = vpack.c.b16 %v2485, %v2478
  %v2731 = vpack.c.b16 %v2486, %v2479
  %v2732 = vpack.c.b16 %v2487, %v2480
  %v2733 = vpack.c.b16 %v2488, %v2481
  %v2734 = vpack.c.b16 %v2489, %v2482
  %v2735 = vpack.c.b16 %v2490, %v2483
  %v2736 = vpack.c.b16 %v2498, %v2491
  %v2737 = vpack.c.b16 %v2499, %v2492
  %v2738 = vpack.c.b16 %v2500, %v2493
  %v2739 = vpack.c.b16 %v2501, %v2494
  %v2740 = vpack.c.b16 %v2502, %v2495
  %v2741 = vpack.c.b16 %v2503, %v2496
  %v2742 = vpack.c.b16 %v2504, %v2497
  %v2743 = vpack.c.b16 %v2512, %v2505
  %v2744 = vpack.c.b16 %v2513, %v2506
  %v2745 = vpack.c.b16 %v2514, %v2507
  %v2746 = vpack.c.b16 %v2515, %v2508
  %v2747 = vpack.c.b16 %v2516, %v2509
  %v2748 = vpack.c.b16 %v2517, %v2510
  %v2749 = vpack.c.b16 %v2518, %v2511
  %v2750 = vpack.c.b16 %v2526, %v2519
  %v2751 = vpack.c.b16 %v2527, %v2520
  %v2752 = vpack.c.b16 %v2528, %v2521
  %v2753 = vpack.c.b16 %v2529, %v2522
  %v2754 = vpack.c.b16 %v2530, %v2523
  %v2755 = vpack.c.b16 %v2531, %v2524
  %v2756 = vpack.c.b16 %v2532, %v2525
  %2981 = vmatprep.subr.bf16.mxu0 %v2583
  %2982 = vmatpush1.bf16.msra.mxu0 %v2582
  %2983 = vmatprep.subr.bf16.mxu0 %v2576
  %2984 = vmatpush1.bf16.msra.mxu0 %v2575
  %2985 = vmatprep.subr.bf16.mxu0 %v2569
  %2986 = vmatpush1.bf16.msra.mxu0 %v2568
  %2987 = vmatprep.subr.bf16.mxu0 %v2562
  %2988 = vmatpush1.bf16.msra.mxu0 %v2561
  %2989 = vmatprep.subr.bf16.mxu0 %v2555
  %2990 = vmatpush1.bf16.msra.mxu0 %v2554
  %2991 = vmatprep.subr.bf16.mxu0 %v2548
  %2992 = vmatpush1.bf16.msra.mxu0 %v2547
  %2993 = vmatprep.subr.bf16.mxu0 %v2541
  %2994 = vmatpush1.bf16.msra.mxu0 %v2540
  %2995 = vmatprep.subr.bf16.mxu0 %v2534
  %2996 = vmatpush1.bf16.msra.mxu0 %v2533
  %2997 = vmatprep.subr.bf16.mxu0 %v2639
  %2998 = vmatpush2.bf16.msra.mxu0 %v2638
  %2999 = vmatprep.subr.bf16.mxu0 %v2632
  %3000 = vmatpush2.bf16.msra.mxu0 %v2631
  %3001 = vmatprep.subr.bf16.mxu0 %v2625
  %3002 = vmatpush2.bf16.msra.mxu0 %v2624
  %3003 = vmatprep.subr.bf16.mxu0 %v2618
  %3004 = vmatpush2.bf16.msra.mxu0 %v2617
  %3005 = vmatprep.subr.bf16.mxu0 %v2611
  %3006 = vmatpush2.bf16.msra.mxu0 %v2610
  %3007 = vmatprep.subr.bf16.mxu0 %v2604
  %3008 = vmatpush2.bf16.msra.mxu0 %v2603
  %3009 = vmatprep.subr.bf16.mxu0 %v2597
  %3010 = vmatpush2.bf16.msra.mxu0 %v2596
  %3011 = vmatprep.subr.bf16.mxu0 %v2590
  %3012 = vmatpush2.bf16.msra.mxu0 %v2589
  %3013 = vmatprep.mubr.bf16.mxu0 %v1473
  %3014 = vmatmul.mubr.bf16.gmra.mxu0 %v1472
  %v3015 = vpop.f32.mrf.mxu0
  %v3016 = vadd.f32 %v1797, %v3015
  %v3017 = vpop.f32.mrf.mxu0
  %v3018 = vadd.f32 %v1801, %v3017
  %v3019 = vpop.f32.mrf.mxu0
  %v3020 = vadd.f32 %v1797, %v3019
  %v3021 = vpop.f32.mrf.mxu0
  %v3022 = vadd.f32 %v1801, %v3021
  %3023 = vmatprep.mubr.bf16.mxu0 %v1477
  %3024 = vmatmul.mubr.bf16.gmra.mxu0 %v1476
  %v3025 = vpop.f32.mrf.mxu0
  %v3026 = vadd.f32 %v1797, %v3025
  %v3027 = vpop.f32.mrf.mxu0
  %v3028 = vadd.f32 %v1801, %v3027
  %v3029 = vpop.f32.mrf.mxu0
  %v3030 = vadd.f32 %v1797, %v3029
  %v3031 = vpop.f32.mrf.mxu0
  %v3032 = vadd.f32 %v1801, %v3031
  %3033 = vmatprep.mubr.bf16.mxu0 %v1481
  %3034 = vmatmul.mubr.bf16.gmra.mxu0 %v1480
  %v3035 = vpop.f32.mrf.mxu0
  %v3036 = vadd.f32 %v1797, %v3035
  %v3037 = vpop.f32.mrf.mxu0
  %v3038 = vadd.f32 %v1801, %v3037
  %v3039 = vpop.f32.mrf.mxu0
  %v3040 = vadd.f32 %v1797, %v3039
  %v3041 = vpop.f32.mrf.mxu0
  %v3042 = vadd.f32 %v1801, %v3041
  %3043 = vmatprep.mubr.bf16.mxu0 %v1485
  %3044 = vmatmul.mubr.bf16.gmra.mxu0 %v1484
  %v3045 = vpop.f32.mrf.mxu0
  %v3046 = vadd.f32 %v1797, %v3045
  %v3047 = vpop.f32.mrf.mxu0
  %v3048 = vadd.f32 %v1801, %v3047
  %v3049 = vpop.f32.mrf.mxu0
  %v3050 = vadd.f32 %v1797, %v3049
  %v3051 = vpop.f32.mrf.mxu0
  %v3052 = vadd.f32 %v1801, %v3051
  %3053 = vmatprep.mubr.bf16.mxu0 %v1489
  %3054 = vmatmul.mubr.bf16.gmra.mxu0 %v1488
  %v3055 = vpop.f32.mrf.mxu0
  %v3056 = vadd.f32 %v1797, %v3055
  %v3057 = vpop.f32.mrf.mxu0
  %v3058 = vadd.f32 %v1801, %v3057
  %v3059 = vpop.f32.mrf.mxu0
  %v3060 = vadd.f32 %v1797, %v3059
  %v3061 = vpop.f32.mrf.mxu0
  %v3062 = vadd.f32 %v1801, %v3061
  %3063 = vmatprep.mubr.bf16.mxu0 %v1493
  %3064 = vmatmul.mubr.bf16.gmra.mxu0 %v1492
  %v3065 = vpop.f32.mrf.mxu0
  %v3066 = vadd.f32 %v1797, %v3065
  %v3067 = vpop.f32.mrf.mxu0
  %v3068 = vadd.f32 %v1801, %v3067
  %v3069 = vpop.f32.mrf.mxu0
  %v3070 = vadd.f32 %v1797, %v3069
  %v3071 = vpop.f32.mrf.mxu0
  %v3072 = vadd.f32 %v1801, %v3071
  %3073 = vmatprep.mubr.bf16.mxu0 %v1497
  %3074 = vmatmul.mubr.bf16.gmra.mxu0 %v1496
  %v3075 = vpop.f32.mrf.mxu0
  %v3076 = vadd.f32 %v1797, %v3075
  %v3077 = vpop.f32.mrf.mxu0
  %v3078 = vadd.f32 %v1801, %v3077
  %v3079 = vpop.f32.mrf.mxu0
  %v3080 = vadd.f32 %v1797, %v3079
  %v3081 = vpop.f32.mrf.mxu0
  %v3082 = vadd.f32 %v1801, %v3081
  %3083 = vmatprep.mubr.bf16.mxu0 %v1501
  %3084 = vmatmul.mubr.bf16.gmra.mxu0 %v1500
  %v3085 = vpop.f32.mrf.mxu0
  %v3086 = vadd.f32 %v1797, %v3085
  %v3087 = vpop.f32.mrf.mxu0
  %v3088 = vadd.f32 %v1801, %v3087
  %v3089 = vpop.f32.mrf.mxu0
  %v3090 = vadd.f32 %v1797, %v3089
  %v3091 = vpop.f32.mrf.mxu0
  %v3092 = vadd.f32 %v1801, %v3091
  %3093 = vmatprep.mubr.bf16.mxu0 %v1505
  %3094 = vmatmul.mubr.bf16.gmra.mxu0 %v1504
  %v3095 = vpop.f32.mrf.mxu0
  %v3096 = vadd.f32 %v1797, %v3095
  %v3097 = vpop.f32.mrf.mxu0
  %v3098 = vadd.f32 %v1801, %v3097
  %v3099 = vpop.f32.mrf.mxu0
  %v3100 = vadd.f32 %v1797, %v3099
  %v3101 = vpop.f32.mrf.mxu0
  %v3102 = vadd.f32 %v1801, %v3101
  %3103 = vmatprep.mubr.bf16.mxu0 %v1509
  %3104 = vmatmul.mubr.bf16.gmra.mxu0 %v1508
  %v3105 = vpop.f32.mrf.mxu0
  %v3106 = vadd.f32 %v1797, %v3105
  %v3107 = vpop.f32.mrf.mxu0
  %v3108 = vadd.f32 %v1801, %v3107
  %v3109 = vpop.f32.mrf.mxu0
  %v3110 = vadd.f32 %v1797, %v3109
  %v3111 = vpop.f32.mrf.mxu0
  %v3112 = vadd.f32 %v1801, %v3111
  %3113 = vmatprep.mubr.bf16.mxu0 %v1513
  %3114 = vmatmul.mubr.bf16.gmra.mxu0 %v1512
  %v3115 = vpop.f32.mrf.mxu0
  %v3116 = vadd.f32 %v1797, %v3115
  %v3117 = vpop.f32.mrf.mxu0
  %v3118 = vadd.f32 %v1801, %v3117
  %v3119 = vpop.f32.mrf.mxu0
  %v3120 = vadd.f32 %v1797, %v3119
  %v3121 = vpop.f32.mrf.mxu0
  %v3122 = vadd.f32 %v1801, %v3121
  %3123 = vmatprep.mubr.bf16.mxu0 %v1517
  %3124 = vmatmul.mubr.bf16.gmra.mxu0 %v1516
  %v3125 = vpop.f32.mrf.mxu0
  %v3126 = vadd.f32 %v1797, %v3125
  %v3127 = vpop.f32.mrf.mxu0
  %v3128 = vadd.f32 %v1801, %v3127
  %v3129 = vpop.f32.mrf.mxu0
  %v3130 = vadd.f32 %v1797, %v3129
  %v3131 = vpop.f32.mrf.mxu0
  %v3132 = vadd.f32 %v1801, %v3131
  %3133 = vmatprep.mubr.bf16.mxu0 %v1521
  %3134 = vmatmul.mubr.bf16.gmra.mxu0 %v1520
  %v3135 = vpop.f32.mrf.mxu0
  %v3136 = vadd.f32 %v1797, %v3135
  %v3137 = vpop.f32.mrf.mxu0
  %v3138 = vadd.f32 %v1801, %v3137
  %v3139 = vpop.f32.mrf.mxu0
  %v3140 = vadd.f32 %v1797, %v3139
  %v3141 = vpop.f32.mrf.mxu0
  %v3142 = vadd.f32 %v1801, %v3141
  %3143 = vmatprep.mubr.bf16.mxu0 %v1525
  %3144 = vmatmul.mubr.bf16.gmra.mxu0 %v1524
  %v3145 = vpop.f32.mrf.mxu0
  %v3146 = vadd.f32 %v1797, %v3145
  %v3147 = vpop.f32.mrf.mxu0
  %v3148 = vadd.f32 %v1801, %v3147
  %v3149 = vpop.f32.mrf.mxu0
  %v3150 = vadd.f32 %v1797, %v3149
  %v3151 = vpop.f32.mrf.mxu0
  %v3152 = vadd.f32 %v1801, %v3151
  %3153 = vmatprep.mubr.bf16.mxu0 %v1529
  %3154 = vmatmul.mubr.bf16.gmra.mxu0 %v1528
  %v3155 = vpop.f32.mrf.mxu0
  %v3156 = vadd.f32 %v1797, %v3155
  %v3157 = vpop.f32.mrf.mxu0
  %v3158 = vadd.f32 %v1801, %v3157
  %v3159 = vpop.f32.mrf.mxu0
  %v3160 = vadd.f32 %v1797, %v3159
  %v3161 = vpop.f32.mrf.mxu0
  %v3162 = vadd.f32 %v1801, %v3161
  %3163 = vmatprep.mubr.bf16.mxu0 %v1533
  %3164 = vmatmul.mubr.bf16.gmra.mxu0 %v1532
  %v3165 = vpop.f32.mrf.mxu0
  %v3166 = vadd.f32 %v1797, %v3165
  %v3167 = vpop.f32.mrf.mxu0
  %v3168 = vadd.f32 %v1801, %v3167
  %v3169 = vpop.f32.mrf.mxu0
  %v3170 = vadd.f32 %v1797, %v3169
  %v3171 = vpop.f32.mrf.mxu0
  %v3172 = vadd.f32 %v1801, %v3171
  %3173 = vdwg.mxu0
  %3174 = vmatprep.subr.bf16.mxu0 %v2695
  %3175 = vmatpush1.bf16.msra.mxu0 %v2694
  %3176 = vmatprep.subr.bf16.mxu0 %v2688
  %3177 = vmatpush1.bf16.msra.mxu0 %v2687
  %3178 = vmatprep.subr.bf16.mxu0 %v2681
  %3179 = vmatpush1.bf16.msra.mxu0 %v2680
  %3180 = vmatprep.subr.bf16.mxu0 %v2674
  %3181 = vmatpush1.bf16.msra.mxu0 %v2673
  %3182 = vmatprep.subr.bf16.mxu0 %v2667
  %3183 = vmatpush1.bf16.msra.mxu0 %v2666
  %3184 = vmatprep.subr.bf16.mxu0 %v2660
  %3185 = vmatpush1.bf16.msra.mxu0 %v2659
  %3186 = vmatprep.subr.bf16.mxu0 %v2653
  %3187 = vmatpush1.bf16.msra.mxu0 %v2652
  %3188 = vmatprep.subr.bf16.mxu0 %v2646
  %3189 = vmatpush1.bf16.msra.mxu0 %v2645
  %3190 = vmatprep.subr.bf16.mxu0 %v2751
  %3191 = vmatpush2.bf16.msra.mxu0 %v2750
  %3192 = vmatprep.subr.bf16.mxu0 %v2744
  %3193 = vmatpush2.bf16.msra.mxu0 %v2743
  %3194 = vmatprep.subr.bf16.mxu0 %v2737
  %3195 = vmatpush2.bf16.msra.mxu0 %v2736
  %3196 = vmatprep.subr.bf16.mxu0 %v2730
  %3197 = vmatpush2.bf16.msra.mxu0 %v2729
  %3198 = vmatprep.subr.bf16.mxu0 %v2723
  %3199 = vmatpush2.bf16.msra.mxu0 %v2722
  %3200 = vmatprep.subr.bf16.mxu0 %v2716
  %3201 = vmatpush2.bf16.msra.mxu0 %v2715
  %3202 = vmatprep.subr.bf16.mxu0 %v2709
  %3203 = vmatpush2.bf16.msra.mxu0 %v2708
  %3204 = vmatprep.subr.bf16.mxu0 %v2702
  %3205 = vmatpush2.bf16.msra.mxu0 %v2701
  %3206 = vmatprep.mubr.bf16.mxu0 %v1475
  %3207 = vmatmul.mubr.bf16.gmra.mxu0 %v1474
  %v3208 = vpop.f32.mrf.mxu0
  %v3209 = vadd.f32 %v3016, %v3208
  %v3210 = vpop.f32.mrf.mxu0
  %v3211 = vadd.f32 %v3018, %v3210
  %v3212 = vpop.f32.mrf.mxu0
  %v3213 = vadd.f32 %v3020, %v3212
  %v3214 = vpop.f32.mrf.mxu0
  %v3215 = vadd.f32 %v3022, %v3214
  %3216 = vmatprep.mubr.bf16.mxu0 %v1479
  %3217 = vmatmul.mubr.bf16.gmra.mxu0 %v1478
  %v3218 = vpop.f32.mrf.mxu0
  %v3219 = vadd.f32 %v3026, %v3218
  %v3220 = vpop.f32.mrf.mxu0
  %v3221 = vadd.f32 %v3028, %v3220
  %v3222 = vpop.f32.mrf.mxu0
  %v3223 = vadd.f32 %v3030, %v3222
  %v3224 = vpop.f32.mrf.mxu0
  %v3225 = vadd.f32 %v3032, %v3224
  %3226 = vmatprep.mubr.bf16.mxu0 %v1483
  %3227 = vmatmul.mubr.bf16.gmra.mxu0 %v1482
  %v3228 = vpop.f32.mrf.mxu0
  %v3229 = vadd.f32 %v3036, %v3228
  %v3230 = vpop.f32.mrf.mxu0
  %v3231 = vadd.f32 %v3038, %v3230
  %v3232 = vpop.f32.mrf.mxu0
  %v3233 = vadd.f32 %v3040, %v3232
  %v3234 = vpop.f32.mrf.mxu0
  %v3235 = vadd.f32 %v3042, %v3234
  %3236 = vmatprep.mubr.bf16.mxu0 %v1487
  %3237 = vmatmul.mubr.bf16.gmra.mxu0 %v1486
  %v3238 = vpop.f32.mrf.mxu0
  %v3239 = vadd.f32 %v3046, %v3238
  %v3240 = vpop.f32.mrf.mxu0
  %v3241 = vadd.f32 %v3048, %v3240
  %v3242 = vpop.f32.mrf.mxu0
  %v3243 = vadd.f32 %v3050, %v3242
  %v3244 = vpop.f32.mrf.mxu0
  %v3245 = vadd.f32 %v3052, %v3244
  %3246 = vmatprep.mubr.bf16.mxu0 %v1491
  %3247 = vmatmul.mubr.bf16.gmra.mxu0 %v1490
  %v3248 = vpop.f32.mrf.mxu0
  %v3249 = vadd.f32 %v3056, %v3248
  %v3250 = vpop.f32.mrf.mxu0
  %v3251 = vadd.f32 %v3058, %v3250
  %v3252 = vpop.f32.mrf.mxu0
  %v3253 = vadd.f32 %v3060, %v3252
  %v3254 = vpop.f32.mrf.mxu0
  %v3255 = vadd.f32 %v3062, %v3254
  %3256 = vmatprep.mubr.bf16.mxu0 %v1495
  %3257 = vmatmul.mubr.bf16.gmra.mxu0 %v1494
  %v3258 = vpop.f32.mrf.mxu0
  %v3259 = vadd.f32 %v3066, %v3258
  %v3260 = vpop.f32.mrf.mxu0
  %v3261 = vadd.f32 %v3068, %v3260
  %v3262 = vpop.f32.mrf.mxu0
  %v3263 = vadd.f32 %v3070, %v3262
  %v3264 = vpop.f32.mrf.mxu0
  %v3265 = vadd.f32 %v3072, %v3264
  %3266 = vmatprep.mubr.bf16.mxu0 %v1499
  %3267 = vmatmul.mubr.bf16.gmra.mxu0 %v1498
  %v3268 = vpop.f32.mrf.mxu0
  %v3269 = vadd.f32 %v3076, %v3268
  %v3270 = vpop.f32.mrf.mxu0
  %v3271 = vadd.f32 %v3078, %v3270
  %v3272 = vpop.f32.mrf.mxu0
  %v3273 = vadd.f32 %v3080, %v3272
  %v3274 = vpop.f32.mrf.mxu0
  %v3275 = vadd.f32 %v3082, %v3274
  %3276 = vmatprep.mubr.bf16.mxu0 %v1503
  %3277 = vmatmul.mubr.bf16.gmra.mxu0 %v1502
  %v3278 = vpop.f32.mrf.mxu0
  %v3279 = vadd.f32 %v3086, %v3278
  %v3280 = vpop.f32.mrf.mxu0
  %v3281 = vadd.f32 %v3088, %v3280
  %v3282 = vpop.f32.mrf.mxu0
  %v3283 = vadd.f32 %v3090, %v3282
  %v3284 = vpop.f32.mrf.mxu0
  %v3285 = vadd.f32 %v3092, %v3284
  %3286 = vmatprep.mubr.bf16.mxu0 %v1507
  %3287 = vmatmul.mubr.bf16.gmra.mxu0 %v1506
  %v3288 = vpop.f32.mrf.mxu0
  %v3289 = vadd.f32 %v3096, %v3288
  %v3290 = vpop.f32.mrf.mxu0
  %v3291 = vadd.f32 %v3098, %v3290
  %v3292 = vpop.f32.mrf.mxu0
  %v3293 = vadd.f32 %v3100, %v3292
  %v3294 = vpop.f32.mrf.mxu0
  %v3295 = vadd.f32 %v3102, %v3294
  %3296 = vmatprep.mubr.bf16.mxu0 %v1511
  %3297 = vmatmul.mubr.bf16.gmra.mxu0 %v1510
  %v3298 = vpop.f32.mrf.mxu0
  %v3299 = vadd.f32 %v3106, %v3298
  %v3300 = vpop.f32.mrf.mxu0
  %v3301 = vadd.f32 %v3108, %v3300
  %v3302 = vpop.f32.mrf.mxu0
  %v3303 = vadd.f32 %v3110, %v3302
  %v3304 = vpop.f32.mrf.mxu0
  %v3305 = vadd.f32 %v3112, %v3304
  %3306 = vmatprep.mubr.bf16.mxu0 %v1515
  %3307 = vmatmul.mubr.bf16.gmra.mxu0 %v1514
  %v3308 = vpop.f32.mrf.mxu0
  %v3309 = vadd.f32 %v3116, %v3308
  %v3310 = vpop.f32.mrf.mxu0
  %v3311 = vadd.f32 %v3118, %v3310
  %v3312 = vpop.f32.mrf.mxu0
  %v3313 = vadd.f32 %v3120, %v3312
  %v3314 = vpop.f32.mrf.mxu0
  %v3315 = vadd.f32 %v3122, %v3314
  %3316 = vmatprep.mubr.bf16.mxu0 %v1519
  %3317 = vmatmul.mubr.bf16.gmra.mxu0 %v1518
  %v3318 = vpop.f32.mrf.mxu0
  %v3319 = vadd.f32 %v3126, %v3318
  %v3320 = vpop.f32.mrf.mxu0
  %v3321 = vadd.f32 %v3128, %v3320
  %v3322 = vpop.f32.mrf.mxu0
  %v3323 = vadd.f32 %v3130, %v3322
  %v3324 = vpop.f32.mrf.mxu0
  %v3325 = vadd.f32 %v3132, %v3324
  %3326 = vmatprep.mubr.bf16.mxu0 %v1523
  %3327 = vmatmul.mubr.bf16.gmra.mxu0 %v1522
  %v3328 = vpop.f32.mrf.mxu0
  %v3329 = vadd.f32 %v3136, %v3328
  %v3330 = vpop.f32.mrf.mxu0
  %v3331 = vadd.f32 %v3138, %v3330
  %v3332 = vpop.f32.mrf.mxu0
  %v3333 = vadd.f32 %v3140, %v3332
  %v3334 = vpop.f32.mrf.mxu0
  %v3335 = vadd.f32 %v3142, %v3334
  %3336 = vmatprep.mubr.bf16.mxu0 %v1527
  %3337 = vmatmul.mubr.bf16.gmra.mxu0 %v1526
  %v3338 = vpop.f32.mrf.mxu0
  %v3339 = vadd.f32 %v3146, %v3338
  %v3340 = vpop.f32.mrf.mxu0
  %v3341 = vadd.f32 %v3148, %v3340
  %v3342 = vpop.f32.mrf.mxu0
  %v3343 = vadd.f32 %v3150, %v3342
  %v3344 = vpop.f32.mrf.mxu0
  %v3345 = vadd.f32 %v3152, %v3344
  %3346 = vmatprep.mubr.bf16.mxu0 %v1531
  %3347 = vmatmul.mubr.bf16.gmra.mxu0 %v1530
  %v3348 = vpop.f32.mrf.mxu0
  %v3349 = vadd.f32 %v3156, %v3348
  %v3350 = vpop.f32.mrf.mxu0
  %v3351 = vadd.f32 %v3158, %v3350
  %v3352 = vpop.f32.mrf.mxu0
  %v3353 = vadd.f32 %v3160, %v3352
  %v3354 = vpop.f32.mrf.mxu0
  %v3355 = vadd.f32 %v3162, %v3354
  %3356 = vmatprep.mubr.bf16.mxu0 %v1535
  %3357 = vmatmul.mubr.bf16.gmra.mxu0 %v1534
  %v3358 = vpop.f32.mrf.mxu0
  %v3359 = vadd.f32 %v3166, %v3358
  %v3360 = vpop.f32.mrf.mxu0
  %v3361 = vadd.f32 %v3168, %v3360
  %v3362 = vpop.f32.mrf.mxu0
  %v3363 = vadd.f32 %v3170, %v3362
  %v3364 = vpop.f32.mrf.mxu0
  %v3365 = vadd.f32 %v3172, %v3364
  %3366 = vdwg.mxu0
  %3367 = vmatprep.subr.bf16.mxu0 %v2585
  %3368 = vmatpush1.bf16.msra.mxu0 %v2584
  %3369 = vmatprep.subr.bf16.mxu0 %v2578
  %3370 = vmatpush1.bf16.msra.mxu0 %v2577
  %3371 = vmatprep.subr.bf16.mxu0 %v2571
  %3372 = vmatpush1.bf16.msra.mxu0 %v2570
  %3373 = vmatprep.subr.bf16.mxu0 %v2564
  %3374 = vmatpush1.bf16.msra.mxu0 %v2563
  %3375 = vmatprep.subr.bf16.mxu0 %v2557
  %3376 = vmatpush1.bf16.msra.mxu0 %v2556
  %3377 = vmatprep.subr.bf16.mxu0 %v2550
  %3378 = vmatpush1.bf16.msra.mxu0 %v2549
  %3379 = vmatprep.subr.bf16.mxu0 %v2543
  %3380 = vmatpush1.bf16.msra.mxu0 %v2542
  %3381 = vmatprep.subr.bf16.mxu0 %v2536
  %3382 = vmatpush1.bf16.msra.mxu0 %v2535
  %3383 = vmatprep.subr.bf16.mxu0 %v2641
  %3384 = vmatpush2.bf16.msra.mxu0 %v2640
  %3385 = vmatprep.subr.bf16.mxu0 %v2634
  %3386 = vmatpush2.bf16.msra.mxu0 %v2633
  %3387 = vmatprep.subr.bf16.mxu0 %v2627
  %3388 = vmatpush2.bf16.msra.mxu0 %v2626
  %3389 = vmatprep.subr.bf16.mxu0 %v2620
  %3390 = vmatpush2.bf16.msra.mxu0 %v2619
  %3391 = vmatprep.subr.bf16.mxu0 %v2613
  %3392 = vmatpush2.bf16.msra.mxu0 %v2612
  %3393 = vmatprep.subr.bf16.mxu0 %v2606
  %3394 = vmatpush2.bf16.msra.mxu0 %v2605
  %3395 = vmatprep.subr.bf16.mxu0 %v2599
  %3396 = vmatpush2.bf16.msra.mxu0 %v2598
  %3397 = vmatprep.subr.bf16.mxu0 %v2592
  %3398 = vmatpush2.bf16.msra.mxu0 %v2591
  %3399 = vmatprep.mubr.bf16.mxu0 %v1473
  %3400 = vmatmul.mubr.bf16.gmra.mxu0 %v1472
  %v3401 = vpop.f32.mrf.mxu0
  %v3402 = vadd.f32 %v1805, %v3401
  %v3403 = vpop.f32.mrf.mxu0
  %v3404 = vadd.f32 %v1809, %v3403
  %v3405 = vpop.f32.mrf.mxu0
  %v3406 = vadd.f32 %v1805, %v3405
  %v3407 = vpop.f32.mrf.mxu0
  %v3408 = vadd.f32 %v1809, %v3407
  %3409 = vmatprep.mubr.bf16.mxu0 %v1477
  %3410 = vmatmul.mubr.bf16.gmra.mxu0 %v1476
  %v3411 = vpop.f32.mrf.mxu0
  %v3412 = vadd.f32 %v1805, %v3411
  %v3413 = vpop.f32.mrf.mxu0
  %v3414 = vadd.f32 %v1809, %v3413
  %v3415 = vpop.f32.mrf.mxu0
  %v3416 = vadd.f32 %v1805, %v3415
  %v3417 = vpop.f32.mrf.mxu0
  %v3418 = vadd.f32 %v1809, %v3417
  %3419 = vmatprep.mubr.bf16.mxu0 %v1481
  %3420 = vmatmul.mubr.bf16.gmra.mxu0 %v1480
  %v3421 = vpop.f32.mrf.mxu0
  %v3422 = vadd.f32 %v1805, %v3421
  %v3423 = vpop.f32.mrf.mxu0
  %v3424 = vadd.f32 %v1809, %v3423
  %v3425 = vpop.f32.mrf.mxu0
  %v3426 = vadd.f32 %v1805, %v3425
  %v3427 = vpop.f32.mrf.mxu0
  %v3428 = vadd.f32 %v1809, %v3427
  %3429 = vmatprep.mubr.bf16.mxu0 %v1485
  %3430 = vmatmul.mubr.bf16.gmra.mxu0 %v1484
  %v3431 = vpop.f32.mrf.mxu0
  %v3432 = vadd.f32 %v1805, %v3431
  %v3433 = vpop.f32.mrf.mxu0
  %v3434 = vadd.f32 %v1809, %v3433
  %v3435 = vpop.f32.mrf.mxu0
  %v3436 = vadd.f32 %v1805, %v3435
  %v3437 = vpop.f32.mrf.mxu0
  %v3438 = vadd.f32 %v1809, %v3437
  %3439 = vmatprep.mubr.bf16.mxu0 %v1489
  %3440 = vmatmul.mubr.bf16.gmra.mxu0 %v1488
  %v3441 = vpop.f32.mrf.mxu0
  %v3442 = vadd.f32 %v1805, %v3441
  %v3443 = vpop.f32.mrf.mxu0
  %v3444 = vadd.f32 %v1809, %v3443
  %v3445 = vpop.f32.mrf.mxu0
  %v3446 = vadd.f32 %v1805, %v3445
  %v3447 = vpop.f32.mrf.mxu0
  %v3448 = vadd.f32 %v1809, %v3447
  %3449 = vmatprep.mubr.bf16.mxu0 %v1493
  %3450 = vmatmul.mubr.bf16.gmra.mxu0 %v1492
  %v3451 = vpop.f32.mrf.mxu0
  %v3452 = vadd.f32 %v1805, %v3451
  %v3453 = vpop.f32.mrf.mxu0
  %v3454 = vadd.f32 %v1809, %v3453
  %v3455 = vpop.f32.mrf.mxu0
  %v3456 = vadd.f32 %v1805, %v3455
  %v3457 = vpop.f32.mrf.mxu0
  %v3458 = vadd.f32 %v1809, %v3457
  %3459 = vmatprep.mubr.bf16.mxu0 %v1497
  %3460 = vmatmul.mubr.bf16.gmra.mxu0 %v1496
  %v3461 = vpop.f32.mrf.mxu0
  %v3462 = vadd.f32 %v1805, %v3461
  %v3463 = vpop.f32.mrf.mxu0
  %v3464 = vadd.f32 %v1809, %v3463
  %v3465 = vpop.f32.mrf.mxu0
  %v3466 = vadd.f32 %v1805, %v3465
  %v3467 = vpop.f32.mrf.mxu0
  %v3468 = vadd.f32 %v1809, %v3467
  %3469 = vmatprep.mubr.bf16.mxu0 %v1501
  %3470 = vmatmul.mubr.bf16.gmra.mxu0 %v1500
  %v3471 = vpop.f32.mrf.mxu0
  %v3472 = vadd.f32 %v1805, %v3471
  %v3473 = vpop.f32.mrf.mxu0
  %v3474 = vadd.f32 %v1809, %v3473
  %v3475 = vpop.f32.mrf.mxu0
  %v3476 = vadd.f32 %v1805, %v3475
  %v3477 = vpop.f32.mrf.mxu0
  %v3478 = vadd.f32 %v1809, %v3477
  %3479 = vmatprep.mubr.bf16.mxu0 %v1505
  %3480 = vmatmul.mubr.bf16.gmra.mxu0 %v1504
  %v3481 = vpop.f32.mrf.mxu0
  %v3482 = vadd.f32 %v1805, %v3481
  %v3483 = vpop.f32.mrf.mxu0
  %v3484 = vadd.f32 %v1809, %v3483
  %v3485 = vpop.f32.mrf.mxu0
  %v3486 = vadd.f32 %v1805, %v3485
  %v3487 = vpop.f32.mrf.mxu0
  %v3488 = vadd.f32 %v1809, %v3487
  %3489 = vmatprep.mubr.bf16.mxu0 %v1509
  %3490 = vmatmul.mubr.bf16.gmra.mxu0 %v1508
  %v3491 = vpop.f32.mrf.mxu0
  %v3492 = vadd.f32 %v1805, %v3491
  %v3493 = vpop.f32.mrf.mxu0
  %v3494 = vadd.f32 %v1809, %v3493
  %v3495 = vpop.f32.mrf.mxu0
  %v3496 = vadd.f32 %v1805, %v3495
  %v3497 = vpop.f32.mrf.mxu0
  %v3498 = vadd.f32 %v1809, %v3497
  %3499 = vmatprep.mubr.bf16.mxu0 %v1513
  %3500 = vmatmul.mubr.bf16.gmra.mxu0 %v1512
  %v3501 = vpop.f32.mrf.mxu0
  %v3502 = vadd.f32 %v1805, %v3501
  %v3503 = vpop.f32.mrf.mxu0
  %v3504 = vadd.f32 %v1809, %v3503
  %v3505 = vpop.f32.mrf.mxu0
  %v3506 = vadd.f32 %v1805, %v3505
  %v3507 = vpop.f32.mrf.mxu0
  %v3508 = vadd.f32 %v1809, %v3507
  %3509 = vmatprep.mubr.bf16.mxu0 %v1517
  %3510 = vmatmul.mubr.bf16.gmra.mxu0 %v1516
  %v3511 = vpop.f32.mrf.mxu0
  %v3512 = vadd.f32 %v1805, %v3511
  %v3513 = vpop.f32.mrf.mxu0
  %v3514 = vadd.f32 %v1809, %v3513
  %v3515 = vpop.f32.mrf.mxu0
  %v3516 = vadd.f32 %v1805, %v3515
  %v3517 = vpop.f32.mrf.mxu0
  %v3518 = vadd.f32 %v1809, %v3517
  %3519 = vmatprep.mubr.bf16.mxu0 %v1521
  %3520 = vmatmul.mubr.bf16.gmra.mxu0 %v1520
  %v3521 = vpop.f32.mrf.mxu0
  %v3522 = vadd.f32 %v1805, %v3521
  %v3523 = vpop.f32.mrf.mxu0
  %v3524 = vadd.f32 %v1809, %v3523
  %v3525 = vpop.f32.mrf.mxu0
  %v3526 = vadd.f32 %v1805, %v3525
  %v3527 = vpop.f32.mrf.mxu0
  %v3528 = vadd.f32 %v1809, %v3527
  %3529 = vmatprep.mubr.bf16.mxu0 %v1525
  %3530 = vmatmul.mubr.bf16.gmra.mxu0 %v1524
  %v3531 = vpop.f32.mrf.mxu0
  %v3532 = vadd.f32 %v1805, %v3531
  %v3533 = vpop.f32.mrf.mxu0
  %v3534 = vadd.f32 %v1809, %v3533
  %v3535 = vpop.f32.mrf.mxu0
  %v3536 = vadd.f32 %v1805, %v3535
  %v3537 = vpop.f32.mrf.mxu0
  %v3538 = vadd.f32 %v1809, %v3537
  %3539 = vmatprep.mubr.bf16.mxu0 %v1529
  %3540 = vmatmul.mubr.bf16.gmra.mxu0 %v1528
  %v3541 = vpop.f32.mrf.mxu0
  %v3542 = vadd.f32 %v1805, %v3541
  %v3543 = vpop.f32.mrf.mxu0
  %v3544 = vadd.f32 %v1809, %v3543
  %v3545 = vpop.f32.mrf.mxu0
  %v3546 = vadd.f32 %v1805, %v3545
  %v3547 = vpop.f32.mrf.mxu0
  %v3548 = vadd.f32 %v1809, %v3547
  %3549 = vmatprep.mubr.bf16.mxu0 %v1533
  %3550 = vmatmul.mubr.bf16.gmra.mxu0 %v1532
  %v3551 = vpop.f32.mrf.mxu0
  %v3552 = vadd.f32 %v1805, %v3551
  %v3553 = vpop.f32.mrf.mxu0
  %v3554 = vadd.f32 %v1809, %v3553
  %v3555 = vpop.f32.mrf.mxu0
  %v3556 = vadd.f32 %v1805, %v3555
  %v3557 = vpop.f32.mrf.mxu0
  %v3558 = vadd.f32 %v1809, %v3557
  %3559 = vdwg.mxu0
  %3560 = vmatprep.subr.bf16.mxu0 %v2697
  %3561 = vmatpush1.bf16.msra.mxu0 %v2696
  %3562 = vmatprep.subr.bf16.mxu0 %v2690
  %3563 = vmatpush1.bf16.msra.mxu0 %v2689
  %3564 = vmatprep.subr.bf16.mxu0 %v2683
  %3565 = vmatpush1.bf16.msra.mxu0 %v2682
  %3566 = vmatprep.subr.bf16.mxu0 %v2676
  %3567 = vmatpush1.bf16.msra.mxu0 %v2675
  %3568 = vmatprep.subr.bf16.mxu0 %v2669
  %3569 = vmatpush1.bf16.msra.mxu0 %v2668
  %3570 = vmatprep.subr.bf16.mxu0 %v2662
  %3571 = vmatpush1.bf16.msra.mxu0 %v2661
  %3572 = vmatprep.subr.bf16.mxu0 %v2655
  %3573 = vmatpush1.bf16.msra.mxu0 %v2654
  %3574 = vmatprep.subr.bf16.mxu0 %v2648
  %3575 = vmatpush1.bf16.msra.mxu0 %v2647
  %3576 = vmatprep.subr.bf16.mxu0 %v2753
  %3577 = vmatpush2.bf16.msra.mxu0 %v2752
  %3578 = vmatprep.subr.bf16.mxu0 %v2746
  %3579 = vmatpush2.bf16.msra.mxu0 %v2745
  %3580 = vmatprep.subr.bf16.mxu0 %v2739
  %3581 = vmatpush2.bf16.msra.mxu0 %v2738
  %3582 = vmatprep.subr.bf16.mxu0 %v2732
  %3583 = vmatpush2.bf16.msra.mxu0 %v2731
  %3584 = vmatprep.subr.bf16.mxu0 %v2725
  %3585 = vmatpush2.bf16.msra.mxu0 %v2724
  %3586 = vmatprep.subr.bf16.mxu0 %v2718
  %3587 = vmatpush2.bf16.msra.mxu0 %v2717
  %3588 = vmatprep.subr.bf16.mxu0 %v2711
  %3589 = vmatpush2.bf16.msra.mxu0 %v2710
  %3590 = vmatprep.subr.bf16.mxu0 %v2704
  %3591 = vmatpush2.bf16.msra.mxu0 %v2703
  %3592 = vmatprep.mubr.bf16.mxu0 %v1475
  %3593 = vmatmul.mubr.bf16.gmra.mxu0 %v1474
  %v3594 = vpop.f32.mrf.mxu0
  %v3595 = vadd.f32 %v3402, %v3594
  %v3596 = vpop.f32.mrf.mxu0
  %v3597 = vadd.f32 %v3404, %v3596
  %v3598 = vpop.f32.mrf.mxu0
  %v3599 = vadd.f32 %v3406, %v3598
  %v3600 = vpop.f32.mrf.mxu0
  %v3601 = vadd.f32 %v3408, %v3600
  %3602 = vmatprep.mubr.bf16.mxu0 %v1479
  %3603 = vmatmul.mubr.bf16.gmra.mxu0 %v1478
  %v3604 = vpop.f32.mrf.mxu0
  %v3605 = vadd.f32 %v3412, %v3604
  %v3606 = vpop.f32.mrf.mxu0
  %v3607 = vadd.f32 %v3414, %v3606
  %v3608 = vpop.f32.mrf.mxu0
  %v3609 = vadd.f32 %v3416, %v3608
  %v3610 = vpop.f32.mrf.mxu0
  %v3611 = vadd.f32 %v3418, %v3610
  %3612 = vmatprep.mubr.bf16.mxu0 %v1483
  %3613 = vmatmul.mubr.bf16.gmra.mxu0 %v1482
  %v3614 = vpop.f32.mrf.mxu0
  %v3615 = vadd.f32 %v3422, %v3614
  %v3616 = vpop.f32.mrf.mxu0
  %v3617 = vadd.f32 %v3424, %v3616
  %v3618 = vpop.f32.mrf.mxu0
  %v3619 = vadd.f32 %v3426, %v3618
  %v3620 = vpop.f32.mrf.mxu0
  %v3621 = vadd.f32 %v3428, %v3620
  %3622 = vmatprep.mubr.bf16.mxu0 %v1487
  %3623 = vmatmul.mubr.bf16.gmra.mxu0 %v1486
  %v3624 = vpop.f32.mrf.mxu0
  %v3625 = vadd.f32 %v3432, %v3624
  %v3626 = vpop.f32.mrf.mxu0
  %v3627 = vadd.f32 %v3434, %v3626
  %v3628 = vpop.f32.mrf.mxu0
  %v3629 = vadd.f32 %v3436, %v3628
  %v3630 = vpop.f32.mrf.mxu0
  %v3631 = vadd.f32 %v3438, %v3630
  %3632 = vmatprep.mubr.bf16.mxu0 %v1491
  %3633 = vmatmul.mubr.bf16.gmra.mxu0 %v1490
  %v3634 = vpop.f32.mrf.mxu0
  %v3635 = vadd.f32 %v3442, %v3634
  %v3636 = vpop.f32.mrf.mxu0
  %v3637 = vadd.f32 %v3444, %v3636
  %v3638 = vpop.f32.mrf.mxu0
  %v3639 = vadd.f32 %v3446, %v3638
  %v3640 = vpop.f32.mrf.mxu0
  %v3641 = vadd.f32 %v3448, %v3640
  %3642 = vmatprep.mubr.bf16.mxu0 %v1495
  %3643 = vmatmul.mubr.bf16.gmra.mxu0 %v1494
  %v3644 = vpop.f32.mrf.mxu0
  %v3645 = vadd.f32 %v3452, %v3644
  %v3646 = vpop.f32.mrf.mxu0
  %v3647 = vadd.f32 %v3454, %v3646
  %v3648 = vpop.f32.mrf.mxu0
  %v3649 = vadd.f32 %v3456, %v3648
  %v3650 = vpop.f32.mrf.mxu0
  %v3651 = vadd.f32 %v3458, %v3650
  %3652 = vmatprep.mubr.bf16.mxu0 %v1499
  %3653 = vmatmul.mubr.bf16.gmra.mxu0 %v1498
  %v3654 = vpop.f32.mrf.mxu0
  %v3655 = vadd.f32 %v3462, %v3654
  %v3656 = vpop.f32.mrf.mxu0
  %v3657 = vadd.f32 %v3464, %v3656
  %v3658 = vpop.f32.mrf.mxu0
  %v3659 = vadd.f32 %v3466, %v3658
  %v3660 = vpop.f32.mrf.mxu0
  %v3661 = vadd.f32 %v3468, %v3660
  %3662 = vmatprep.mubr.bf16.mxu0 %v1503
  %3663 = vmatmul.mubr.bf16.gmra.mxu0 %v1502
  %v3664 = vpop.f32.mrf.mxu0
  %v3665 = vadd.f32 %v3472, %v3664
  %v3666 = vpop.f32.mrf.mxu0
  %v3667 = vadd.f32 %v3474, %v3666
  %v3668 = vpop.f32.mrf.mxu0
  %v3669 = vadd.f32 %v3476, %v3668
  %v3670 = vpop.f32.mrf.mxu0
  %v3671 = vadd.f32 %v3478, %v3670
  %3672 = vmatprep.mubr.bf16.mxu0 %v1507
  %3673 = vmatmul.mubr.bf16.gmra.mxu0 %v1506
  %v3674 = vpop.f32.mrf.mxu0
  %v3675 = vadd.f32 %v3482, %v3674
  %v3676 = vpop.f32.mrf.mxu0
  %v3677 = vadd.f32 %v3484, %v3676
  %v3678 = vpop.f32.mrf.mxu0
  %v3679 = vadd.f32 %v3486, %v3678
  %v3680 = vpop.f32.mrf.mxu0
  %v3681 = vadd.f32 %v3488, %v3680
  %3682 = vmatprep.mubr.bf16.mxu0 %v1511
  %3683 = vmatmul.mubr.bf16.gmra.mxu0 %v1510
  %v3684 = vpop.f32.mrf.mxu0
  %v3685 = vadd.f32 %v3492, %v3684
  %v3686 = vpop.f32.mrf.mxu0
  %v3687 = vadd.f32 %v3494, %v3686
  %v3688 = vpop.f32.mrf.mxu0
  %v3689 = vadd.f32 %v3496, %v3688
  %v3690 = vpop.f32.mrf.mxu0
  %v3691 = vadd.f32 %v3498, %v3690
  %3692 = vmatprep.mubr.bf16.mxu0 %v1515
  %3693 = vmatmul.mubr.bf16.gmra.mxu0 %v1514
  %v3694 = vpop.f32.mrf.mxu0
  %v3695 = vadd.f32 %v3502, %v3694
  %v3696 = vpop.f32.mrf.mxu0
  %v3697 = vadd.f32 %v3504, %v3696
  %v3698 = vpop.f32.mrf.mxu0
  %v3699 = vadd.f32 %v3506, %v3698
  %v3700 = vpop.f32.mrf.mxu0
  %v3701 = vadd.f32 %v3508, %v3700
  %3702 = vmatprep.mubr.bf16.mxu0 %v1519
  %3703 = vmatmul.mubr.bf16.gmra.mxu0 %v1518
  %v3704 = vpop.f32.mrf.mxu0
  %v3705 = vadd.f32 %v3512, %v3704
  %v3706 = vpop.f32.mrf.mxu0
  %v3707 = vadd.f32 %v3514, %v3706
  %v3708 = vpop.f32.mrf.mxu0
  %v3709 = vadd.f32 %v3516, %v3708
  %v3710 = vpop.f32.mrf.mxu0
  %v3711 = vadd.f32 %v3518, %v3710
  %3712 = vmatprep.mubr.bf16.mxu0 %v1523
  %3713 = vmatmul.mubr.bf16.gmra.mxu0 %v1522
  %v3714 = vpop.f32.mrf.mxu0
  %v3715 = vadd.f32 %v3522, %v3714
  %v3716 = vpop.f32.mrf.mxu0
  %v3717 = vadd.f32 %v3524, %v3716
  %v3718 = vpop.f32.mrf.mxu0
  %v3719 = vadd.f32 %v3526, %v3718
  %v3720 = vpop.f32.mrf.mxu0
  %v3721 = vadd.f32 %v3528, %v3720
  %3722 = vmatprep.mubr.bf16.mxu0 %v1527
  %3723 = vmatmul.mubr.bf16.gmra.mxu0 %v1526
  %v3724 = vpop.f32.mrf.mxu0
  %v3725 = vadd.f32 %v3532, %v3724
  %v3726 = vpop.f32.mrf.mxu0
  %v3727 = vadd.f32 %v3534, %v3726
  %v3728 = vpop.f32.mrf.mxu0
  %v3729 = vadd.f32 %v3536, %v3728
  %v3730 = vpop.f32.mrf.mxu0
  %v3731 = vadd.f32 %v3538, %v3730
  %3732 = vmatprep.mubr.bf16.mxu0 %v1531
  %3733 = vmatmul.mubr.bf16.gmra.mxu0 %v1530
  %v3734 = vpop.f32.mrf.mxu0
  %v3735 = vadd.f32 %v3542, %v3734
  %v3736 = vpop.f32.mrf.mxu0
  %v3737 = vadd.f32 %v3544, %v3736
  %v3738 = vpop.f32.mrf.mxu0
  %v3739 = vadd.f32 %v3546, %v3738
  %v3740 = vpop.f32.mrf.mxu0
  %v3741 = vadd.f32 %v3548, %v3740
  %3742 = vmatprep.mubr.bf16.mxu0 %v1535
  %3743 = vmatmul.mubr.bf16.gmra.mxu0 %v1534
  %v3744 = vpop.f32.mrf.mxu0
  %v3745 = vadd.f32 %v3552, %v3744
  %v3746 = vpop.f32.mrf.mxu0
  %v3747 = vadd.f32 %v3554, %v3746
  %v3748 = vpop.f32.mrf.mxu0
  %v3749 = vadd.f32 %v3556, %v3748
  %v3750 = vpop.f32.mrf.mxu0
  %v3751 = vadd.f32 %v3558, %v3750
  %3752 = vdwg.mxu0
  %3753 = vmatprep.subr.bf16.mxu0 %v2587
  %3754 = vmatpush1.bf16.msra.mxu0 %v2586
  %3755 = vmatprep.subr.bf16.mxu0 %v2580
  %3756 = vmatpush1.bf16.msra.mxu0 %v2579
  %3757 = vmatprep.subr.bf16.mxu0 %v2573
  %3758 = vmatpush1.bf16.msra.mxu0 %v2572
  %3759 = vmatprep.subr.bf16.mxu0 %v2566
  %3760 = vmatpush1.bf16.msra.mxu0 %v2565
  %3761 = vmatprep.subr.bf16.mxu0 %v2559
  %3762 = vmatpush1.bf16.msra.mxu0 %v2558
  %3763 = vmatprep.subr.bf16.mxu0 %v2552
  %3764 = vmatpush1.bf16.msra.mxu0 %v2551
  %3765 = vmatprep.subr.bf16.mxu0 %v2545
  %3766 = vmatpush1.bf16.msra.mxu0 %v2544
  %3767 = vmatprep.subr.bf16.mxu0 %v2538
  %3768 = vmatpush1.bf16.msra.mxu0 %v2537
  %3769 = vmatprep.subr.bf16.mxu0 %v2643
  %3770 = vmatpush2.bf16.msra.mxu0 %v2642
  %3771 = vmatprep.subr.bf16.mxu0 %v2636
  %3772 = vmatpush2.bf16.msra.mxu0 %v2635
  %3773 = vmatprep.subr.bf16.mxu0 %v2629
  %3774 = vmatpush2.bf16.msra.mxu0 %v2628
  %3775 = vmatprep.subr.bf16.mxu0 %v2622
  %3776 = vmatpush2.bf16.msra.mxu0 %v2621
  %3777 = vmatprep.subr.bf16.mxu0 %v2615
  %3778 = vmatpush2.bf16.msra.mxu0 %v2614
  %3779 = vmatprep.subr.bf16.mxu0 %v2608
  %3780 = vmatpush2.bf16.msra.mxu0 %v2607
  %3781 = vmatprep.subr.bf16.mxu0 %v2601
  %3782 = vmatpush2.bf16.msra.mxu0 %v2600
  %3783 = vmatprep.subr.bf16.mxu0 %v2594
  %3784 = vmatpush2.bf16.msra.mxu0 %v2593
  %3785 = vmatprep.mubr.bf16.mxu0 %v1473
  %3786 = vmatmul.mubr.bf16.gmra.mxu0 %v1472
  %v3787 = vpop.f32.mrf.mxu0
  %v3788 = vadd.f32 %v1813, %v3787
  %v3789 = vpop.f32.mrf.mxu0
  %v3790 = vadd.f32 %v1817, %v3789
  %v3791 = vpop.f32.mrf.mxu0
  %v3792 = vadd.f32 %v1813, %v3791
  %v3793 = vpop.f32.mrf.mxu0
  %v3794 = vadd.f32 %v1817, %v3793
  %3795 = vmatprep.mubr.bf16.mxu0 %v1477
  %3796 = vmatmul.mubr.bf16.gmra.mxu0 %v1476
  %v3797 = vpop.f32.mrf.mxu0
  %v3798 = vadd.f32 %v1813, %v3797
  %v3799 = vpop.f32.mrf.mxu0
  %v3800 = vadd.f32 %v1817, %v3799
  %v3801 = vpop.f32.mrf.mxu0
  %v3802 = vadd.f32 %v1813, %v3801
  %v3803 = vpop.f32.mrf.mxu0
  %v3804 = vadd.f32 %v1817, %v3803
  %3805 = vmatprep.mubr.bf16.mxu0 %v1481
  %3806 = vmatmul.mubr.bf16.gmra.mxu0 %v1480
  %v3807 = vpop.f32.mrf.mxu0
  %v3808 = vadd.f32 %v1813, %v3807
  %v3809 = vpop.f32.mrf.mxu0
  %v3810 = vadd.f32 %v1817, %v3809
  %v3811 = vpop.f32.mrf.mxu0
  %v3812 = vadd.f32 %v1813, %v3811
  %v3813 = vpop.f32.mrf.mxu0
  %v3814 = vadd.f32 %v1817, %v3813
  %3815 = vmatprep.mubr.bf16.mxu0 %v1485
  %3816 = vmatmul.mubr.bf16.gmra.mxu0 %v1484
  %v3817 = vpop.f32.mrf.mxu0
  %v3818 = vadd.f32 %v1813, %v3817
  %v3819 = vpop.f32.mrf.mxu0
  %v3820 = vadd.f32 %v1817, %v3819
  %v3821 = vpop.f32.mrf.mxu0
  %v3822 = vadd.f32 %v1813, %v3821
  %v3823 = vpop.f32.mrf.mxu0
  %v3824 = vadd.f32 %v1817, %v3823
  %3825 = vmatprep.mubr.bf16.mxu0 %v1489
  %3826 = vmatmul.mubr.bf16.gmra.mxu0 %v1488
  %v3827 = vpop.f32.mrf.mxu0
  %v3828 = vadd.f32 %v1813, %v3827
  %v3829 = vpop.f32.mrf.mxu0
  %v3830 = vadd.f32 %v1817, %v3829
  %v3831 = vpop.f32.mrf.mxu0
  %v3832 = vadd.f32 %v1813, %v3831
  %v3833 = vpop.f32.mrf.mxu0
  %v3834 = vadd.f32 %v1817, %v3833
  %3835 = vmatprep.mubr.bf16.mxu0 %v1493
  %3836 = vmatmul.mubr.bf16.gmra.mxu0 %v1492
  %v3837 = vpop.f32.mrf.mxu0
  %v3838 = vadd.f32 %v1813, %v3837
  %v3839 = vpop.f32.mrf.mxu0
  %v3840 = vadd.f32 %v1817, %v3839
  %v3841 = vpop.f32.mrf.mxu0
  %v3842 = vadd.f32 %v1813, %v3841
  %v3843 = vpop.f32.mrf.mxu0
  %v3844 = vadd.f32 %v1817, %v3843
  %3845 = vmatprep.mubr.bf16.mxu0 %v1497
  %3846 = vmatmul.mubr.bf16.gmra.mxu0 %v1496
  %v3847 = vpop.f32.mrf.mxu0
  %v3848 = vadd.f32 %v1813, %v3847
  %v3849 = vpop.f32.mrf.mxu0
  %v3850 = vadd.f32 %v1817, %v3849
  %v3851 = vpop.f32.mrf.mxu0
  %v3852 = vadd.f32 %v1813, %v3851
  %v3853 = vpop.f32.mrf.mxu0
  %v3854 = vadd.f32 %v1817, %v3853
  %3855 = vmatprep.mubr.bf16.mxu0 %v1501
  %3856 = vmatmul.mubr.bf16.gmra.mxu0 %v1500
  %v3857 = vpop.f32.mrf.mxu0
  %v3858 = vadd.f32 %v1813, %v3857
  %v3859 = vpop.f32.mrf.mxu0
  %v3860 = vadd.f32 %v1817, %v3859
  %v3861 = vpop.f32.mrf.mxu0
  %v3862 = vadd.f32 %v1813, %v3861
  %v3863 = vpop.f32.mrf.mxu0
  %v3864 = vadd.f32 %v1817, %v3863
  %3865 = vmatprep.mubr.bf16.mxu0 %v1505
  %3866 = vmatmul.mubr.bf16.gmra.mxu0 %v1504
  %v3867 = vpop.f32.mrf.mxu0
  %v3868 = vadd.f32 %v1813, %v3867
  %v3869 = vpop.f32.mrf.mxu0
  %v3870 = vadd.f32 %v1817, %v3869
  %v3871 = vpop.f32.mrf.mxu0
  %v3872 = vadd.f32 %v1813, %v3871
  %v3873 = vpop.f32.mrf.mxu0
  %v3874 = vadd.f32 %v1817, %v3873
  %3875 = vmatprep.mubr.bf16.mxu0 %v1509
  %3876 = vmatmul.mubr.bf16.gmra.mxu0 %v1508
  %v3877 = vpop.f32.mrf.mxu0
  %v3878 = vadd.f32 %v1813, %v3877
  %v3879 = vpop.f32.mrf.mxu0
  %v3880 = vadd.f32 %v1817, %v3879
  %v3881 = vpop.f32.mrf.mxu0
  %v3882 = vadd.f32 %v1813, %v3881
  %v3883 = vpop.f32.mrf.mxu0
  %v3884 = vadd.f32 %v1817, %v3883
  %3885 = vmatprep.mubr.bf16.mxu0 %v1513
  %3886 = vmatmul.mubr.bf16.gmra.mxu0 %v1512
  %v3887 = vpop.f32.mrf.mxu0
  %v3888 = vadd.f32 %v1813, %v3887
  %v3889 = vpop.f32.mrf.mxu0
  %v3890 = vadd.f32 %v1817, %v3889
  %v3891 = vpop.f32.mrf.mxu0
  %v3892 = vadd.f32 %v1813, %v3891
  %v3893 = vpop.f32.mrf.mxu0
  %v3894 = vadd.f32 %v1817, %v3893
  %3895 = vmatprep.mubr.bf16.mxu0 %v1517
  %3896 = vmatmul.mubr.bf16.gmra.mxu0 %v1516
  %v3897 = vpop.f32.mrf.mxu0
  %v3898 = vadd.f32 %v1813, %v3897
  %v3899 = vpop.f32.mrf.mxu0
  %v3900 = vadd.f32 %v1817, %v3899
  %v3901 = vpop.f32.mrf.mxu0
  %v3902 = vadd.f32 %v1813, %v3901
  %v3903 = vpop.f32.mrf.mxu0
  %v3904 = vadd.f32 %v1817, %v3903
  %3905 = vmatprep.mubr.bf16.mxu0 %v1521
  %3906 = vmatmul.mubr.bf16.gmra.mxu0 %v1520
  %v3907 = vpop.f32.mrf.mxu0
  %v3908 = vadd.f32 %v1813, %v3907
  %v3909 = vpop.f32.mrf.mxu0
  %v3910 = vadd.f32 %v1817, %v3909
  %v3911 = vpop.f32.mrf.mxu0
  %v3912 = vadd.f32 %v1813, %v3911
  %v3913 = vpop.f32.mrf.mxu0
  %v3914 = vadd.f32 %v1817, %v3913
  %3915 = vmatprep.mubr.bf16.mxu0 %v1525
  %3916 = vmatmul.mubr.bf16.gmra.mxu0 %v1524
  %v3917 = vpop.f32.mrf.mxu0
  %v3918 = vadd.f32 %v1813, %v3917
  %v3919 = vpop.f32.mrf.mxu0
  %v3920 = vadd.f32 %v1817, %v3919
  %v3921 = vpop.f32.mrf.mxu0
  %v3922 = vadd.f32 %v1813, %v3921
  %v3923 = vpop.f32.mrf.mxu0
  %v3924 = vadd.f32 %v1817, %v3923
  %3925 = vmatprep.mubr.bf16.mxu0 %v1529
  %3926 = vmatmul.mubr.bf16.gmra.mxu0 %v1528
  %v3927 = vpop.f32.mrf.mxu0
  %v3928 = vadd.f32 %v1813, %v3927
  %v3929 = vpop.f32.mrf.mxu0
  %v3930 = vadd.f32 %v1817, %v3929
  %v3931 = vpop.f32.mrf.mxu0
  %v3932 = vadd.f32 %v1813, %v3931
  %v3933 = vpop.f32.mrf.mxu0
  %v3934 = vadd.f32 %v1817, %v3933
  %3935 = vmatprep.mubr.bf16.mxu0 %v1533
  %3936 = vmatmul.mubr.bf16.gmra.mxu0 %v1532
  %v3937 = vpop.f32.mrf.mxu0
  %v3938 = vadd.f32 %v1813, %v3937
  %v3939 = vpop.f32.mrf.mxu0
  %v3940 = vadd.f32 %v1817, %v3939
  %v3941 = vpop.f32.mrf.mxu0
  %v3942 = vadd.f32 %v1813, %v3941
  %v3943 = vpop.f32.mrf.mxu0
  %v3944 = vadd.f32 %v1817, %v3943
  %3945 = vdwg.mxu0
  %3946 = vmatprep.subr.bf16.mxu0 %v2699
  %3947 = vmatpush1.bf16.msra.mxu0 %v2698
  %3948 = vmatprep.subr.bf16.mxu0 %v2692
  %3949 = vmatpush1.bf16.msra.mxu0 %v2691
  %3950 = vmatprep.subr.bf16.mxu0 %v2685
  %3951 = vmatpush1.bf16.msra.mxu0 %v2684
  %3952 = vmatprep.subr.bf16.mxu0 %v2678
  %3953 = vmatpush1.bf16.msra.mxu0 %v2677
  %3954 = vmatprep.subr.bf16.mxu0 %v2671
  %3955 = vmatpush1.bf16.msra.mxu0 %v2670
  %3956 = vmatprep.subr.bf16.mxu0 %v2664
  %3957 = vmatpush1.bf16.msra.mxu0 %v2663
  %3958 = vmatprep.subr.bf16.mxu0 %v2657
  %3959 = vmatpush1.bf16.msra.mxu0 %v2656
  %3960 = vmatprep.subr.bf16.mxu0 %v2650
  %3961 = vmatpush1.bf16.msra.mxu0 %v2649
  %3962 = vmatprep.subr.bf16.mxu0 %v2755
  %3963 = vmatpush2.bf16.msra.mxu0 %v2754
  %3964 = vmatprep.subr.bf16.mxu0 %v2748
  %3965 = vmatpush2.bf16.msra.mxu0 %v2747
  %3966 = vmatprep.subr.bf16.mxu0 %v2741
  %3967 = vmatpush2.bf16.msra.mxu0 %v2740
  %3968 = vmatprep.subr.bf16.mxu0 %v2734
  %3969 = vmatpush2.bf16.msra.mxu0 %v2733
  %3970 = vmatprep.subr.bf16.mxu0 %v2727
  %3971 = vmatpush2.bf16.msra.mxu0 %v2726
  %3972 = vmatprep.subr.bf16.mxu0 %v2720
  %3973 = vmatpush2.bf16.msra.mxu0 %v2719
  %3974 = vmatprep.subr.bf16.mxu0 %v2713
  %3975 = vmatpush2.bf16.msra.mxu0 %v2712
  %3976 = vmatprep.subr.bf16.mxu0 %v2706
  %3977 = vmatpush2.bf16.msra.mxu0 %v2705
  %3978 = vmatprep.mubr.bf16.mxu0 %v1475
  %3979 = vmatmul.mubr.bf16.gmra.mxu0 %v1474
  %v3980 = vpop.f32.mrf.mxu0
  %v3981 = vadd.f32 %v3788, %v3980
  %v3982 = vpop.f32.mrf.mxu0
  %v3983 = vadd.f32 %v3790, %v3982
  %v3984 = vpop.f32.mrf.mxu0
  %v3985 = vadd.f32 %v3792, %v3984
  %v3986 = vpop.f32.mrf.mxu0
  %v3987 = vadd.f32 %v3794, %v3986
  %3988 = vmatprep.mubr.bf16.mxu0 %v1479
  %3989 = vmatmul.mubr.bf16.gmra.mxu0 %v1478
  %v3990 = vpop.f32.mrf.mxu0
  %v3991 = vadd.f32 %v3798, %v3990
  %v3992 = vpop.f32.mrf.mxu0
  %v3993 = vadd.f32 %v3800, %v3992
  %v3994 = vpop.f32.mrf.mxu0
  %v3995 = vadd.f32 %v3802, %v3994
  %v3996 = vpop.f32.mrf.mxu0
  %v3997 = vadd.f32 %v3804, %v3996
  %3998 = vmatprep.mubr.bf16.mxu0 %v1483
  %3999 = vmatmul.mubr.bf16.gmra.mxu0 %v1482
  %v4000 = vpop.f32.mrf.mxu0
  %v4001 = vadd.f32 %v3808, %v4000
  %v4002 = vpop.f32.mrf.mxu0
  %v4003 = vadd.f32 %v3810, %v4002
  %v4004 = vpop.f32.mrf.mxu0
  %v4005 = vadd.f32 %v3812, %v4004
  %v4006 = vpop.f32.mrf.mxu0
  %v4007 = vadd.f32 %v3814, %v4006
  %4008 = vmatprep.mubr.bf16.mxu0 %v1487
  %4009 = vmatmul.mubr.bf16.gmra.mxu0 %v1486
  %v4010 = vpop.f32.mrf.mxu0
  %v4011 = vadd.f32 %v3818, %v4010
  %v4012 = vpop.f32.mrf.mxu0
  %v4013 = vadd.f32 %v3820, %v4012
  %v4014 = vpop.f32.mrf.mxu0
  %v4015 = vadd.f32 %v3822, %v4014
  %v4016 = vpop.f32.mrf.mxu0
  %v4017 = vadd.f32 %v3824, %v4016
  %4018 = vmatprep.mubr.bf16.mxu0 %v1491
  %4019 = vmatmul.mubr.bf16.gmra.mxu0 %v1490
  %v4020 = vpop.f32.mrf.mxu0
  %v4021 = vadd.f32 %v3828, %v4020
  %v4022 = vpop.f32.mrf.mxu0
  %v4023 = vadd.f32 %v3830, %v4022
  %v4024 = vpop.f32.mrf.mxu0
  %v4025 = vadd.f32 %v3832, %v4024
  %v4026 = vpop.f32.mrf.mxu0
  %v4027 = vadd.f32 %v3834, %v4026
  %4028 = vmatprep.mubr.bf16.mxu0 %v1495
  %4029 = vmatmul.mubr.bf16.gmra.mxu0 %v1494
  %v4030 = vpop.f32.mrf.mxu0
  %v4031 = vadd.f32 %v3838, %v4030
  %v4032 = vpop.f32.mrf.mxu0
  %v4033 = vadd.f32 %v3840, %v4032
  %v4034 = vpop.f32.mrf.mxu0
  %v4035 = vadd.f32 %v3842, %v4034
  %v4036 = vpop.f32.mrf.mxu0
  %v4037 = vadd.f32 %v3844, %v4036
  %4038 = vmatprep.mubr.bf16.mxu0 %v1499
  %4039 = vmatmul.mubr.bf16.gmra.mxu0 %v1498
  %v4040 = vpop.f32.mrf.mxu0
  %v4041 = vadd.f32 %v3848, %v4040
  %v4042 = vpop.f32.mrf.mxu0
  %v4043 = vadd.f32 %v3850, %v4042
  %v4044 = vpop.f32.mrf.mxu0
  %v4045 = vadd.f32 %v3852, %v4044
  %v4046 = vpop.f32.mrf.mxu0
  %v4047 = vadd.f32 %v3854, %v4046
  %4048 = vmatprep.mubr.bf16.mxu0 %v1503
  %4049 = vmatmul.mubr.bf16.gmra.mxu0 %v1502
  %v4050 = vpop.f32.mrf.mxu0
  %v4051 = vadd.f32 %v3858, %v4050
  %v4052 = vpop.f32.mrf.mxu0
  %v4053 = vadd.f32 %v3860, %v4052
  %v4054 = vpop.f32.mrf.mxu0
  %v4055 = vadd.f32 %v3862, %v4054
  %v4056 = vpop.f32.mrf.mxu0
  %v4057 = vadd.f32 %v3864, %v4056
  %4058 = vmatprep.mubr.bf16.mxu0 %v1507
  %4059 = vmatmul.mubr.bf16.gmra.mxu0 %v1506
  %v4060 = vpop.f32.mrf.mxu0
  %v4061 = vadd.f32 %v3868, %v4060
  %v4062 = vpop.f32.mrf.mxu0
  %v4063 = vadd.f32 %v3870, %v4062
  %v4064 = vpop.f32.mrf.mxu0
  %v4065 = vadd.f32 %v3872, %v4064
  %v4066 = vpop.f32.mrf.mxu0
  %v4067 = vadd.f32 %v3874, %v4066
  %4068 = vmatprep.mubr.bf16.mxu0 %v1511
  %4069 = vmatmul.mubr.bf16.gmra.mxu0 %v1510
  %v4070 = vpop.f32.mrf.mxu0
  %v4071 = vadd.f32 %v3878, %v4070
  %v4072 = vpop.f32.mrf.mxu0
  %v4073 = vadd.f32 %v3880, %v4072
  %v4074 = vpop.f32.mrf.mxu0
  %v4075 = vadd.f32 %v3882, %v4074
  %v4076 = vpop.f32.mrf.mxu0
  %v4077 = vadd.f32 %v3884, %v4076
  %4078 = vmatprep.mubr.bf16.mxu0 %v1515
  %4079 = vmatmul.mubr.bf16.gmra.mxu0 %v1514
  %v4080 = vpop.f32.mrf.mxu0
  %v4081 = vadd.f32 %v3888, %v4080
  %v4082 = vpop.f32.mrf.mxu0
  %v4083 = vadd.f32 %v3890, %v4082
  %v4084 = vpop.f32.mrf.mxu0
  %v4085 = vadd.f32 %v3892, %v4084
  %v4086 = vpop.f32.mrf.mxu0
  %v4087 = vadd.f32 %v3894, %v4086
  %4088 = vmatprep.mubr.bf16.mxu0 %v1519
  %4089 = vmatmul.mubr.bf16.gmra.mxu0 %v1518
  %v4090 = vpop.f32.mrf.mxu0
  %v4091 = vadd.f32 %v3898, %v4090
  %v4092 = vpop.f32.mrf.mxu0
  %v4093 = vadd.f32 %v3900, %v4092
  %v4094 = vpop.f32.mrf.mxu0
  %v4095 = vadd.f32 %v3902, %v4094
  %v4096 = vpop.f32.mrf.mxu0
  %v4097 = vadd.f32 %v3904, %v4096
  %4098 = vmatprep.mubr.bf16.mxu0 %v1523
  %4099 = vmatmul.mubr.bf16.gmra.mxu0 %v1522
  %v4100 = vpop.f32.mrf.mxu0
  %v4101 = vadd.f32 %v3908, %v4100
  %v4102 = vpop.f32.mrf.mxu0
  %v4103 = vadd.f32 %v3910, %v4102
  %v4104 = vpop.f32.mrf.mxu0
  %v4105 = vadd.f32 %v3912, %v4104
  %v4106 = vpop.f32.mrf.mxu0
  %v4107 = vadd.f32 %v3914, %v4106
  %4108 = vmatprep.mubr.bf16.mxu0 %v1527
  %4109 = vmatmul.mubr.bf16.gmra.mxu0 %v1526
  %v4110 = vpop.f32.mrf.mxu0
  %v4111 = vadd.f32 %v3918, %v4110
  %v4112 = vpop.f32.mrf.mxu0
  %v4113 = vadd.f32 %v3920, %v4112
  %v4114 = vpop.f32.mrf.mxu0
  %v4115 = vadd.f32 %v3922, %v4114
  %v4116 = vpop.f32.mrf.mxu0
  %v4117 = vadd.f32 %v3924, %v4116
  %4118 = vmatprep.mubr.bf16.mxu0 %v1531
  %4119 = vmatmul.mubr.bf16.gmra.mxu0 %v1530
  %v4120 = vpop.f32.mrf.mxu0
  %v4121 = vadd.f32 %v3928, %v4120
  %v4122 = vpop.f32.mrf.mxu0
  %v4123 = vadd.f32 %v3930, %v4122
  %v4124 = vpop.f32.mrf.mxu0
  %v4125 = vadd.f32 %v3932, %v4124
  %v4126 = vpop.f32.mrf.mxu0
  %v4127 = vadd.f32 %v3934, %v4126
  %4128 = vmatprep.mubr.bf16.mxu0 %v1535
  %4129 = vmatmul.mubr.bf16.gmra.mxu0 %v1534
  %v4130 = vpop.f32.mrf.mxu0
  %v4131 = vadd.f32 %v3938, %v4130
  %v4132 = vpop.f32.mrf.mxu0
  %v4133 = vadd.f32 %v3940, %v4132
  %v4134 = vpop.f32.mrf.mxu0
  %v4135 = vadd.f32 %v3942, %v4134
  %v4136 = vpop.f32.mrf.mxu0
  %v4137 = vadd.f32 %v3944, %v4136
  %4138 = vdwg.mxu0
  %4139 = vmatprep.subr.bf16.mxu0 0
  %4140 = vmatpush1.bf16.msra.mxu0 %v2588
  %4141 = vmatprep.subr.bf16.mxu0 0
  %4142 = vmatpush1.bf16.msra.mxu0 %v2581
  %4143 = vmatprep.subr.bf16.mxu0 0
  %4144 = vmatpush1.bf16.msra.mxu0 %v2574
  %4145 = vmatprep.subr.bf16.mxu0 0
  %4146 = vmatpush1.bf16.msra.mxu0 %v2567
  %4147 = vmatprep.subr.bf16.mxu0 0
  %4148 = vmatpush1.bf16.msra.mxu0 %v2560
  %4149 = vmatprep.subr.bf16.mxu0 0
  %4150 = vmatpush1.bf16.msra.mxu0 %v2553
  %4151 = vmatprep.subr.bf16.mxu0 0
  %4152 = vmatpush1.bf16.msra.mxu0 %v2546
  %4153 = vmatprep.subr.bf16.mxu0 0
  %4154 = vmatpush1.bf16.msra.mxu0 %v2539
  %4155 = vmatprep.subr.bf16.mxu0 0
  %4156 = vmatpush2.bf16.msra.mxu0 %v2644
  %4157 = vmatprep.subr.bf16.mxu0 0
  %4158 = vmatpush2.bf16.msra.mxu0 %v2637
  %4159 = vmatprep.subr.bf16.mxu0 0
  %4160 = vmatpush2.bf16.msra.mxu0 %v2630
  %4161 = vmatprep.subr.bf16.mxu0 0
  %4162 = vmatpush2.bf16.msra.mxu0 %v2623
  %4163 = vmatprep.subr.bf16.mxu0 0
  %4164 = vmatpush2.bf16.msra.mxu0 %v2616
  %4165 = vmatprep.subr.bf16.mxu0 0
  %4166 = vmatpush2.bf16.msra.mxu0 %v2609
  %4167 = vmatprep.subr.bf16.mxu0 0
  %4168 = vmatpush2.bf16.msra.mxu0 %v2602
  %4169 = vmatprep.subr.bf16.mxu0 0
  %4170 = vmatpush2.bf16.msra.mxu0 %v2595
  %4171 = vmatprep.mubr.bf16.mxu0 %v1473
  %4172 = vmatmul.mubr.bf16.gmra.mxu0 %v1472
  %v4173 = vpop.f32.mrf.mxu0
  %v4174 = vadd.f32 %v1821, %v4173
  %v4175 = vpop.f32.mrf.mxu0
  %v4176 = vpop.f32.mrf.mxu0
  %v4177 = vadd.f32 %v1821, %v4176
  %v4178 = vpop.f32.mrf.mxu0
  %4179 = vmatprep.mubr.bf16.mxu0 %v1477
  %4180 = vmatmul.mubr.bf16.gmra.mxu0 %v1476
  %v4181 = vpop.f32.mrf.mxu0
  %v4182 = vadd.f32 %v1821, %v4181
  %v4183 = vpop.f32.mrf.mxu0
  %v4184 = vpop.f32.mrf.mxu0
  %v4185 = vadd.f32 %v1821, %v4184
  %v4186 = vpop.f32.mrf.mxu0
  %4187 = vmatprep.mubr.bf16.mxu0 %v1481
  %4188 = vmatmul.mubr.bf16.gmra.mxu0 %v1480
  %v4189 = vpop.f32.mrf.mxu0
  %v4190 = vadd.f32 %v1821, %v4189
  %v4191 = vpop.f32.mrf.mxu0
  %v4192 = vpop.f32.mrf.mxu0
  %v4193 = vadd.f32 %v1821, %v4192
  %v4194 = vpop.f32.mrf.mxu0
  %4195 = vmatprep.mubr.bf16.mxu0 %v1485
  %4196 = vmatmul.mubr.bf16.gmra.mxu0 %v1484
  %v4197 = vpop.f32.mrf.mxu0
  %v4198 = vadd.f32 %v1821, %v4197
  %v4199 = vpop.f32.mrf.mxu0
  %v4200 = vpop.f32.mrf.mxu0
  %v4201 = vadd.f32 %v1821, %v4200
  %v4202 = vpop.f32.mrf.mxu0
  %4203 = vmatprep.mubr.bf16.mxu0 %v1489
  %4204 = vmatmul.mubr.bf16.gmra.mxu0 %v1488
  %v4205 = vpop.f32.mrf.mxu0
  %v4206 = vadd.f32 %v1821, %v4205
  %v4207 = vpop.f32.mrf.mxu0
  %v4208 = vpop.f32.mrf.mxu0
  %v4209 = vadd.f32 %v1821, %v4208
  %v4210 = vpop.f32.mrf.mxu0
  %4211 = vmatprep.mubr.bf16.mxu0 %v1493
  %4212 = vmatmul.mubr.bf16.gmra.mxu0 %v1492
  %v4213 = vpop.f32.mrf.mxu0
  %v4214 = vadd.f32 %v1821, %v4213
  %v4215 = vpop.f32.mrf.mxu0
  %v4216 = vpop.f32.mrf.mxu0
  %v4217 = vadd.f32 %v1821, %v4216
  %v4218 = vpop.f32.mrf.mxu0
  %4219 = vmatprep.mubr.bf16.mxu0 %v1497
  %4220 = vmatmul.mubr.bf16.gmra.mxu0 %v1496
  %v4221 = vpop.f32.mrf.mxu0
  %v4222 = vadd.f32 %v1821, %v4221
  %v4223 = vpop.f32.mrf.mxu0
  %v4224 = vpop.f32.mrf.mxu0
  %v4225 = vadd.f32 %v1821, %v4224
  %v4226 = vpop.f32.mrf.mxu0
  %4227 = vmatprep.mubr.bf16.mxu0 %v1501
  %4228 = vmatmul.mubr.bf16.gmra.mxu0 %v1500
  %v4229 = vpop.f32.mrf.mxu0
  %v4230 = vadd.f32 %v1821, %v4229
  %v4231 = vpop.f32.mrf.mxu0
  %v4232 = vpop.f32.mrf.mxu0
  %v4233 = vadd.f32 %v1821, %v4232
  %v4234 = vpop.f32.mrf.mxu0
  %4235 = vmatprep.mubr.bf16.mxu0 %v1505
  %4236 = vmatmul.mubr.bf16.gmra.mxu0 %v1504
  %v4237 = vpop.f32.mrf.mxu0
  %v4238 = vadd.f32 %v1821, %v4237
  %v4239 = vpop.f32.mrf.mxu0
  %v4240 = vpop.f32.mrf.mxu0
  %v4241 = vadd.f32 %v1821, %v4240
  %v4242 = vpop.f32.mrf.mxu0
  %4243 = vmatprep.mubr.bf16.mxu0 %v1509
  %4244 = vmatmul.mubr.bf16.gmra.mxu0 %v1508
  %v4245 = vpop.f32.mrf.mxu0
  %v4246 = vadd.f32 %v1821, %v4245
  %v4247 = vpop.f32.mrf.mxu0
  %v4248 = vpop.f32.mrf.mxu0
  %v4249 = vadd.f32 %v1821, %v4248
  %v4250 = vpop.f32.mrf.mxu0
  %4251 = vmatprep.mubr.bf16.mxu0 %v1513
  %4252 = vmatmul.mubr.bf16.gmra.mxu0 %v1512
  %v4253 = vpop.f32.mrf.mxu0
  %v4254 = vadd.f32 %v1821, %v4253
  %v4255 = vpop.f32.mrf.mxu0
  %v4256 = vpop.f32.mrf.mxu0
  %v4257 = vadd.f32 %v1821, %v4256
  %v4258 = vpop.f32.mrf.mxu0
  %4259 = vmatprep.mubr.bf16.mxu0 %v1517
  %4260 = vmatmul.mubr.bf16.gmra.mxu0 %v1516
  %v4261 = vpop.f32.mrf.mxu0
  %v4262 = vadd.f32 %v1821, %v4261
  %v4263 = vpop.f32.mrf.mxu0
  %v4264 = vpop.f32.mrf.mxu0
  %v4265 = vadd.f32 %v1821, %v4264
  %v4266 = vpop.f32.mrf.mxu0
  %4267 = vmatprep.mubr.bf16.mxu0 %v1521
  %4268 = vmatmul.mubr.bf16.gmra.mxu0 %v1520
  %v4269 = vpop.f32.mrf.mxu0
  %v4270 = vadd.f32 %v1821, %v4269
  %v4271 = vpop.f32.mrf.mxu0
  %v4272 = vpop.f32.mrf.mxu0
  %v4273 = vadd.f32 %v1821, %v4272
  %v4274 = vpop.f32.mrf.mxu0
  %4275 = vmatprep.mubr.bf16.mxu0 %v1525
  %4276 = vmatmul.mubr.bf16.gmra.mxu0 %v1524
  %v4277 = vpop.f32.mrf.mxu0
  %v4278 = vadd.f32 %v1821, %v4277
  %v4279 = vpop.f32.mrf.mxu0
  %v4280 = vpop.f32.mrf.mxu0
  %v4281 = vadd.f32 %v1821, %v4280
  %v4282 = vpop.f32.mrf.mxu0
  %4283 = vmatprep.mubr.bf16.mxu0 %v1529
  %4284 = vmatmul.mubr.bf16.gmra.mxu0 %v1528
  %v4285 = vpop.f32.mrf.mxu0
  %v4286 = vadd.f32 %v1821, %v4285
  %v4287 = vpop.f32.mrf.mxu0
  %v4288 = vpop.f32.mrf.mxu0
  %v4289 = vadd.f32 %v1821, %v4288
  %v4290 = vpop.f32.mrf.mxu0
  %4291 = vmatprep.mubr.bf16.mxu0 %v1533
  %4292 = vmatmul.mubr.bf16.gmra.mxu0 %v1532
  %v4293 = vpop.f32.mrf.mxu0
  %v4294 = vadd.f32 %v1821, %v4293
  %v4295 = vpop.f32.mrf.mxu0
  %v4296 = vpop.f32.mrf.mxu0
  %v4297 = vadd.f32 %v1821, %v4296
  %v4298 = vpop.f32.mrf.mxu0
  %4299 = vdwg.mxu0
  %4300 = vmatprep.subr.bf16.mxu0 0
  %4301 = vmatpush1.bf16.msra.mxu0 %v2700
  %4302 = vmatprep.subr.bf16.mxu0 0
  %4303 = vmatpush1.bf16.msra.mxu0 %v2693
  %4304 = vmatprep.subr.bf16.mxu0 0
  %4305 = vmatpush1.bf16.msra.mxu0 %v2686
  %4306 = vmatprep.subr.bf16.mxu0 0
  %4307 = vmatpush1.bf16.msra.mxu0 %v2679
  %4308 = vmatprep.subr.bf16.mxu0 0
  %4309 = vmatpush1.bf16.msra.mxu0 %v2672
  %4310 = vmatprep.subr.bf16.mxu0 0
  %4311 = vmatpush1.bf16.msra.mxu0 %v2665
  %4312 = vmatprep.subr.bf16.mxu0 0
  %4313 = vmatpush1.bf16.msra.mxu0 %v2658
  %4314 = vmatprep.subr.bf16.mxu0 0
  %4315 = vmatpush1.bf16.msra.mxu0 %v2651
  %4316 = vmatprep.subr.bf16.mxu0 0
  %4317 = vmatpush2.bf16.msra.mxu0 %v2756
  %4318 = vmatprep.subr.bf16.mxu0 0
  %4319 = vmatpush2.bf16.msra.mxu0 %v2749
  %4320 = vmatprep.subr.bf16.mxu0 0
  %4321 = vmatpush2.bf16.msra.mxu0 %v2742
  %4322 = vmatprep.subr.bf16.mxu0 0
  %4323 = vmatpush2.bf16.msra.mxu0 %v2735
  %4324 = vmatprep.subr.bf16.mxu0 0
  %4325 = vmatpush2.bf16.msra.mxu0 %v2728
  %4326 = vmatprep.subr.bf16.mxu0 0
  %4327 = vmatpush2.bf16.msra.mxu0 %v2721
  %4328 = vmatprep.subr.bf16.mxu0 0
  %4329 = vmatpush2.bf16.msra.mxu0 %v2714
  %4330 = vmatprep.subr.bf16.mxu0 0
  %4331 = vmatpush2.bf16.msra.mxu0 %v2707
  %4332 = vmatprep.mubr.bf16.mxu0 %v1475
  %4333 = vmatmul.mubr.bf16.gmra.mxu0 %v1474
  %v4334 = vpop.f32.mrf.mxu0
  %v4335 = vadd.f32 %v4174, %v4334
  %v4336 = vpop.f32.mrf.mxu0
  %v4337 = vpop.f32.mrf.mxu0
  %v4338 = vadd.f32 %v4177, %v4337
  %v4339 = vpop.f32.mrf.mxu0
  %4340 = vmatprep.mubr.bf16.mxu0 %v1479
  %4341 = vmatmul.mubr.bf16.gmra.mxu0 %v1478
  %v4342 = vpop.f32.mrf.mxu0
  %v4343 = vadd.f32 %v4182, %v4342
  %v4344 = vpop.f32.mrf.mxu0
  %v4345 = vpop.f32.mrf.mxu0
  %v4346 = vadd.f32 %v4185, %v4345
  %v4347 = vpop.f32.mrf.mxu0
  %4348 = vmatprep.mubr.bf16.mxu0 %v1483
  %4349 = vmatmul.mubr.bf16.gmra.mxu0 %v1482
  %v4350 = vpop.f32.mrf.mxu0
  %v4351 = vadd.f32 %v4190, %v4350
  %v4352 = vpop.f32.mrf.mxu0
  %v4353 = vpop.f32.mrf.mxu0
  %v4354 = vadd.f32 %v4193, %v4353
  %v4355 = vpop.f32.mrf.mxu0
  %4356 = vmatprep.mubr.bf16.mxu0 %v1487
  %4357 = vmatmul.mubr.bf16.gmra.mxu0 %v1486
  %v4358 = vpop.f32.mrf.mxu0
  %v4359 = vadd.f32 %v4198, %v4358
  %v4360 = vpop.f32.mrf.mxu0
  %v4361 = vpop.f32.mrf.mxu0
  %v4362 = vadd.f32 %v4201, %v4361
  %v4363 = vpop.f32.mrf.mxu0
  %4364 = vmatprep.mubr.bf16.mxu0 %v1491
  %4365 = vmatmul.mubr.bf16.gmra.mxu0 %v1490
  %v4366 = vpop.f32.mrf.mxu0
  %v4367 = vadd.f32 %v4206, %v4366
  %v4368 = vpop.f32.mrf.mxu0
  %v4369 = vpop.f32.mrf.mxu0
  %v4370 = vadd.f32 %v4209, %v4369
  %v4371 = vpop.f32.mrf.mxu0
  %4372 = vmatprep.mubr.bf16.mxu0 %v1495
  %4373 = vmatmul.mubr.bf16.gmra.mxu0 %v1494
  %v4374 = vpop.f32.mrf.mxu0
  %v4375 = vadd.f32 %v4214, %v4374
  %v4376 = vpop.f32.mrf.mxu0
  %v4377 = vpop.f32.mrf.mxu0
  %v4378 = vadd.f32 %v4217, %v4377
  %v4379 = vpop.f32.mrf.mxu0
  %4380 = vmatprep.mubr.bf16.mxu0 %v1499
  %4381 = vmatmul.mubr.bf16.gmra.mxu0 %v1498
  %v4382 = vpop.f32.mrf.mxu0
  %v4383 = vadd.f32 %v4222, %v4382
  %v4384 = vpop.f32.mrf.mxu0
  %v4385 = vpop.f32.mrf.mxu0
  %v4386 = vadd.f32 %v4225, %v4385
  %v4387 = vpop.f32.mrf.mxu0
  %4388 = vmatprep.mubr.bf16.mxu0 %v1503
  %4389 = vmatmul.mubr.bf16.gmra.mxu0 %v1502
  %v4390 = vpop.f32.mrf.mxu0
  %v4391 = vadd.f32 %v4230, %v4390
  %v4392 = vpop.f32.mrf.mxu0
  %v4393 = vpop.f32.mrf.mxu0
  %v4394 = vadd.f32 %v4233, %v4393
  %v4395 = vpop.f32.mrf.mxu0
  %4396 = vmatprep.mubr.bf16.mxu0 %v1507
  %4397 = vmatmul.mubr.bf16.gmra.mxu0 %v1506
  %v4398 = vpop.f32.mrf.mxu0
  %v4399 = vadd.f32 %v4238, %v4398
  %v4400 = vpop.f32.mrf.mxu0
  %v4401 = vpop.f32.mrf.mxu0
  %v4402 = vadd.f32 %v4241, %v4401
  %v4403 = vpop.f32.mrf.mxu0
  %4404 = vmatprep.mubr.bf16.mxu0 %v1511
  %4405 = vmatmul.mubr.bf16.gmra.mxu0 %v1510
  %v4406 = vpop.f32.mrf.mxu0
  %v4407 = vadd.f32 %v4246, %v4406
  %v4408 = vpop.f32.mrf.mxu0
  %v4409 = vpop.f32.mrf.mxu0
  %v4410 = vadd.f32 %v4249, %v4409
  %v4411 = vpop.f32.mrf.mxu0
  %4412 = vmatprep.mubr.bf16.mxu0 %v1515
  %4413 = vmatmul.mubr.bf16.gmra.mxu0 %v1514
  %v4414 = vpop.f32.mrf.mxu0
  %v4415 = vadd.f32 %v4254, %v4414
  %v4416 = vpop.f32.mrf.mxu0
  %v4417 = vpop.f32.mrf.mxu0
  %v4418 = vadd.f32 %v4257, %v4417
  %v4419 = vpop.f32.mrf.mxu0
  %4420 = vmatprep.mubr.bf16.mxu0 %v1519
  %4421 = vmatmul.mubr.bf16.gmra.mxu0 %v1518
  %v4422 = vpop.f32.mrf.mxu0
  %v4423 = vadd.f32 %v4262, %v4422
  %v4424 = vpop.f32.mrf.mxu0
  %v4425 = vpop.f32.mrf.mxu0
  %v4426 = vadd.f32 %v4265, %v4425
  %v4427 = vpop.f32.mrf.mxu0
  %4428 = vmatprep.mubr.bf16.mxu0 %v1523
  %4429 = vmatmul.mubr.bf16.gmra.mxu0 %v1522
  %v4430 = vpop.f32.mrf.mxu0
  %v4431 = vadd.f32 %v4270, %v4430
  %v4432 = vpop.f32.mrf.mxu0
  %v4433 = vpop.f32.mrf.mxu0
  %v4434 = vadd.f32 %v4273, %v4433
  %v4435 = vpop.f32.mrf.mxu0
  %4436 = vmatprep.mubr.bf16.mxu0 %v1527
  %4437 = vmatmul.mubr.bf16.gmra.mxu0 %v1526
  %v4438 = vpop.f32.mrf.mxu0
  %v4439 = vadd.f32 %v4278, %v4438
  %v4440 = vpop.f32.mrf.mxu0
  %v4441 = vpop.f32.mrf.mxu0
  %v4442 = vadd.f32 %v4281, %v4441
  %v4443 = vpop.f32.mrf.mxu0
  %4444 = vmatprep.mubr.bf16.mxu0 %v1531
  %4445 = vmatmul.mubr.bf16.gmra.mxu0 %v1530
  %v4446 = vpop.f32.mrf.mxu0
  %v4447 = vadd.f32 %v4286, %v4446
  %v4448 = vpop.f32.mrf.mxu0
  %v4449 = vpop.f32.mrf.mxu0
  %v4450 = vadd.f32 %v4289, %v4449
  %v4451 = vpop.f32.mrf.mxu0
  %4452 = vmatprep.mubr.bf16.mxu0 %v1535
  %4453 = vmatmul.mubr.bf16.gmra.mxu0 %v1534
  %v4454 = vpop.f32.mrf.mxu0
  %v4455 = vadd.f32 %v4294, %v4454
  %v4456 = vpop.f32.mrf.mxu0
  %v4457 = vpop.f32.mrf.mxu0
  %v4458 = vadd.f32 %v4297, %v4457
  %v4459 = vpop.f32.mrf.mxu0
  %4460 = vdwg.mxu0
  %v4461 = vtanh.pop %v3209
  %v4462 = vtanh.pop %v3211
  %v4463 = vtanh.pop %v3595
  %v4464 = vtanh.pop %v3597
  %v4465 = vtanh.pop %v3981
  %v4466 = vtanh.pop %v3983
  %v4467 = vtanh.pop %v4335
  %v4468 = vtanh.pop %v3213
  %v4469 = vtanh.pop %v3215
  %v4470 = vtanh.pop %v3599
  %v4471 = vtanh.pop %v3601
  %v4472 = vtanh.pop %v3985
  %v4473 = vtanh.pop %v3987
  %v4474 = vtanh.pop %v4338
  %v4475 = vtanh.pop %v3219
  %v4476 = vtanh.pop %v3221
  %v4477 = vtanh.pop %v3605
  %v4478 = vtanh.pop %v3607
  %v4479 = vtanh.pop %v3991
  %v4480 = vtanh.pop %v3993
  %v4481 = vtanh.pop %v4343
  %v4482 = vtanh.pop %v3223
  %v4483 = vtanh.pop %v3225
  %v4484 = vtanh.pop %v3609
  %v4485 = vtanh.pop %v3611
  %v4486 = vtanh.pop %v3995
  %v4487 = vtanh.pop %v3997
  %v4488 = vtanh.pop %v4346
  %v4489 = vtanh.pop %v3229
  %v4490 = vtanh.pop %v3231
  %v4491 = vtanh.pop %v3615
  %v4492 = vtanh.pop %v3617
  %v4493 = vtanh.pop %v4001
  %v4494 = vtanh.pop %v4003
  %v4495 = vtanh.pop %v4351
  %v4496 = vtanh.pop %v3233
  %v4497 = vtanh.pop %v3235
  %v4498 = vtanh.pop %v3619
  %v4499 = vtanh.pop %v3621
  %v4500 = vtanh.pop %v4005
  %v4501 = vtanh.pop %v4007
  %v4502 = vtanh.pop %v4354
  %v4503 = vtanh.pop %v3239
  %v4504 = vtanh.pop %v3241
  %v4505 = vtanh.pop %v3625
  %v4506 = vtanh.pop %v3627
  %v4507 = vtanh.pop %v4011
  %v4508 = vtanh.pop %v4013
  %v4509 = vtanh.pop %v4359
  %v4510 = vtanh.pop %v3243
  %v4511 = vtanh.pop %v3245
  %v4512 = vtanh.pop %v3629
  %v4513 = vtanh.pop %v3631
  %v4514 = vtanh.pop %v4015
  %v4515 = vtanh.pop %v4017
  %v4516 = vtanh.pop %v4362
  %v4517 = vtanh.pop %v3249
  %v4518 = vtanh.pop %v3251
  %v4519 = vtanh.pop %v3635
  %v4520 = vtanh.pop %v3637
  %v4521 = vtanh.pop %v4021
  %v4522 = vtanh.pop %v4023
  %v4523 = vtanh.pop %v4367
  %v4524 = vtanh.pop %v3253
  %v4525 = vtanh.pop %v3255
  %v4526 = vtanh.pop %v3639
  %v4527 = vtanh.pop %v3641
  %v4528 = vtanh.pop %v4025
  %v4529 = vtanh.pop %v4027
  %v4530 = vtanh.pop %v4370
  %v4531 = vtanh.pop %v3259
  %v4532 = vtanh.pop %v3261
  %v4533 = vtanh.pop %v3645
  %v4534 = vtanh.pop %v3647
  %v4535 = vtanh.pop %v4031
  %v4536 = vtanh.pop %v4033
  %v4537 = vtanh.pop %v4375
  %v4538 = vtanh.pop %v3263
  %v4539 = vtanh.pop %v3265
  %v4540 = vtanh.pop %v3649
  %v4541 = vtanh.pop %v3651
  %v4542 = vtanh.pop %v4035
  %v4543 = vtanh.pop %v4037
  %v4544 = vtanh.pop %v4378
  %v4545 = vtanh.pop %v3269
  %v4546 = vtanh.pop %v3271
  %v4547 = vtanh.pop %v3655
  %v4548 = vtanh.pop %v3657
  %v4549 = vtanh.pop %v4041
  %v4550 = vtanh.pop %v4043
  %v4551 = vtanh.pop %v4383
  %v4552 = vtanh.pop %v3273
  %v4553 = vtanh.pop %v3275
  %v4554 = vtanh.pop %v3659
  %v4555 = vtanh.pop %v3661
  %v4556 = vtanh.pop %v4045
  %v4557 = vtanh.pop %v4047
  %v4558 = vtanh.pop %v4386
  %v4559 = vtanh.pop %v3279
  %v4560 = vtanh.pop %v3281
  %v4561 = vtanh.pop %v3665
  %v4562 = vtanh.pop %v3667
  %v4563 = vtanh.pop %v4051
  %v4564 = vtanh.pop %v4053
  %v4565 = vtanh.pop %v4391
  %v4566 = vtanh.pop %v3283
  %v4567 = vtanh.pop %v3285
  %v4568 = vtanh.pop %v3669
  %v4569 = vtanh.pop %v3671
  %v4570 = vtanh.pop %v4055
  %v4571 = vtanh.pop %v4057
  %v4572 = vtanh.pop %v4394
  %v4573 = vtanh.pop %v3289
  %v4574 = vtanh.pop %v3291
  %v4575 = vtanh.pop %v3675
  %v4576 = vtanh.pop %v3677
  %v4577 = vtanh.pop %v4061
  %v4578 = vtanh.pop %v4063
  %v4579 = vtanh.pop %v4399
  %v4580 = vtanh.pop %v3293
  %v4581 = vtanh.pop %v3295
  %v4582 = vtanh.pop %v3679
  %v4583 = vtanh.pop %v3681
  %v4584 = vtanh.pop %v4065
  %v4585 = vtanh.pop %v4067
  %v4586 = vtanh.pop %v4402
  %v4587 = vtanh.pop %v3299
  %v4588 = vtanh.pop %v3301
  %v4589 = vtanh.pop %v3685
  %v4590 = vtanh.pop %v3687
  %v4591 = vtanh.pop %v4071
  %v4592 = vtanh.pop %v4073
  %v4593 = vtanh.pop %v4407
  %v4594 = vtanh.pop %v3303
  %v4595 = vtanh.pop %v3305
  %v4596 = vtanh.pop %v3689
  %v4597 = vtanh.pop %v3691
  %v4598 = vtanh.pop %v4075
  %v4599 = vtanh.pop %v4077
  %v4600 = vtanh.pop %v4410
  %v4601 = vtanh.pop %v3309
  %v4602 = vtanh.pop %v3311
  %v4603 = vtanh.pop %v3695
  %v4604 = vtanh.pop %v3697
  %v4605 = vtanh.pop %v4081
  %v4606 = vtanh.pop %v4083
  %v4607 = vtanh.pop %v4415
  %v4608 = vtanh.pop %v3313
  %v4609 = vtanh.pop %v3315
  %v4610 = vtanh.pop %v3699
  %v4611 = vtanh.pop %v3701
  %v4612 = vtanh.pop %v4085
  %v4613 = vtanh.pop %v4087
  %v4614 = vtanh.pop %v4418
  %v4615 = vtanh.pop %v3319
  %v4616 = vtanh.pop %v3321
  %v4617 = vtanh.pop %v3705
  %v4618 = vtanh.pop %v3707
  %v4619 = vtanh.pop %v4091
  %v4620 = vtanh.pop %v4093
  %v4621 = vtanh.pop %v4423
  %v4622 = vtanh.pop %v3323
  %v4623 = vtanh.pop %v3325
  %v4624 = vtanh.pop %v3709
  %v4625 = vtanh.pop %v3711
  %v4626 = vtanh.pop %v4095
  %v4627 = vtanh.pop %v4097
  %v4628 = vtanh.pop %v4426
  %v4629 = vtanh.pop %v3329
  %v4630 = vtanh.pop %v3331
  %v4631 = vtanh.pop %v3715
  %v4632 = vtanh.pop %v3717
  %v4633 = vtanh.pop %v4101
  %v4634 = vtanh.pop %v4103
  %v4635 = vtanh.pop %v4431
  %v4636 = vtanh.pop %v3333
  %v4637 = vtanh.pop %v3335
  %v4638 = vtanh.pop %v3719
  %v4639 = vtanh.pop %v3721
  %v4640 = vtanh.pop %v4105
  %v4641 = vtanh.pop %v4107
  %v4642 = vtanh.pop %v4434
  %v4643 = vtanh.pop %v3339
  %v4644 = vtanh.pop %v3341
  %v4645 = vtanh.pop %v3725
  %v4646 = vtanh.pop %v3727
  %v4647 = vtanh.pop %v4111
  %v4648 = vtanh.pop %v4113
  %v4649 = vtanh.pop %v4439
  %v4650 = vtanh.pop %v3343
  %v4651 = vtanh.pop %v3345
  %v4652 = vtanh.pop %v3729
  %v4653 = vtanh.pop %v3731
  %v4654 = vtanh.pop %v4115
  %v4655 = vtanh.pop %v4117
  %v4656 = vtanh.pop %v4442
  %v4657 = vtanh.pop %v3349
  %v4658 = vtanh.pop %v3351
  %v4659 = vtanh.pop %v3735
  %v4660 = vtanh.pop %v3737
  %v4661 = vtanh.pop %v4121
  %v4662 = vtanh.pop %v4123
  %v4663 = vtanh.pop %v4447
  %v4664 = vtanh.pop %v3353
  %v4665 = vtanh.pop %v3355
  %v4666 = vtanh.pop %v3739
  %v4667 = vtanh.pop %v3741
  %v4668 = vtanh.pop %v4125
  %v4669 = vtanh.pop %v4127
  %v4670 = vtanh.pop %v4450
  %v4671 = vtanh.pop %v3359
  %v4672 = vtanh.pop %v3361
  %v4673 = vtanh.pop %v3745
  %v4674 = vtanh.pop %v3747
  %v4675 = vtanh.pop %v4131
  %v4676 = vtanh.pop %v4133
  %v4677 = vtanh.pop %v4455
  %v4678 = vtanh.pop %v3363
  %v4679 = vtanh.pop %v3365
  %v4680 = vtanh.pop %v3749
  %v4681 = vtanh.pop %v3751
  %v4682 = vtanh.pop %v4135
  %v4683 = vtanh.pop %v4137
  %v4684 = vtanh.pop %v4458
  %4685 = vst [vmem:[%s7] sm:$0xff] %v4461
  %4686 = vst [vmem:[%s7 + $0x8] sm:$0xff] %v4462
  %4687 = vst [vmem:[%s7 + $0x10] sm:$0xff] %v4463
  %4688 = vst [vmem:[%s7 + $0x18] sm:$0xff] %v4464
  %4689 = vst [vmem:[%s7 + $0x20] sm:$0xff] %v4465
  %4690 = vst [vmem:[%s7 + $0x28] sm:$0xff] %v4466
  %4691 = vst [vmem:[%s7 + $0x30] sm:$0xff] %v4467
  %4692 = vst [vmem:[%s7 + $0x38] sm:$0xff] %v4468
  %4693 = vst [vmem:[%s7 + $0x40] sm:$0xff] %v4469
  %4694 = vst [vmem:[%s7 + $0x48] sm:$0xff] %v4470
  %4695 = vst [vmem:[%s7 + $0x50] sm:$0xff] %v4471
  %4696 = vst [vmem:[%s7 + $0x58] sm:$0xff] %v4472
  %4697 = vst [vmem:[%s7 + $0x60] sm:$0xff] %v4473
  %4698 = vst [vmem:[%s7 + $0x68] sm:$0xff] %v4474
  %4699 = vst [vmem:[%s7 + $0x70] sm:$0xff] %v4475
  %4700 = vst [vmem:[%s7 + $0x78] sm:$0xff] %v4476
  %4701 = vst [vmem:[%s7 + $0x80] sm:$0xff] %v4477
  %4702 = vst [vmem:[%s7 + $0x88] sm:$0xff] %v4478
  %4703 = vst [vmem:[%s7 + $0x90] sm:$0xff] %v4479
  %4704 = vst [vmem:[%s7 + $0x98] sm:$0xff] %v4480
  %4705 = vst [vmem:[%s7 + $0xa0] sm:$0xff] %v4481
  %4706 = vst [vmem:[%s7 + $0xa8] sm:$0xff] %v4482
  %4707 = vst [vmem:[%s7 + $0xb0] sm:$0xff] %v4483
  %4708 = vst [vmem:[%s7 + $0xb8] sm:$0xff] %v4484
  %4709 = vst [vmem:[%s7 + $0xc0] sm:$0xff] %v4485
  %4710 = vst [vmem:[%s7 + $0xc8] sm:$0xff] %v4486
  %4711 = vst [vmem:[%s7 + $0xd0] sm:$0xff] %v4487
  %4712 = vst [vmem:[%s7 + $0xd8] sm:$0xff] %v4488
  %4713 = vst [vmem:[%s7 + $0xe0] sm:$0xff] %v4489
  %4714 = vst [vmem:[%s7 + $0xe8] sm:$0xff] %v4490
  %4715 = vst [vmem:[%s7 + $0xf0] sm:$0xff] %v4491
  %4716 = vst [vmem:[%s7 + $0xf8] sm:$0xff] %v4492
  %4717 = vst [vmem:[%s7 + $0x100] sm:$0xff] %v4493
  %4718 = vst [vmem:[%s7 + $0x108] sm:$0xff] %v4494
  %4719 = vst [vmem:[%s7 + $0x110] sm:$0xff] %v4495
  %4720 = vst [vmem:[%s7 + $0x118] sm:$0xff] %v4496
  %4721 = vst [vmem:[%s7 + $0x120] sm:$0xff] %v4497
  %4722 = vst [vmem:[%s7 + $0x128] sm:$0xff] %v4498
  %4723 = vst [vmem:[%s7 + $0x130] sm:$0xff] %v4499
  %4724 = vst [vmem:[%s7 + $0x138] sm:$0xff] %v4500
  %4725 = vst [vmem:[%s7 + $0x140] sm:$0xff] %v4501
  %4726 = vst [vmem:[%s7 + $0x148] sm:$0xff] %v4502
  %4727 = vst [vmem:[%s7 + $0x150] sm:$0xff] %v4503
  %4728 = vst [vmem:[%s7 + $0x158] sm:$0xff] %v4504
  %4729 = vst [vmem:[%s7 + $0x160] sm:$0xff] %v4505
  %4730 = vst [vmem:[%s7 + $0x168] sm:$0xff] %v4506
  %4731 = vst [vmem:[%s7 + $0x170] sm:$0xff] %v4507
  %4732 = vst [vmem:[%s7 + $0x178] sm:$0xff] %v4508
  %4733 = vst [vmem:[%s7 + $0x180] sm:$0xff] %v4509
  %4734 = vst [vmem:[%s7 + $0x188] sm:$0xff] %v4510
  %4735 = vst [vmem:[%s7 + $0x190] sm:$0xff] %v4511
  %4736 = vst [vmem:[%s7 + $0x198] sm:$0xff] %v4512
  %4737 = vst [vmem:[%s7 + $0x1a0] sm:$0xff] %v4513
  %4738 = vst [vmem:[%s7 + $0x1a8] sm:$0xff] %v4514
  %4739 = vst [vmem:[%s7 + $0x1b0] sm:$0xff] %v4515
  %4740 = vst [vmem:[%s7 + $0x1b8] sm:$0xff] %v4516
  %4741 = vst [vmem:[%s7 + $0x1c0] sm:$0xff] %v4517
  %4742 = vst [vmem:[%s7 + $0x1c8] sm:$0xff] %v4518
  %4743 = vst [vmem:[%s7 + $0x1d0] sm:$0xff] %v4519
  %4744 = vst [vmem:[%s7 + $0x1d8] sm:$0xff] %v4520
  %4745 = vst [vmem:[%s7 + $0x1e0] sm:$0xff] %v4521
  %4746 = vst [vmem:[%s7 + $0x1e8] sm:$0xff] %v4522
  %4747 = vst [vmem:[%s7 + $0x1f0] sm:$0xff] %v4523
  %4748 = vst [vmem:[%s7 + $0x1f8] sm:$0xff] %v4524
  %4749 = vst [vmem:[%s7 + $0x200] sm:$0xff] %v4525
  %4750 = vst [vmem:[%s7 + $0x208] sm:$0xff] %v4526
  %4751 = vst [vmem:[%s7 + $0x210] sm:$0xff] %v4527
  %4752 = vst [vmem:[%s7 + $0x218] sm:$0xff] %v4528
  %4753 = vst [vmem:[%s7 + $0x220] sm:$0xff] %v4529
  %4754 = vst [vmem:[%s7 + $0x228] sm:$0xff] %v4530
  %4755 = vst [vmem:[%s7 + $0x230] sm:$0xff] %v4531
  %4756 = vst [vmem:[%s7 + $0x238] sm:$0xff] %v4532
  %4757 = vst [vmem:[%s7 + $0x240] sm:$0xff] %v4533
  %4758 = vst [vmem:[%s7 + $0x248] sm:$0xff] %v4534
  %4759 = vst [vmem:[%s7 + $0x250] sm:$0xff] %v4535
  %4760 = vst [vmem:[%s7 + $0x258] sm:$0xff] %v4536
  %4761 = vst [vmem:[%s7 + $0x260] sm:$0xff] %v4537
  %4762 = vst [vmem:[%s7 + $0x268] sm:$0xff] %v4538
  %4763 = vst [vmem:[%s7 + $0x270] sm:$0xff] %v4539
  %4764 = vst [vmem:[%s7 + $0x278] sm:$0xff] %v4540
  %4765 = vst [vmem:[%s7 + $0x280] sm:$0xff] %v4541
  %4766 = vst [vmem:[%s7 + $0x288] sm:$0xff] %v4542
  %4767 = vst [vmem:[%s7 + $0x290] sm:$0xff] %v4543
  %4768 = vst [vmem:[%s7 + $0x298] sm:$0xff] %v4544
  %4769 = vst [vmem:[%s7 + $0x2a0] sm:$0xff] %v4545
  %4770 = vst [vmem:[%s7 + $0x2a8] sm:$0xff] %v4546
  %4771 = vst [vmem:[%s7 + $0x2b0] sm:$0xff] %v4547
  %4772 = vst [vmem:[%s7 + $0x2b8] sm:$0xff] %v4548
  %4773 = vst [vmem:[%s7 + $0x2c0] sm:$0xff] %v4549
  %4774 = vst [vmem:[%s7 + $0x2c8] sm:$0xff] %v4550
  %4775 = vst [vmem:[%s7 + $0x2d0] sm:$0xff] %v4551
  %4776 = vst [vmem:[%s7 + $0x2d8] sm:$0xff] %v4552
  %4777 = vst [vmem:[%s7 + $0x2e0] sm:$0xff] %v4553
  %4778 = vst [vmem:[%s7 + $0x2e8] sm:$0xff] %v4554
  %4779 = vst [vmem:[%s7 + $0x2f0] sm:$0xff] %v4555
  %4780 = vst [vmem:[%s7 + $0x2f8] sm:$0xff] %v4556
  %4781 = vst [vmem:[%s7 + $0x300] sm:$0xff] %v4557
  %4782 = vst [vmem:[%s7 + $0x308] sm:$0xff] %v4558
  %4783 = vst [vmem:[%s7 + $0x310] sm:$0xff] %v4559
  %4784 = vst [vmem:[%s7 + $0x318] sm:$0xff] %v4560
  %4785 = vst [vmem:[%s7 + $0x320] sm:$0xff] %v4561
  %4786 = vst [vmem:[%s7 + $0x328] sm:$0xff] %v4562
  %4787 = vst [vmem:[%s7 + $0x330] sm:$0xff] %v4563
  %4788 = vst [vmem:[%s7 + $0x338] sm:$0xff] %v4564
  %4789 = vst [vmem:[%s7 + $0x340] sm:$0xff] %v4565
  %4790 = vst [vmem:[%s7 + $0x348] sm:$0xff] %v4566
  %4791 = vst [vmem:[%s7 + $0x350] sm:$0xff] %v4567
  %4792 = vst [vmem:[%s7 + $0x358] sm:$0xff] %v4568
  %4793 = vst [vmem:[%s7 + $0x360] sm:$0xff] %v4569
  %4794 = vst [vmem:[%s7 + $0x368] sm:$0xff] %v4570
  %4795 = vst [vmem:[%s7 + $0x370] sm:$0xff] %v4571
  %4796 = vst [vmem:[%s7 + $0x378] sm:$0xff] %v4572
  %4797 = vst [vmem:[%s7 + $0x380] sm:$0xff] %v4573
  %4798 = vst [vmem:[%s7 + $0x388] sm:$0xff] %v4574
  %4799 = vst [vmem:[%s7 + $0x390] sm:$0xff] %v4575
  %4800 = vst [vmem:[%s7 + $0x398] sm:$0xff] %v4576
  %4801 = vst [vmem:[%s7 + $0x3a0] sm:$0xff] %v4577
  %4802 = vst [vmem:[%s7 + $0x3a8] sm:$0xff] %v4578
  %4803 = vst [vmem:[%s7 + $0x3b0] sm:$0xff] %v4579
  %4804 = vst [vmem:[%s7 + $0x3b8] sm:$0xff] %v4580
  %4805 = vst [vmem:[%s7 + $0x3c0] sm:$0xff] %v4581
  %4806 = vst [vmem:[%s7 + $0x3c8] sm:$0xff] %v4582
  %4807 = vst [vmem:[%s7 + $0x3d0] sm:$0xff] %v4583
  %4808 = vst [vmem:[%s7 + $0x3d8] sm:$0xff] %v4584
  %4809 = vst [vmem:[%s7 + $0x3e0] sm:$0xff] %v4585
  %4810 = vst [vmem:[%s7 + $0x3e8] sm:$0xff] %v4586
  %4811 = vst [vmem:[%s7 + $0x3f0] sm:$0xff] %v4587
  %4812 = vst [vmem:[%s7 + $0x3f8] sm:$0xff] %v4588
  %4813 = vst [vmem:[%s7 + $0x400] sm:$0xff] %v4589
  %4814 = vst [vmem:[%s7 + $0x408] sm:$0xff] %v4590
  %4815 = vst [vmem:[%s7 + $0x410] sm:$0xff] %v4591
  %4816 = vst [vmem:[%s7 + $0x418] sm:$0xff] %v4592
  %4817 = vst [vmem:[%s7 + $0x420] sm:$0xff] %v4593
  %4818 = vst [vmem:[%s7 + $0x428] sm:$0xff] %v4594
  %4819 = vst [vmem:[%s7 + $0x430] sm:$0xff] %v4595
  %4820 = vst [vmem:[%s7 + $0x438] sm:$0xff] %v4596
  %4821 = vst [vmem:[%s7 + $0x440] sm:$0xff] %v4597
  %4822 = vst [vmem:[%s7 + $0x448] sm:$0xff] %v4598
  %4823 = vst [vmem:[%s7 + $0x450] sm:$0xff] %v4599
  %4824 = vst [vmem:[%s7 + $0x458] sm:$0xff] %v4600
  %4825 = vst [vmem:[%s7 + $0x460] sm:$0xff] %v4601
  %4826 = vst [vmem:[%s7 + $0x468] sm:$0xff] %v4602
  %4827 = vst [vmem:[%s7 + $0x470] sm:$0xff] %v4603
  %4828 = vst [vmem:[%s7 + $0x478] sm:$0xff] %v4604
  %4829 = vst [vmem:[%s7 + $0x480] sm:$0xff] %v4605
  %4830 = vst [vmem:[%s7 + $0x488] sm:$0xff] %v4606
  %4831 = vst [vmem:[%s7 + $0x490] sm:$0xff] %v4607
  %4832 = vst [vmem:[%s7 + $0x498] sm:$0xff] %v4608
  %4833 = vst [vmem:[%s7 + $0x4a0] sm:$0xff] %v4609
  %4834 = vst [vmem:[%s7 + $0x4a8] sm:$0xff] %v4610
  %4835 = vst [vmem:[%s7 + $0x4b0] sm:$0xff] %v4611
  %4836 = vst [vmem:[%s7 + $0x4b8] sm:$0xff] %v4612
  %4837 = vst [vmem:[%s7 + $0x4c0] sm:$0xff] %v4613
  %4838 = vst [vmem:[%s7 + $0x4c8] sm:$0xff] %v4614
  %4839 = vst [vmem:[%s7 + $0x4d0] sm:$0xff] %v4615
  %4840 = vst [vmem:[%s7 + $0x4d8] sm:$0xff] %v4616
  %4841 = vst [vmem:[%s7 + $0x4e0] sm:$0xff] %v4617
  %4842 = vst [vmem:[%s7 + $0x4e8] sm:$0xff] %v4618
  %4843 = vst [vmem:[%s7 + $0x4f0] sm:$0xff] %v4619
  %4844 = vst [vmem:[%s7 + $0x4f8] sm:$0xff] %v4620
  %4845 = vst [vmem:[%s7 + $0x500] sm:$0xff] %v4621
  %4846 = vst [vmem:[%s7 + $0x508] sm:$0xff] %v4622
  %4847 = vst [vmem:[%s7 + $0x510] sm:$0xff] %v4623
  %4848 = vst [vmem:[%s7 + $0x518] sm:$0xff] %v4624
  %4849 = vst [vmem:[%s7 + $0x520] sm:$0xff] %v4625
  %4850 = vst [vmem:[%s7 + $0x528] sm:$0xff] %v4626
  %4851 = vst [vmem:[%s7 + $0x530] sm:$0xff] %v4627
  %4852 = vst [vmem:[%s7 + $0x538] sm:$0xff] %v4628
  %4853 = vst [vmem:[%s7 + $0x540] sm:$0xff] %v4629
  %4854 = vst [vmem:[%s7 + $0x548] sm:$0xff] %v4630
  %4855 = vst [vmem:[%s7 + $0x550] sm:$0xff] %v4631
  %4856 = vst [vmem:[%s7 + $0x558] sm:$0xff] %v4632
  %4857 = vst [vmem:[%s7 + $0x560] sm:$0xff] %v4633
  %4858 = vst [vmem:[%s7 + $0x568] sm:$0xff] %v4634
  %4859 = vst [vmem:[%s7 + $0x570] sm:$0xff] %v4635
  %4860 = vst [vmem:[%s7 + $0x578] sm:$0xff] %v4636
  %4861 = vst [vmem:[%s7 + $0x580] sm:$0xff] %v4637
  %4862 = vst [vmem:[%s7 + $0x588] sm:$0xff] %v4638
  %4863 = vst [vmem:[%s7 + $0x590] sm:$0xff] %v4639
  %4864 = vst [vmem:[%s7 + $0x598] sm:$0xff] %v4640
  %4865 = vst [vmem:[%s7 + $0x5a0] sm:$0xff] %v4641
  %4866 = vst [vmem:[%s7 + $0x5a8] sm:$0xff] %v4642
  %4867 = vst [vmem:[%s7 + $0x5b0] sm:$0xff] %v4643
  %4868 = vst [vmem:[%s7 + $0x5b8] sm:$0xff] %v4644
  %4869 = vst [vmem:[%s7 + $0x5c0] sm:$0xff] %v4645
  %4870 = vst [vmem:[%s7 + $0x5c8] sm:$0xff] %v4646
  %4871 = vst [vmem:[%s7 + $0x5d0] sm:$0xff] %v4647
  %4872 = vst [vmem:[%s7 + $0x5d8] sm:$0xff] %v4648
  %4873 = vst [vmem:[%s7 + $0x5e0] sm:$0xff] %v4649
  %4874 = vst [vmem:[%s7 + $0x5e8] sm:$0xff] %v4650
  %4875 = vst [vmem:[%s7 + $0x5f0] sm:$0xff] %v4651
  %4876 = vst [vmem:[%s7 + $0x5f8] sm:$0xff] %v4652
  %4877 = vst [vmem:[%s7 + $0x600] sm:$0xff] %v4653
  %4878 = vst [vmem:[%s7 + $0x608] sm:$0xff] %v4654
  %4879 = vst [vmem:[%s7 + $0x610] sm:$0xff] %v4655
  %4880 = vst [vmem:[%s7 + $0x618] sm:$0xff] %v4656
  %4881 = vst [vmem:[%s7 + $0x620] sm:$0xff] %v4657
  %4882 = vst [vmem:[%s7 + $0x628] sm:$0xff] %v4658
  %4883 = vst [vmem:[%s7 + $0x630] sm:$0xff] %v4659
  %4884 = vst [vmem:[%s7 + $0x638] sm:$0xff] %v4660
  %4885 = vst [vmem:[%s7 + $0x640] sm:$0xff] %v4661
  %4886 = vst [vmem:[%s7 + $0x648] sm:$0xff] %v4662
  %4887 = vst [vmem:[%s7 + $0x650] sm:$0xff] %v4663
  %4888 = vst [vmem:[%s7 + $0x658] sm:$0xff] %v4664
  %4889 = vst [vmem:[%s7 + $0x660] sm:$0xff] %v4665
  %4890 = vst [vmem:[%s7 + $0x668] sm:$0xff] %v4666
  %4891 = vst [vmem:[%s7 + $0x670] sm:$0xff] %v4667
  %4892 = vst [vmem:[%s7 + $0x678] sm:$0xff] %v4668
  %4893 = vst [vmem:[%s7 + $0x680] sm:$0xff] %v4669
  %4894 = vst [vmem:[%s7 + $0x688] sm:$0xff] %v4670
  %4895 = vst [vmem:[%s7 + $0x690] sm:$0xff] %v4671
  %4896 = vst [vmem:[%s7 + $0x698] sm:$0xff] %v4672
  %4897 = vst [vmem:[%s7 + $0x6a0] sm:$0xff] %v4673
  %4898 = vst [vmem:[%s7 + $0x6a8] sm:$0xff] %v4674
  %4899 = vst [vmem:[%s7 + $0x6b0] sm:$0xff] %v4675
  %4900 = vst [vmem:[%s7 + $0x6b8] sm:$0xff] %v4676
  %4901 = vst [vmem:[%s7 + $0x6c0] sm:$0xff] %v4677
  %4902 = vst [vmem:[%s7 + $0x6c8] sm:$0xff] %v4678
  %4903 = vst [vmem:[%s7 + $0x6d0] sm:$0xff] %v4679
  %4904 = vst [vmem:[%s7 + $0x6d8] sm:$0xff] %v4680
  %4905 = vst [vmem:[%s7 + $0x6e0] sm:$0xff] %v4681
  %4906 = vst [vmem:[%s7 + $0x6e8] sm:$0xff] %v4682
  %4907 = vst [vmem:[%s7 + $0x6f0] sm:$0xff] %v4683
  %4908 = vst [vmem:[%s7 + $0x6f8] sm:$0xff] %v4684
  // Predicated region
  $region30: #{generator_forward.1} parent=0 // pred_check
    _
  $region31: #{generator_forward.1} parent=0 // pred_check_branch
    %4910 = sbr.rel (0) target = $region33
  $region32: #{generator_forward.1} parent=0 // pred_region
    _
  $region33: #{generator_forward.1} parent=0 // pred_fallthru
    _
  // Predicated region
  $region34: #{generator_forward.1} parent=0 // pred_check
    _
  $region35: #{generator_forward.1} parent=0 // pred_check_branch
    %4912 = sbr.rel (0) target = $region37
  $region36: #{generator_forward.1} parent=0 // pred_region
    _
  $region37: #{generator_forward.1} parent=0 // pred_fallthru
    _

</llo_original>
